<compile_context>
chip_gen: v5e
topology: v5e:2x2
jax: 0.10.0
libtpu: 0.0.40
codegen_flags: <defaults>
</compile_context>

<pallas_src>
import functools

import jax
import jax.numpy as jnp
from jax.experimental import pallas as pl
from jax.experimental.pallas import tpu as pltpu

# ----------------------------------------------------------------------------
# Small synthetic configuration (mirrors UnifiedVoice.__init__ structure)
# ----------------------------------------------------------------------------
LAYERS = 2
MODEL_DIM = 32
HEADS = 2
MAX_TEXT_TOKENS = 12
MAX_MEL_TOKENS = 16
MAX_COND_INPUTS = 1
MEL_LENGTH_COMPRESSION = 64
NUMBER_TEXT_TOKENS = 24
TYPES = 1
START_TEXT_TOKEN = NUMBER_TEXT_TOKENS * TYPES        # 24
STOP_TEXT_TOKEN = 0
NUMBER_MEL_CODES = 30
START_MEL_TOKEN = 28
STOP_MEL_TOKEN = 29
LN_EPS = 1e-5

VOCAB_PAD = 128       # lane-dense padded vocab for both heads
LOSS_LANES = 128      # lane-dense per-batch loss output row
NEG_BIG = -1e30


# ----------------------------------------------------------------------------
# In-kernel helpers
# ----------------------------------------------------------------------------
def _layer_norm(x, g, b):
    mu = jnp.mean(x, axis=-1, keepdims=True)
    var = jnp.mean((x - mu) ** 2, axis=-1, keepdims=True)
    return (x - mu) * jax.lax.rsqrt(var + LN_EPS) * g + b


def _xent_rowsum(logits, tgt_row):
    # logits: (T, Vpad) f32 (padded columns already at ~-1e30 via the padded bias)
    # tgt_row: (1, T) int32, targets guaranteed < real vocab size
    T = logits.shape[0]
    m = jnp.max(logits, axis=-1, keepdims=True)
    lse = m + jnp.log(jnp.sum(jnp.exp(logits - m), axis=-1, keepdims=True))
    # turn the (1, T) target row into a (T, 1) target column via a diagonal pick
    ii = jax.lax.broadcasted_iota(jnp.int32, (T, T), 0)
    jj = jax.lax.broadcasted_iota(jnp.int32, (T, T), 1)
    tgt_col = jnp.sum(jnp.where(ii == jj, jnp.broadcast_to(tgt_row, (T, T)), 0),
                      axis=1, keepdims=True)                              # (T, 1)
    col = jax.lax.broadcasted_iota(jnp.int32, logits.shape, 1)
    picked = jnp.sum(jnp.where(col == tgt_col, logits, 0.0),
                     axis=-1, keepdims=True)                              # (T, 1)
    total = jnp.sum(lse - picked, keepdims=True)                          # (1, 1)
    return jnp.broadcast_to(total, (1, LOSS_LANES))


# ----------------------------------------------------------------------------
# Pallas kernels
# ----------------------------------------------------------------------------
def gpt2_stack_kernel(x_ref, ln1g, ln1b, wqkv, bqkv, wao, bao,
                      ln2g, ln2b, wfc, bfc, wmp, bmp, o_ref, *, heads):
    # grid = (batch, layer); the output block revisits the same (b) block across the
    # layer axis, so it acts as the resident activation.
    @pl.when(pl.program_id(1) == 0)
    def _():
        o_ref[...] = x_ref[...]

    x = o_ref[0]                                   # (S, D) f32 resident activation
    S, D = x.shape
    dh = D // heads
    scale = 1.0 / (dh ** 0.5)

    # ---- causal multi-head self-attention ----
    h = _layer_norm(x, ln1g[0], ln1b[0])
    qkv = jnp.dot(h.astype(jnp.bfloat16), wqkv[0],
                  preferred_element_type=jnp.float32) + bqkv[0]           # (S, 3D)
    # head-batched layout without per-head lane slicing:
    #   transpose once, then a layout-friendly leading-dim split -> (3H, dh, S)
    qkv_t = qkv.T.reshape(3 * heads, dh, S)
    q = jnp.transpose(qkv_t[:heads], (0, 2, 1))                           # (H, S, dh)
    k = qkv_t[heads:2 * heads]                                            # (H, dh, S)
    v = qkv_t[2 * heads:]                                                 # (H, dh, S)

    row = jax.lax.broadcasted_iota(jnp.int32, (S, S), 0)
    col = jax.lax.broadcasted_iota(jnp.int32, (S, S), 1)
    causal = (col <= row)[None]                                           # (1, S, S)

    sc = jnp.einsum('hsd,hdt->hst', q.astype(jnp.bfloat16),
                    k.astype(jnp.bfloat16),
                    preferred_element_type=jnp.float32) * scale           # (H, S, S)
    sc = jnp.where(causal, sc, NEG_BIG)
    sc = sc - jnp.max(sc, axis=-1, keepdims=True)
    p = jnp.exp(sc)
    p = p * pl.reciprocal(jnp.sum(p, axis=-1, keepdims=True), approx=True)

    ctx_t = jnp.einsum('hdt,hst->hds', v.astype(jnp.bfloat16),
                       p.astype(jnp.bfloat16),
                       preferred_element_type=jnp.float32)                # (H, dh, S)
    attn = ctx_t.reshape(D, S).T                                          # (S, D)
    attn = jnp.dot(attn.astype(jnp.bfloat16), wao[0],
                   preferred_element_type=jnp.float32) + bao[0]
    x = x + attn

    # ---- MLP ----
    h2 = _layer_norm(x, ln2g[0], ln2b[0])
    ff = jnp.dot(h2.astype(jnp.bfloat16), wfc[0],
                 preferred_element_type=jnp.float32) + bfc[0]
    ff = jax.nn.gelu(ff, approximate=True)                                # gelu_new
    ff = jnp.dot(ff.astype(jnp.bfloat16), wmp[0],
                 preferred_element_type=jnp.float32) + bmp[0]
    o_ref[0] = x + ff


def tail_kernel(h_ref, lnf_g, lnf_b, fn_g, fn_b, wt, bt, wm, bm,
                tt_ref, tm_ref, mel_logits_ref, tloss_ref, mloss_ref,
                *, t_text, t_mel):
    # fused ln_f -> drop cond token -> final_norm -> heads -> cross-entropy sums
    x = _layer_norm(h_ref[0], lnf_g[...], lnf_b[...])                     # (S, D)
    enc = _layer_norm(x[1:], fn_g[...], fn_b[...])                        # (Tt+Tm, D)

    text_logits = jnp.dot(enc[:t_text].astype(jnp.bfloat16), wt[...],
                          preferred_element_type=jnp.float32) + bt[...]   # (Tt, 128)
    mel_logits = jnp.dot(enc[t_text:].astype(jnp.bfloat16), wm[...],
                         preferred_element_type=jnp.float32) + bm[...]    # (Tm, 128)

    mel_logits_ref[0] = mel_logits
    tloss_ref[0] = _xent_rowsum(text_logits, tt_ref[0])
    mloss_ref[0] = _xent_rowsum(mel_logits, tm_ref[0])


# ----------------------------------------------------------------------------
# pallas_call wrappers
# ----------------------------------------------------------------------------
_STACK_PARAM_ORDER = ('ln1_g', 'ln1_b', 'w_qkv', 'b_qkv', 'w_ao', 'b_ao',
                      'ln2_g', 'ln2_b', 'w_fc', 'b_fc', 'w_mp', 'b_mp')


def gpt2_stack(x, stack, heads):
    B, S, D = x.shape
    L = stack['w_qkv'].shape[0]
    ws = [stack[n] for n in _STACK_PARAM_ORDER]
    in_specs = [pl.BlockSpec((1, S, D), lambda b, l: (b, 0, 0))]
    for w in ws:
        in_specs.append(pl.BlockSpec((1,) + w.shape[1:], lambda b, l: (l, 0, 0)))
    return pl.pallas_call(
        functools.partial(gpt2_stack_kernel, heads=heads),
        out_shape=jax.ShapeDtypeStruct((B, S, D), jnp.float32),
        grid=(B, L),
        in_specs=in_specs,
        out_specs=pl.BlockSpec((1, S, D), lambda b, l: (b, 0, 0)),
        compiler_params=pltpu.CompilerParams(
            dimension_semantics=("parallel", "arbitrary"),
            vmem_limit_bytes=48 * 1024 * 1024),
    )(x, *ws)


def tail_call(h, params, tgt_text, tgt_mel, t_text, t_mel):
    B, S, D = h.shape
    Vp = VOCAB_PAD

    def full_spec(a):
        return pl.BlockSpec(a.shape, lambda b: (0, 0))

    in_specs = [
        pl.BlockSpec((1, S, D), lambda b: (b, 0, 0)),
        full_spec(params['ln_f_g']), full_spec(params['ln_f_b']),
        full_spec(params['fn_g']), full_spec(params['fn_b']),
        full_spec(params['text_head_w']), full_spec(params['text_head_b']),
        full_spec(params['mel_head_w']), full_spec(params['mel_head_b']),
        pl.BlockSpec((1, 1, t_text), lambda b: (b, 0, 0)),
        pl.BlockSpec((1, 1, t_mel), lambda b: (b, 0, 0)),
    ]
    out_shape = (jax.ShapeDtypeStruct((B, t_mel, Vp), jnp.float32),
                 jax.ShapeDtypeStruct((B, 1, LOSS_LANES), jnp.float32),
                 jax.ShapeDtypeStruct((B, 1, LOSS_LANES), jnp.float32))
    out_specs = (pl.BlockSpec((1, t_mel, Vp), lambda b: (b, 0, 0)),
                 pl.BlockSpec((1, 1, LOSS_LANES), lambda b: (b, 0, 0)),
                 pl.BlockSpec((1, 1, LOSS_LANES), lambda b: (b, 0, 0)))
    return pl.pallas_call(
        functools.partial(tail_kernel, t_text=t_text, t_mel=t_mel),
        out_shape=out_shape,
        grid=(B,),
        in_specs=in_specs,
        out_specs=out_specs,
        compiler_params=pltpu.CompilerParams(dimension_semantics=("parallel",)),
    )(h, params['ln_f_g'], params['ln_f_b'], params['fn_g'], params['fn_b'],
      params['text_head_w'], params['text_head_b'],
      params['mel_head_w'], params['mel_head_b'],
      tgt_text, tgt_mel)


# ----------------------------------------------------------------------------
# Parameter initialization (deterministic, synthetic)
# ----------------------------------------------------------------------------
def init_params(key):
    keys = iter(jax.random.split(key, 32))

    def nrm(shape, std=0.02):
        return jax.random.normal(next(keys), shape, jnp.float32) * std

    D = MODEL_DIM
    L = LAYERS
    Vt = NUMBER_TEXT_TOKENS * TYPES + 1   # 25
    Vm = NUMBER_MEL_CODES                 # 30

    def pad_head(w, v_real):
        # pad vocab to 128 lanes; padded logit columns get a -1e30 bias so the
        # logsumexp (and argmax) over real columns is unchanged.
        w_p = jnp.zeros((D, VOCAB_PAD), jnp.float32).at[:, :v_real].set(w)
        b_p = jnp.full((1, VOCAB_PAD), NEG_BIG, jnp.float32).at[:, :v_real].set(0.0)
        return w_p.astype(jnp.bfloat16), b_p

    text_w, text_b = pad_head(nrm((D, Vt)), Vt)
    mel_w, mel_b = pad_head(nrm((D, Vm)), Vm)

    params = {
        'text_emb': nrm((Vt, D)),
        'mel_emb': nrm((Vm, D)),
        'text_pos': nrm((MAX_TEXT_TOKENS + 2, D)),
        'mel_pos': nrm((MAX_MEL_TOKENS + 2 + MAX_COND_INPUTS, D)),
        'ln_f_g': jnp.ones((1, D), jnp.float32), 'ln_f_b': jnp.zeros((1, D), jnp.float32),
        'fn_g': jnp.ones((1, D), jnp.float32), 'fn_b': jnp.zeros((1, D), jnp.float32),
        'text_head_w': text_w, 'text_head_b': text_b,
        'mel_head_w': mel_w, 'mel_head_b': mel_b,
        'stack': {
            'ln1_g': jnp.ones((L, 1, D), jnp.float32),
            'ln1_b': jnp.zeros((L, 1, D), jnp.float32),
            'w_qkv': nrm((L, D, 3 * D)).astype(jnp.bfloat16),
            'b_qkv': jnp.zeros((L, 1, 3 * D), jnp.float32),
            'w_ao': nrm((L, D, D)).astype(jnp.bfloat16),
            'b_ao': jnp.zeros((L, 1, D), jnp.float32),
            'ln2_g': jnp.ones((L, 1, D), jnp.float32),
            'ln2_b': jnp.zeros((L, 1, D), jnp.float32),
            'w_fc': nrm((L, D, 4 * D)).astype(jnp.bfloat16),
            'b_fc': jnp.zeros((L, 1, 4 * D), jnp.float32),
            'w_mp': nrm((L, 4 * D, D)).astype(jnp.bfloat16),
            'b_mp': jnp.zeros((L, 1, D), jnp.float32),
        },
    }
    return params


# ----------------------------------------------------------------------------
# Forward pass (mirrors UnifiedVoice.forward with text_first=True, no raw_mels,
# no types, return_attentions=False, return_latent=False, clip_inputs=True)
# ----------------------------------------------------------------------------
@jax.jit
def _forward_core(params, speech_conditioning_latent, text_inputs, mel_codes,
                  wav_lengths):
    B = text_inputs.shape[0]

    # set_mel_padding: positions >= mel_length+1 get STOP_MEL_TOKEN
    mel_lengths = wav_lengths // MEL_LENGTH_COMPRESSION
    pos = jnp.arange(mel_codes.shape[1])[None, :]
    mel_codes = jnp.where(pos >= (mel_lengths + 1)[:, None], STOP_MEL_TOKEN, mel_codes)

    # trailing stop pads
    text_inputs = jnp.pad(text_inputs, ((0, 0), (0, 1)), constant_values=STOP_TEXT_TOKEN)
    mel_codes = jnp.pad(mel_codes, ((0, 0), (0, 1)), constant_values=STOP_MEL_TOKEN)

    conds = speech_conditioning_latent[:, None, :]            # (B, 1, D)

    # build_aligned_inputs_and_targets
    text_inp = jnp.pad(text_inputs, ((0, 0), (1, 0)), constant_values=START_TEXT_TOKEN)
    text_tar = jnp.pad(text_inputs, ((0, 0), (0, 1)), constant_values=STOP_TEXT_TOKEN)
    mel_inp = jnp.pad(mel_codes, ((0, 0), (1, 0)), constant_values=START_MEL_TOKEN)
    mel_tar = jnp.pad(mel_codes, ((0, 0), (0, 1)), constant_values=STOP_MEL_TOKEN)

    # embeddings + learned position embeddings (glue: gathers)
    text_emb = params['text_emb'][text_inp] + params['text_pos'][:text_inp.shape[1]][None]
    mel_emb = params['mel_emb'][mel_inp] + params['mel_pos'][:mel_inp.shape[1]][None]
    emb = jnp.concatenate([conds, text_emb, mel_emb], axis=1)  # (B, 1+Tt+Tm, D)

    # fused GPT-2 stack: one pallas_call, activation resident across layers
    h = gpt2_stack(emb, params['stack'], HEADS)

    T_text = text_inp.shape[1]
    T_mel = mel_inp.shape[1]

    # fused tail: ln_f + final_norm + heads + per-batch cross-entropy sums
    mel_logits_pad, tloss, mloss = tail_call(
        h, params,
        text_tar.astype(jnp.int32)[:, None, :],
        mel_tar.astype(jnp.int32)[:, None, :],
        T_text, T_mel)

    loss_text = jnp.sum(tloss[:, 0, 0]) / (B * T_text)
    loss_mel = jnp.sum(mloss[:, 0, 0]) / (B * T_mel)

    # match torch: logits returned as (B, vocab, T); drop padded vocab columns
    mel_logits_out = jnp.transpose(mel_logits_pad[:, :, :NUMBER_MEL_CODES], (0, 2, 1))
    return loss_text, loss_mel, mel_logits_out


def unified_voice_forward(params, speech_conditioning_latent, text_inputs,
                          text_lengths, mel_codes, wav_lengths):
    # clip_inputs (host-side once; the post-clip compute is jitted)
    max_text_len = int(jnp.max(text_lengths))
    text_inputs = text_inputs[:, :max_text_len]
    max_mel_len = int(jnp.max(wav_lengths)) // MEL_LENGTH_COMPRESSION
    mel_codes = mel_codes[:, :max_mel_len]
    return _forward_core(params, speech_conditioning_latent, text_inputs,
                         mel_codes, wav_lengths)


# ----------------------------------------------------------------------------
# Driver
# ----------------------------------------------------------------------------
if __name__ == "__main__":
    key = jax.random.PRNGKey(0)
    k_params, k_cond, k_text, k_mel = jax.random.split(key, 4)

    params = init_params(k_params)

    B = 2
    T_TEXT_RAW = 6
    T_MEL_RAW = 8

    speech_conditioning_latent = jax.random.normal(k_cond, (B, MODEL_DIM), jnp.float32)
    text_inputs = jax.random.randint(k_text, (B, T_TEXT_RAW), 1, NUMBER_TEXT_TOKENS,
                                     dtype=jnp.int32)
    text_lengths = jnp.array([6, 4], dtype=jnp.int32)
    mel_codes = jax.random.randint(k_mel, (B, T_MEL_RAW), 0, START_MEL_TOKEN,
                                   dtype=jnp.int32)
    wav_lengths = jnp.array([8 * MEL_LENGTH_COMPRESSION, 5 * MEL_LENGTH_COMPRESSION],
                            dtype=jnp.int32)

    loss_text, loss_mel, mel_logits = unified_voice_forward(
        params, speech_conditioning_latent, text_inputs, text_lengths,
        mel_codes, wav_lengths)

    jax.block_until_ready((loss_text, loss_mel, mel_logits))
    assert mel_logits.shape == (B, NUMBER_MEL_CODES, T_MEL_RAW + 2)
    assert bool(jnp.isfinite(loss_text)) and bool(jnp.isfinite(loss_mel))
    print("KERNEL_OK")
</pallas_src>

<mosaic_0001>
module attributes {stable_mosaic.version = 11 : i64} {
  func.func @gpt2_stack_kernel(%arg0: i32, %arg1: i32, %arg2: memref<1x19x32xf32, #tpu.memory_space<vmem>>, %arg3: memref<1x1x32xf32, #tpu.memory_space<vmem>>, %arg4: memref<1x1x32xf32, #tpu.memory_space<vmem>>, %arg5: memref<1x32x96xbf16, #tpu.memory_space<vmem>>, %arg6: memref<1x1x96xf32, #tpu.memory_space<vmem>>, %arg7: memref<1x32x32xbf16, #tpu.memory_space<vmem>>, %arg8: memref<1x1x32xf32, #tpu.memory_space<vmem>>, %arg9: memref<1x1x32xf32, #tpu.memory_space<vmem>>, %arg10: memref<1x1x32xf32, #tpu.memory_space<vmem>>, %arg11: memref<1x32x128xbf16, #tpu.memory_space<vmem>>, %arg12: memref<1x1x128xf32, #tpu.memory_space<vmem>>, %arg13: memref<1x128x32xbf16, #tpu.memory_space<vmem>>, %arg14: memref<1x1x32xf32, #tpu.memory_space<vmem>>, %arg15: memref<1x19x32xf32, #tpu.memory_space<vmem>>) attributes {dimension_semantics = [#tpu.dimension_semantics<parallel>, #tpu.dimension_semantics<arbitrary>], iteration_bounds = array<i64: 2, 2>, scalar_prefetch = 0 : i64, scratch_operands = 0 : i64, tpu.core_type = #tpu.core_type<tc>, window_params = [{transform_indices = @transform_0, window_bounds = array<i64: 1, 19, 32>}, {transform_indices = @transform_1, window_bounds = array<i64: 1, 1, 32>}, {transform_indices = @transform_2, window_bounds = array<i64: 1, 1, 32>}, {transform_indices = @transform_3, window_bounds = array<i64: 1, 32, 96>}, {transform_indices = @transform_4, window_bounds = array<i64: 1, 1, 96>}, {transform_indices = @transform_5, window_bounds = array<i64: 1, 32, 32>}, {transform_indices = @transform_6, window_bounds = array<i64: 1, 1, 32>}, {transform_indices = @transform_7, window_bounds = array<i64: 1, 1, 32>}, {transform_indices = @transform_8, window_bounds = array<i64: 1, 1, 32>}, {transform_indices = @transform_9, window_bounds = array<i64: 1, 32, 128>}, {transform_indices = @transform_10, window_bounds = array<i64: 1, 1, 128>}, {transform_indices = @transform_11, window_bounds = array<i64: 1, 128, 32>}, {transform_indices = @transform_12, window_bounds = array<i64: 1, 1, 32>}, {transform_indices = @transform_13, window_bounds = array<i64: 1, 19, 32>}]} {
    %c0_i32 = arith.constant 0 : i32
    %0 = arith.cmpi eq, %arg1, %c0_i32 : i32
    %1 = arith.extui %0 : i1 to i32
    %c0_i32_0 = arith.constant 0 : i32
    %2 = arith.cmpi ne, %1, %c0_i32_0 : i32
    scf.if %2 {
      %c0_65 = arith.constant 0 : index
      %c0_66 = arith.constant 0 : index
      %c0_67 = arith.constant 0 : index
      %141 = vector.load %arg2[%c0_65, %c0_66, %c0_67] : memref<1x19x32xf32, #tpu.memory_space<vmem>>, vector<1x19x32xf32>
      %c0_68 = arith.constant 0 : index
      %c0_69 = arith.constant 0 : index
      %c0_70 = arith.constant 0 : index
      %142 = vector.load %arg15[%c0_68, %c0_69, %c0_70] : memref<1x19x32xf32, #tpu.memory_space<vmem>>, vector<1x19x32xf32>
      tpu.vector_store %arg15[%c0_68, %c0_69, %c0_70], %141 {strides = array<i32>} : memref<1x19x32xf32, #tpu.memory_space<vmem>>, vector<1x19x32xf32>,
    } else {
    }
    %c0 = arith.constant 0 : index
    %c0_1 = arith.constant 0 : index
    %c0_2 = arith.constant 0 : index
    %3 = vector.load %arg15[%c0, %c0_1, %c0_2] : memref<1x19x32xf32, #tpu.memory_space<vmem>>, vector<1x19x32xf32>
    %4 = vector.shape_cast %3 : vector<1x19x32xf32> to vector<19x32xf32>
    %c0_3 = arith.constant 0 : index
    %c0_4 = arith.constant 0 : index
    %c0_5 = arith.constant 0 : index
    %5 = vector.load %arg3[%c0_3, %c0_4, %c0_5] : memref<1x1x32xf32, #tpu.memory_space<vmem>>, vector<1x1x32xf32>
    %6 = vector.shape_cast %5 : vector<1x1x32xf32> to vector<1x32xf32>
    %c0_6 = arith.constant 0 : index
    %c0_7 = arith.constant 0 : index
    %c0_8 = arith.constant 0 : index
    %7 = vector.load %arg4[%c0_6, %c0_7, %c0_8] : memref<1x1x32xf32, #tpu.memory_space<vmem>>, vector<1x1x32xf32>
    %8 = vector.shape_cast %7 : vector<1x1x32xf32> to vector<1x32xf32>
    %cst = arith.constant dense<0.000000e+00> : vector<19xf32>
    %9 = vector.multi_reduction <add>, %4, %cst [1] : vector<19x32xf32> to vector<19xf32>
    %10 = vector.shape_cast %9 : vector<19xf32> to vector<19x1xf32>
    %cst_9 = arith.constant 3.200000e+01 : f32
    %11 = vector.broadcast %cst_9 : f32 to vector<19x1xf32>
    %12 = arith.divf %10, %11 : vector<19x1xf32>
    %13 = vector.broadcast %12 : vector<19x1xf32> to vector<19x32xf32>
    %14 = arith.subf %4, %13 : vector<19x32xf32>
    %15 = arith.mulf %14, %14 : vector<19x32xf32>
    %cst_10 = arith.constant dense<0.000000e+00> : vector<19xf32>
    %16 = vector.multi_reduction <add>, %15, %cst_10 [1] : vector<19x32xf32> to vector<19xf32>
    %17 = vector.shape_cast %16 : vector<19xf32> to vector<19x1xf32>
    %cst_11 = arith.constant 3.200000e+01 : f32
    %18 = vector.broadcast %cst_11 : f32 to vector<19x1xf32>
    %19 = arith.divf %17, %18 : vector<19x1xf32>
    %20 = vector.broadcast %12 : vector<19x1xf32> to vector<19x32xf32>
    %21 = arith.subf %4, %20 : vector<19x32xf32>
    %cst_12 = arith.constant 9.99999974E-6 : f32
    %22 = vector.broadcast %cst_12 : f32 to vector<19x1xf32>
    %23 = arith.addf %19, %22 : vector<19x1xf32>
    %24 = math.rsqrt %23 : vector<19x1xf32>
    %25 = vector.broadcast %24 : vector<19x1xf32> to vector<19x32xf32>
    %26 = arith.mulf %21, %25 : vector<19x32xf32>
    %27 = vector.broadcast %6 : vector<1x32xf32> to vector<19x32xf32>
    %28 = arith.mulf %26, %27 : vector<19x32xf32>
    %29 = vector.broadcast %8 : vector<1x32xf32> to vector<19x32xf32>
    %30 = arith.addf %28, %29 : vector<19x32xf32>
    %31 = arith.truncf %30 : vector<19x32xf32> to vector<19x32xbf16>
    %c0_13 = arith.constant 0 : index
    %c0_14 = arith.constant 0 : index
    %c0_15 = arith.constant 0 : index
    %32 = vector.load %arg5[%c0_13, %c0_14, %c0_15] : memref<1x32x96xbf16, #tpu.memory_space<vmem>>, vector<1x32x96xbf16>
    %33 = vector.shape_cast %32 : vector<1x32x96xbf16> to vector<32x96xbf16>
    %cst_16 = arith.constant dense<0.000000e+00> : vector<19x96xf32>
    %34 = tpu.matmul %31, %33, %cst_16 {dimension_numbers = #tpu.dot_dimension_numbers<[1], [0], [0], [1], [0, 0, 1, 1], [], []>} : vector<19x32xbf16>, vector<32x96xbf16>, vector<19x96xf32> -> vector<19x96xf32>
    %c0_17 = arith.constant 0 : index
    %c0_18 = arith.constant 0 : index
    %c0_19 = arith.constant 0 : index
    %35 = vector.load %arg6[%c0_17, %c0_18, %c0_19] : memref<1x1x96xf32, #tpu.memory_space<vmem>>, vector<1x1x96xf32>
    %36 = vector.shape_cast %35 : vector<1x1x96xf32> to vector<1x96xf32>
    %37 = vector.broadcast %36 : vector<1x96xf32> to vector<19x96xf32>
    %38 = arith.addf %34, %37 : vector<19x96xf32>
    %39 = tpu.transpose %38, [1, 0] : vector<19x96xf32> -> vector<96x19xf32>
    %40 = vector.shape_cast %39 : vector<96x19xf32> to vector<6x16x19xf32>
    %41 = vector.extract_strided_slice %40 {offsets = [0, 0, 0], sizes = [2, 16, 19], strides = [1, 1, 1]} : vector<6x16x19xf32> to vector<2x16x19xf32>
    %42 = tpu.transpose %41, [0, 2, 1] : vector<2x16x19xf32> -> vector<2x19x16xf32>
    %43 = vector.extract_strided_slice %40 {offsets = [2, 0, 0], sizes = [2, 16, 19], strides = [1, 1, 1]} : vector<6x16x19xf32> to vector<2x16x19xf32>
    %44 = vector.extract_strided_slice %40 {offsets = [4, 0, 0], sizes = [2, 16, 19], strides = [1, 1, 1]} : vector<6x16x19xf32> to vector<2x16x19xf32>
    %45 = tpu.iota {dimensions = array<i32: 0>} : vector<19x19xi32>
    %46 = tpu.iota {dimensions = array<i32: 1>} : vector<19x19xi32>
    %47 = arith.cmpi sle, %46, %45 : vector<19x19xi32>
    %48 = vector.shape_cast %47 : vector<19x19xi1> to vector<1x19x19xi1>
    %49 = arith.truncf %42 : vector<2x19x16xf32> to vector<2x19x16xbf16>
    %50 = arith.truncf %43 : vector<2x16x19xf32> to vector<2x16x19xbf16>
    "tpu.trace_start"() <{level = 10 : i32, message = "hsd,hdt->hst"}> : () -> ()
    %cst_20 = arith.constant dense<0.000000e+00> : vector<2x19x19xf32>
    %51 = tpu.matmul %49, %50, %cst_20 {dimension_numbers = #tpu.dot_dimension_numbers<[2], [1], [1], [2], [0, 0, 0, 1, 1, 2], [0], [0]>} : vector<2x19x16xbf16>, vector<2x16x19xbf16>, vector<2x19x19xf32> -> vector<2x19x19xf32>
    "tpu.trace_stop"() : () -> ()
    %cst_21 = arith.constant 2.500000e-01 : f32
    %52 = vector.broadcast %cst_21 : f32 to vector<2x19x19xf32>
    %53 = arith.mulf %51, %52 : vector<2x19x19xf32>
    %cst_22 = arith.constant -1.000000e+30 : f32
    %54 = vector.shape_cast %48 : vector<1x19x19xi1> to vector<1x19x19xi1>
    %55 = vector.broadcast %54 : vector<1x19x19xi1> to vector<2x19x19xi1>
    %56 = vector.broadcast %cst_22 : f32 to vector<2x19x19xf32>
    %57 = arith.select %55, %53, %56 : vector<2x19x19xi1>, vector<2x19x19xf32>
    %cst_23 = arith.constant dense<0xFF800000> : vector<2x19xf32>
    %58 = vector.multi_reduction <maximumf>, %57, %cst_23 [2] : vector<2x19x19xf32> to vector<2x19xf32>
    %59 = vector.shape_cast %58 : vector<2x19xf32> to vector<2x19x1xf32>
    %60 = vector.broadcast %59 : vector<2x19x1xf32> to vector<2x19x19xf32>
    %61 = arith.subf %57, %60 : vector<2x19x19xf32>
    %62 = math.exp %61 : vector<2x19x19xf32>
    %cst_24 = arith.constant dense<0.000000e+00> : vector<2x19xf32>
    %63 = vector.multi_reduction <add>, %62, %cst_24 [2] : vector<2x19x19xf32> to vector<2x19xf32>
    %64 = vector.shape_cast %63 : vector<2x19xf32> to vector<2x19x1xf32>
    %65 = tpu.reciprocal %64 {approx = true} : vector<2x19x1xf32> -> vector<2x19x1xf32>
    %66 = vector.broadcast %65 : vector<2x19x1xf32> to vector<2x19x19xf32>
    %67 = arith.mulf %62, %66 : vector<2x19x19xf32>
    %68 = arith.truncf %44 : vector<2x16x19xf32> to vector<2x16x19xbf16>
    %69 = arith.truncf %67 : vector<2x19x19xf32> to vector<2x19x19xbf16>
    "tpu.trace_start"() <{level = 10 : i32, message = "hdt,hst->hds"}> : () -> ()
    %cst_25 = arith.constant dense<0.000000e+00> : vector<2x16x19xf32>
    %70 = tpu.matmul %68, %69, %cst_25 {dimension_numbers = #tpu.dot_dimension_numbers<[2], [2], [1], [1], [0, 0, 0, 1, 1, 1], [0], [0]>} : vector<2x16x19xbf16>, vector<2x19x19xbf16>, vector<2x16x19xf32> -> vector<2x16x19xf32>
    "tpu.trace_stop"() : () -> ()
    %71 = vector.shape_cast %70 : vector<2x16x19xf32> to vector<32x19xf32>
    %72 = tpu.transpose %71, [1, 0] : vector<32x19xf32> -> vector<19x32xf32>
    %73 = arith.truncf %72 : vector<19x32xf32> to vector<19x32xbf16>
    %c0_26 = arith.constant 0 : index
    %c0_27 = arith.constant 0 : index
    %c0_28 = arith.constant 0 : index
    %74 = vector.load %arg7[%c0_26, %c0_27, %c0_28] : memref<1x32x32xbf16, #tpu.memory_space<vmem>>, vector<1x32x32xbf16>
    %75 = vector.shape_cast %74 : vector<1x32x32xbf16> to vector<32x32xbf16>
    %cst_29 = arith.constant dense<0.000000e+00> : vector<19x32xf32>
    %76 = tpu.matmul %73, %75, %cst_29 {dimension_numbers = #tpu.dot_dimension_numbers<[1], [0], [0], [1], [0, 0, 1, 1], [], []>} : vector<19x32xbf16>, vector<32x32xbf16>, vector<19x32xf32> -> vector<19x32xf32>
    %c0_30 = arith.constant 0 : index
    %c0_31 = arith.constant 0 : index
    %c0_32 = arith.constant 0 : index
    %77 = vector.load %arg8[%c0_30, %c0_31, %c0_32] : memref<1x1x32xf32, #tpu.memory_space<vmem>>, vector<1x1x32xf32>
    %78 = vector.shape_cast %77 : vector<1x1x32xf32> to vector<1x32xf32>
    %79 = vector.broadcast %78 : vector<1x32xf32> to vector<19x32xf32>
    %80 = arith.addf %76, %79 : vector<19x32xf32>
    %81 = arith.addf %4, %80 : vector<19x32xf32>
    %c0_33 = arith.constant 0 : index
    %c0_34 = arith.constant 0 : index
    %c0_35 = arith.constant 0 : index
    %82 = vector.load %arg9[%c0_33, %c0_34, %c0_35] : memref<1x1x32xf32, #tpu.memory_space<vmem>>, vector<1x1x32xf32>
    %83 = vector.shape_cast %82 : vector<1x1x32xf32> to vector<1x32xf32>
    %c0_36 = arith.constant 0 : index
    %c0_37 = arith.constant 0 : index
    %c0_38 = arith.constant 0 : index
    %84 = vector.load %arg10[%c0_36, %c0_37, %c0_38] : memref<1x1x32xf32, #tpu.memory_space<vmem>>, vector<1x1x32xf32>
    %85 = vector.shape_cast %84 : vector<1x1x32xf32> to vector<1x32xf32>
    %cst_39 = arith.constant dense<0.000000e+00> : vector<19xf32>
    %86 = vector.multi_reduction <add>, %81, %cst_39 [1] : vector<19x32xf32> to vector<19xf32>
    %87 = vector.shape_cast %86 : vector<19xf32> to vector<19x1xf32>
    %cst_40 = arith.constant 3.200000e+01 : f32
    %88 = vector.broadcast %cst_40 : f32 to vector<19x1xf32>
    %89 = arith.divf %87, %88 : vector<19x1xf32>
    %90 = vector.broadcast %89 : vector<19x1xf32> to vector<19x32xf32>
    %91 = arith.subf %81, %90 : vector<19x32xf32>
    %92 = arith.mulf %91, %91 : vector<19x32xf32>
    %cst_41 = arith.constant dense<0.000000e+00> : vector<19xf32>
    %93 = vector.multi_reduction <add>, %92, %cst_41 [1] : vector<19x32xf32> to vector<19xf32>
    %94 = vector.shape_cast %93 : vector<19xf32> to vector<19x1xf32>
    %cst_42 = arith.constant 3.200000e+01 : f32
    %95 = vector.broadcast %cst_42 : f32 to vector<19x1xf32>
    %96 = arith.divf %94, %95 : vector<19x1xf32>
    %97 = vector.broadcast %89 : vector<19x1xf32> to vector<19x32xf32>
    %98 = arith.subf %81, %97 : vector<19x32xf32>
    %cst_43 = arith.constant 9.99999974E-6 : f32
    %99 = vector.broadcast %cst_43 : f32 to vector<19x1xf32>
    %100 = arith.addf %96, %99 : vector<19x1xf32>
    %101 = math.rsqrt %100 : vector<19x1xf32>
    %102 = vector.broadcast %101 : vector<19x1xf32> to vector<19x32xf32>
    %103 = arith.mulf %98, %102 : vector<19x32xf32>
    %104 = vector.broadcast %83 : vector<1x32xf32> to vector<19x32xf32>
    %105 = arith.mulf %103, %104 : vector<19x32xf32>
    %106 = vector.broadcast %85 : vector<1x32xf32> to vector<19x32xf32>
    %107 = arith.addf %105, %106 : vector<19x32xf32>
    %108 = arith.truncf %107 : vector<19x32xf32> to vector<19x32xbf16>
    %c0_44 = arith.constant 0 : index
    %c0_45 = arith.constant 0 : index
    %c0_46 = arith.constant 0 : index
    %109 = vector.load %arg11[%c0_44, %c0_45, %c0_46] : memref<1x32x128xbf16, #tpu.memory_space<vmem>>, vector<1x32x128xbf16>
    %110 = vector.shape_cast %109 : vector<1x32x128xbf16> to vector<32x128xbf16>
    %cst_47 = arith.constant dense<0.000000e+00> : vector<19x128xf32>
    %111 = tpu.matmul %108, %110, %cst_47 {dimension_numbers = #tpu.dot_dimension_numbers<[1], [0], [0], [1], [0, 0, 1, 1], [], []>} : vector<19x32xbf16>, vector<32x128xbf16>, vector<19x128xf32> -> vector<19x128xf32>
    %c0_48 = arith.constant 0 : index
    %c0_49 = arith.constant 0 : index
    %c0_50 = arith.constant 0 : index
    %112 = vector.load %arg12[%c0_48, %c0_49, %c0_50] : memref<1x1x128xf32, #tpu.memory_space<vmem>>, vector<1x1x128xf32>
    %113 = vector.shape_cast %112 : vector<1x1x128xf32> to vector<1x128xf32>
    %114 = vector.broadcast %113 : vector<1x128xf32> to vector<19x128xf32>
    %115 = arith.addf %111, %114 : vector<19x128xf32>
    %116 = arith.mulf %115, %115 : vector<19x128xf32>
    %117 = arith.mulf %115, %116 : vector<19x128xf32>
    %cst_51 = arith.constant 4.471500e-02 : f32
    %118 = vector.broadcast %cst_51 : f32 to vector<19x128xf32>
    %119 = arith.mulf %118, %117 : vector<19x128xf32>
    %120 = arith.addf %115, %119 : vector<19x128xf32>
    %cst_52 = arith.constant 0.797884583 : f32
    %121 = vector.broadcast %cst_52 : f32 to vector<19x128xf32>
    %122 = arith.mulf %121, %120 : vector<19x128xf32>
    %123 = math.tanh %122 : vector<19x128xf32>
    %cst_53 = arith.constant 1.000000e+00 : f32
    %124 = vector.broadcast %cst_53 : f32 to vector<19x128xf32>
    %125 = arith.addf %124, %123 : vector<19x128xf32>
    %cst_54 = arith.constant 5.000000e-01 : f32
    %126 = vector.broadcast %cst_54 : f32 to vector<19x128xf32>
    %127 = arith.mulf %126, %125 : vector<19x128xf32>
    %128 = arith.mulf %115, %127 : vector<19x128xf32>
    %129 = arith.truncf %128 : vector<19x128xf32> to vector<19x128xbf16>
    %c0_55 = arith.constant 0 : index
    %c0_56 = arith.constant 0 : index
    %c0_57 = arith.constant 0 : index
    %130 = vector.load %arg13[%c0_55, %c0_56, %c0_57] : memref<1x128x32xbf16, #tpu.memory_space<vmem>>, vector<1x128x32xbf16>
    %131 = vector.shape_cast %130 : vector<1x128x32xbf16> to vector<128x32xbf16>
    %cst_58 = arith.constant dense<0.000000e+00> : vector<19x32xf32>
    %132 = tpu.matmul %129, %131, %cst_58 {dimension_numbers = #tpu.dot_dimension_numbers<[1], [0], [0], [1], [0, 0, 1, 1], [], []>} : vector<19x128xbf16>, vector<128x32xbf16>, vector<19x32xf32> -> vector<19x32xf32>
    %c0_59 = arith.constant 0 : index
    %c0_60 = arith.constant 0 : index
    %c0_61 = arith.constant 0 : index
    %133 = vector.load %arg14[%c0_59, %c0_60, %c0_61] : memref<1x1x32xf32, #tpu.memory_space<vmem>>, vector<1x1x32xf32>
    %134 = vector.shape_cast %133 : vector<1x1x32xf32> to vector<1x32xf32>
    %135 = vector.broadcast %134 : vector<1x32xf32> to vector<19x32xf32>
    %136 = arith.addf %132, %135 : vector<19x32xf32>
    %137 = arith.addf %81, %136 : vector<19x32xf32>
    %c0_62 = arith.constant 0 : index
    %c0_63 = arith.constant 0 : index
    %c0_64 = arith.constant 0 : index
    %138 = vector.load %arg15[%c0_62, %c0_63, %c0_64] : memref<1x19x32xf32, #tpu.memory_space<vmem>>, vector<1x19x32xf32>
    %139 = vector.shape_cast %138 : vector<1x19x32xf32> to vector<19x32xf32>
    %140 = vector.shape_cast %137 : vector<19x32xf32> to vector<1x19x32xf32>
    tpu.vector_store %arg15[%c0_62, %c0_63, %c0_64], %140 {strides = array<i32>} : memref<1x19x32xf32, #tpu.memory_space<vmem>>, vector<1x19x32xf32>,
    return
  }
  func.func @transform_0(%arg0: i32, %arg1: i32) -> (i32, i32, i32) {
    %c0_i32 = arith.constant 0 : i32
    %c0_i32_0 = arith.constant 0 : i32
    %c0_i32_1 = arith.constant 0 : i32
    return %arg0, %c0_i32, %c0_i32_0 : i32, i32, i32
  }
  func.func @transform_1(%arg0: i32, %arg1: i32) -> (i32, i32, i32) {
    %c0_i32 = arith.constant 0 : i32
    %c0_i32_0 = arith.constant 0 : i32
    %c0_i32_1 = arith.constant 0 : i32
    return %arg1, %c0_i32, %c0_i32_0 : i32, i32, i32
  }
  func.func @transform_2(%arg0: i32, %arg1: i32) -> (i32, i32, i32) {
    %c0_i32 = arith.constant 0 : i32
    %c0_i32_0 = arith.constant 0 : i32
    %c0_i32_1 = arith.constant 0 : i32
    return %arg1, %c0_i32, %c0_i32_0 : i32, i32, i32
  }
  func.func @transform_3(%arg0: i32, %arg1: i32) -> (i32, i32, i32) {
    %c0_i32 = arith.constant 0 : i32
    %c0_i32_0 = arith.constant 0 : i32
    %c0_i32_1 = arith.constant 0 : i32
    return %arg1, %c0_i32, %c0_i32_0 : i32, i32, i32
  }
  func.func @transform_4(%arg0: i32, %arg1: i32) -> (i32, i32, i32) {
    %c0_i32 = arith.constant 0 : i32
    %c0_i32_0 = arith.constant 0 : i32
    %c0_i32_1 = arith.constant 0 : i32
    return %arg1, %c0_i32, %c0_i32_0 : i32, i32, i32
  }
  func.func @transform_5(%arg0: i32, %arg1: i32) -> (i32, i32, i32) {
    %c0_i32 = arith.constant 0 : i32
    %c0_i32_0 = arith.constant 0 : i32
    %c0_i32_1 = arith.constant 0 : i32
    return %arg1, %c0_i32, %c0_i32_0 : i32, i32, i32
  }
  func.func @transform_6(%arg0: i32, %arg1: i32) -> (i32, i32, i32) {
    %c0_i32 = arith.constant 0 : i32
    %c0_i32_0 = arith.constant 0 : i32
    %c0_i32_1 = arith.constant 0 : i32
    return %arg1, %c0_i32, %c0_i32_0 : i32, i32, i32
  }
  func.func @transform_7(%arg0: i32, %arg1: i32) -> (i32, i32, i32) {
    %c0_i32 = arith.constant 0 : i32
    %c0_i32_0 = arith.constant 0 : i32
    %c0_i32_1 = arith.constant 0 : i32
    return %arg1, %c0_i32, %c0_i32_0 : i32, i32, i32
  }
  func.func @transform_8(%arg0: i32, %arg1: i32) -> (i32, i32, i32) {
    %c0_i32 = arith.constant 0 : i32
    %c0_i32_0 = arith.constant 0 : i32
    %c0_i32_1 = arith.constant 0 : i32
    return %arg1, %c0_i32, %c0_i32_0 : i32, i32, i32
  }
  func.func @transform_9(%arg0: i32, %arg1: i32) -> (i32, i32, i32) {
    %c0_i32 = arith.constant 0 : i32
    %c0_i32_0 = arith.constant 0 : i32
    %c0_i32_1 = arith.constant 0 : i32
    return %arg1, %c0_i32, %c0_i32_0 : i32, i32, i32
  }
  func.func @transform_10(%arg0: i32, %arg1: i32) -> (i32, i32, i32) {
    %c0_i32 = arith.constant 0 : i32
    %c0_i32_0 = arith.constant 0 : i32
    %c0_i32_1 = arith.constant 0 : i32
    return %arg1, %c0_i32, %c0_i32_0 : i32, i32, i32
  }
  func.func @transform_11(%arg0: i32, %arg1: i32) -> (i32, i32, i32) {
    %c0_i32 = arith.constant 0 : i32
    %c0_i32_0 = arith.constant 0 : i32
    %c0_i32_1 = arith.constant 0 : i32
    return %arg1, %c0_i32, %c0_i32_0 : i32, i32, i32
  }
  func.func @transform_12(%arg0: i32, %arg1: i32) -> (i32, i32, i32) {
    %c0_i32 = arith.constant 0 : i32
    %c0_i32_0 = arith.constant 0 : i32
    %c0_i32_1 = arith.constant 0 : i32
    return %arg1, %c0_i32, %c0_i32_0 : i32, i32, i32
  }
  func.func @transform_13(%arg0: i32, %arg1: i32) -> (i32, i32, i32) {
    %c0_i32 = arith.constant 0 : i32
    %c0_i32_0 = arith.constant 0 : i32
    %c0_i32_1 = arith.constant 0 : i32
    return %arg0, %c0_i32, %c0_i32_0 : i32, i32, i32
  }
}

module attributes {stable_mosaic.version = 11 : i64} {
  func.func @tail_kernel(%arg0: i32, %arg1: memref<1x19x32xf32, #tpu.memory_space<vmem>>, %arg2: memref<1x32xf32, #tpu.memory_space<vmem>>, %arg3: memref<1x32xf32, #tpu.memory_space<vmem>>, %arg4: memref<1x32xf32, #tpu.memory_space<vmem>>, %arg5: memref<1x32xf32, #tpu.memory_space<vmem>>, %arg6: memref<32x128xbf16, #tpu.memory_space<vmem>>, %arg7: memref<1x128xf32, #tpu.memory_space<vmem>>, %arg8: memref<32x128xbf16, #tpu.memory_space<vmem>>, %arg9: memref<1x128xf32, #tpu.memory_space<vmem>>, %arg10: memref<1x1x8xi32, #tpu.memory_space<vmem>>, %arg11: memref<1x1x10xi32, #tpu.memory_space<vmem>>, %arg12: memref<1x10x128xf32, #tpu.memory_space<vmem>>, %arg13: memref<1x1x128xf32, #tpu.memory_space<vmem>>, %arg14: memref<1x1x128xf32, #tpu.memory_space<vmem>>) attributes {dimension_semantics = [#tpu.dimension_semantics<parallel>], iteration_bounds = array<i64: 2>, scalar_prefetch = 0 : i64, scratch_operands = 0 : i64, tpu.core_type = #tpu.core_type<tc>, window_params = [{transform_indices = @transform_0, window_bounds = array<i64: 1, 19, 32>}, {pipeline_mode = #tpu.pipeline_mode<synchronous>, transform_indices = @transform_1, window_bounds = array<i64: 1, 32>}, {pipeline_mode = #tpu.pipeline_mode<synchronous>, transform_indices = @transform_2, window_bounds = array<i64: 1, 32>}, {pipeline_mode = #tpu.pipeline_mode<synchronous>, transform_indices = @transform_3, window_bounds = array<i64: 1, 32>}, {pipeline_mode = #tpu.pipeline_mode<synchronous>, transform_indices = @transform_4, window_bounds = array<i64: 1, 32>}, {pipeline_mode = #tpu.pipeline_mode<synchronous>, transform_indices = @transform_5, window_bounds = array<i64: 32, 128>}, {pipeline_mode = #tpu.pipeline_mode<synchronous>, transform_indices = @transform_6, window_bounds = array<i64: 1, 128>}, {pipeline_mode = #tpu.pipeline_mode<synchronous>, transform_indices = @transform_7, window_bounds = array<i64: 32, 128>}, {pipeline_mode = #tpu.pipeline_mode<synchronous>, transform_indices = @transform_8, window_bounds = array<i64: 1, 128>}, {transform_indices = @transform_9, window_bounds = array<i64: 1, 1, 8>}, {transform_indices = @transform_10, window_bounds = array<i64: 1, 1, 10>}, {transform_indices = @transform_11, window_bounds = array<i64: 1, 10, 128>}, {transform_indices = @transform_12, window_bounds = array<i64: 1, 1, 128>}, {transform_indices = @transform_13, window_bounds = array<i64: 1, 1, 128>}]} {
    %c0 = arith.constant 0 : index
    %c0_0 = arith.constant 0 : index
    %c0_1 = arith.constant 0 : index
    %0 = vector.load %arg1[%c0, %c0_0, %c0_1] : memref<1x19x32xf32, #tpu.memory_space<vmem>>, vector<1x19x32xf32>
    %1 = vector.shape_cast %0 : vector<1x19x32xf32> to vector<19x32xf32>
    %c0_2 = arith.constant 0 : index
    %c0_3 = arith.constant 0 : index
    %2 = vector.load %arg2[%c0_2, %c0_3] : memref<1x32xf32, #tpu.memory_space<vmem>>, vector<1x32xf32>
    %c0_4 = arith.constant 0 : index
    %c0_5 = arith.constant 0 : index
    %3 = vector.load %arg3[%c0_4, %c0_5] : memref<1x32xf32, #tpu.memory_space<vmem>>, vector<1x32xf32>
    %cst = arith.constant dense<0.000000e+00> : vector<19xf32>
    %4 = vector.multi_reduction <add>, %1, %cst [1] : vector<19x32xf32> to vector<19xf32>
    %5 = vector.shape_cast %4 : vector<19xf32> to vector<19x1xf32>
    %cst_6 = arith.constant 3.200000e+01 : f32
    %6 = vector.broadcast %cst_6 : f32 to vector<19x1xf32>
    %7 = arith.divf %5, %6 : vector<19x1xf32>
    %8 = vector.broadcast %7 : vector<19x1xf32> to vector<19x32xf32>
    %9 = arith.subf %1, %8 : vector<19x32xf32>
    %10 = arith.mulf %9, %9 : vector<19x32xf32>
    %cst_7 = arith.constant dense<0.000000e+00> : vector<19xf32>
    %11 = vector.multi_reduction <add>, %10, %cst_7 [1] : vector<19x32xf32> to vector<19xf32>
    %12 = vector.shape_cast %11 : vector<19xf32> to vector<19x1xf32>
    %cst_8 = arith.constant 3.200000e+01 : f32
    %13 = vector.broadcast %cst_8 : f32 to vector<19x1xf32>
    %14 = arith.divf %12, %13 : vector<19x1xf32>
    %15 = vector.broadcast %7 : vector<19x1xf32> to vector<19x32xf32>
    %16 = arith.subf %1, %15 : vector<19x32xf32>
    %cst_9 = arith.constant 9.99999974E-6 : f32
    %17 = vector.broadcast %cst_9 : f32 to vector<19x1xf32>
    %18 = arith.addf %14, %17 : vector<19x1xf32>
    %19 = math.rsqrt %18 : vector<19x1xf32>
    %20 = vector.broadcast %19 : vector<19x1xf32> to vector<19x32xf32>
    %21 = arith.mulf %16, %20 : vector<19x32xf32>
    %22 = vector.broadcast %2 : vector<1x32xf32> to vector<19x32xf32>
    %23 = arith.mulf %21, %22 : vector<19x32xf32>
    %24 = vector.broadcast %3 : vector<1x32xf32> to vector<19x32xf32>
    %25 = arith.addf %23, %24 : vector<19x32xf32>
    %26 = vector.extract_strided_slice %25 {offsets = [1, 0], sizes = [18, 32], strides = [1, 1]} : vector<19x32xf32> to vector<18x32xf32>
    %c0_10 = arith.constant 0 : index
    %c0_11 = arith.constant 0 : index
    %27 = vector.load %arg4[%c0_10, %c0_11] : memref<1x32xf32, #tpu.memory_space<vmem>>, vector<1x32xf32>
    %c0_12 = arith.constant 0 : index
    %c0_13 = arith.constant 0 : index
    %28 = vector.load %arg5[%c0_12, %c0_13] : memref<1x32xf32, #tpu.memory_space<vmem>>, vector<1x32xf32>
    %cst_14 = arith.constant dense<0.000000e+00> : vector<18xf32>
    %29 = vector.multi_reduction <add>, %26, %cst_14 [1] : vector<18x32xf32> to vector<18xf32>
    %30 = vector.shape_cast %29 : vector<18xf32> to vector<18x1xf32>
    %cst_15 = arith.constant 3.200000e+01 : f32
    %31 = vector.broadcast %cst_15 : f32 to vector<18x1xf32>
    %32 = arith.divf %30, %31 : vector<18x1xf32>
    %33 = vector.broadcast %32 : vector<18x1xf32> to vector<18x32xf32>
    %34 = arith.subf %26, %33 : vector<18x32xf32>
    %35 = arith.mulf %34, %34 : vector<18x32xf32>
    %cst_16 = arith.constant dense<0.000000e+00> : vector<18xf32>
    %36 = vector.multi_reduction <add>, %35, %cst_16 [1] : vector<18x32xf32> to vector<18xf32>
    %37 = vector.shape_cast %36 : vector<18xf32> to vector<18x1xf32>
    %cst_17 = arith.constant 3.200000e+01 : f32
    %38 = vector.broadcast %cst_17 : f32 to vector<18x1xf32>
    %39 = arith.divf %37, %38 : vector<18x1xf32>
    %40 = vector.broadcast %32 : vector<18x1xf32> to vector<18x32xf32>
    %41 = arith.subf %26, %40 : vector<18x32xf32>
    %cst_18 = arith.constant 9.99999974E-6 : f32
    %42 = vector.broadcast %cst_18 : f32 to vector<18x1xf32>
    %43 = arith.addf %39, %42 : vector<18x1xf32>
    %44 = math.rsqrt %43 : vector<18x1xf32>
    %45 = vector.broadcast %44 : vector<18x1xf32> to vector<18x32xf32>
    %46 = arith.mulf %41, %45 : vector<18x32xf32>
    %47 = vector.broadcast %27 : vector<1x32xf32> to vector<18x32xf32>
    %48 = arith.mulf %46, %47 : vector<18x32xf32>
    %49 = vector.broadcast %28 : vector<1x32xf32> to vector<18x32xf32>
    %50 = arith.addf %48, %49 : vector<18x32xf32>
    %51 = vector.extract_strided_slice %50 {offsets = [0, 0], sizes = [8, 32], strides = [1, 1]} : vector<18x32xf32> to vector<8x32xf32>
    %52 = arith.truncf %51 : vector<8x32xf32> to vector<8x32xbf16>
    %c0_19 = arith.constant 0 : index
    %c0_20 = arith.constant 0 : index
    %53 = vector.load %arg6[%c0_19, %c0_20] : memref<32x128xbf16, #tpu.memory_space<vmem>>, vector<32x128xbf16>
    %cst_21 = arith.constant dense<0.000000e+00> : vector<8x128xf32>
    %54 = tpu.matmul %52, %53, %cst_21 {dimension_numbers = #tpu.dot_dimension_numbers<[1], [0], [0], [1], [0, 0, 1, 1], [], []>} : vector<8x32xbf16>, vector<32x128xbf16>, vector<8x128xf32> -> vector<8x128xf32>
    %c0_22 = arith.constant 0 : index
    %c0_23 = arith.constant 0 : index
    %55 = vector.load %arg7[%c0_22, %c0_23] : memref<1x128xf32, #tpu.memory_space<vmem>>, vector<1x128xf32>
    %56 = vector.broadcast %55 : vector<1x128xf32> to vector<8x128xf32>
    %57 = arith.addf %54, %56 : vector<8x128xf32>
    %58 = vector.extract_strided_slice %50 {offsets = [8, 0], sizes = [10, 32], strides = [1, 1]} : vector<18x32xf32> to vector<10x32xf32>
    %59 = arith.truncf %58 : vector<10x32xf32> to vector<10x32xbf16>
    %c0_24 = arith.constant 0 : index
    %c0_25 = arith.constant 0 : index
    %60 = vector.load %arg8[%c0_24, %c0_25] : memref<32x128xbf16, #tpu.memory_space<vmem>>, vector<32x128xbf16>
    %cst_26 = arith.constant dense<0.000000e+00> : vector<10x128xf32>
    %61 = tpu.matmul %59, %60, %cst_26 {dimension_numbers = #tpu.dot_dimension_numbers<[1], [0], [0], [1], [0, 0, 1, 1], [], []>} : vector<10x32xbf16>, vector<32x128xbf16>, vector<10x128xf32> -> vector<10x128xf32>
    %c0_27 = arith.constant 0 : index
    %c0_28 = arith.constant 0 : index
    %62 = vector.load %arg9[%c0_27, %c0_28] : memref<1x128xf32, #tpu.memory_space<vmem>>, vector<1x128xf32>
    %63 = vector.broadcast %62 : vector<1x128xf32> to vector<10x128xf32>
    %64 = arith.addf %61, %63 : vector<10x128xf32>
    %c0_29 = arith.constant 0 : index
    %c0_30 = arith.constant 0 : index
    %c0_31 = arith.constant 0 : index
    %65 = vector.load %arg12[%c0_29, %c0_30, %c0_31] : memref<1x10x128xf32, #tpu.memory_space<vmem>>, vector<1x10x128xf32>
    %66 = vector.shape_cast %65 : vector<1x10x128xf32> to vector<10x128xf32>
    %67 = vector.shape_cast %64 : vector<10x128xf32> to vector<1x10x128xf32>
    tpu.vector_store %arg12[%c0_29, %c0_30, %c0_31], %67 {strides = array<i32>} : memref<1x10x128xf32, #tpu.memory_space<vmem>>, vector<1x10x128xf32>,
    %c0_32 = arith.constant 0 : index
    %c0_33 = arith.constant 0 : index
    %c0_34 = arith.constant 0 : index
    %68 = vector.load %arg10[%c0_32, %c0_33, %c0_34] : memref<1x1x8xi32, #tpu.memory_space<vmem>>, vector<1x1x8xi32>
    %69 = vector.shape_cast %68 : vector<1x1x8xi32> to vector<1x8xi32>
    %cst_35 = arith.constant dense<0xFF800000> : vector<8xf32>
    %70 = vector.multi_reduction <maximumf>, %57, %cst_35 [1] : vector<8x128xf32> to vector<8xf32>
    %71 = vector.shape_cast %70 : vector<8xf32> to vector<8x1xf32>
    %72 = vector.broadcast %71 : vector<8x1xf32> to vector<8x128xf32>
    %73 = arith.subf %57, %72 : vector<8x128xf32>
    %74 = math.exp %73 : vector<8x128xf32>
    %cst_36 = arith.constant dense<0.000000e+00> : vector<8xf32>
    %75 = vector.multi_reduction <add>, %74, %cst_36 [1] : vector<8x128xf32> to vector<8xf32>
    %76 = vector.shape_cast %75 : vector<8xf32> to vector<8x1xf32>
    %77 = math.log %76 : vector<8x1xf32>
    %78 = arith.addf %71, %77 : vector<8x1xf32>
    %79 = tpu.iota {dimensions = array<i32: 0>} : vector<8x8xi32>
    %80 = tpu.iota {dimensions = array<i32: 1>} : vector<8x8xi32>
    %81 = arith.cmpi eq, %79, %80 : vector<8x8xi32>
    %82 = vector.shape_cast %69 : vector<1x8xi32> to vector<1x8xi32>
    %83 = vector.broadcast %82 : vector<1x8xi32> to vector<8x8xi32>
    %c0_i32 = arith.constant 0 : i32
    %84 = vector.broadcast %c0_i32 : i32 to vector<8x8xi32>
    %85 = arith.select %81, %83, %84 : vector<8x8xi1>, vector<8x8xi32>
    %cst_37 = arith.constant dense<0> : vector<8xi32>
    %86 = vector.multi_reduction <add>, %85, %cst_37 [1] : vector<8x8xi32> to vector<8xi32>
    %87 = vector.shape_cast %86 : vector<8xi32> to vector<8x1xi32>
    %88 = tpu.iota {dimensions = array<i32: 1>} : vector<8x128xi32>
    %89 = vector.broadcast %87 : vector<8x1xi32> to vector<8x128xi32>
    %90 = arith.cmpi eq, %88, %89 : vector<8x128xi32>
    %cst_38 = arith.constant 0.000000e+00 : f32
    %91 = vector.broadcast %cst_38 : f32 to vector<8x128xf32>
    %92 = arith.select %90, %57, %91 : vector<8x128xi1>, vector<8x128xf32>
    %cst_39 = arith.constant dense<0.000000e+00> : vector<8xf32>
    %93 = vector.multi_reduction <add>, %92, %cst_39 [1] : vector<8x128xf32> to vector<8xf32>
    %94 = vector.shape_cast %93 : vector<8xf32> to vector<8x1xf32>
    %95 = arith.subf %78, %94 : vector<8x1xf32>
    %96 = vector.shape_cast %95 : vector<8x1xf32> to vector<1x8x1xf32>
    %cst_40 = arith.constant dense<0.000000e+00> : vector<1xf32>
    %97 = vector.multi_reduction <add>, %96, %cst_40 [1, 2] : vector<1x8x1xf32> to vector<1xf32>
    %98 = vector.shape_cast %97 : vector<1xf32> to vector<1x1x1xf32>
    %99 = vector.extract %98[0, 0, 0] : f32 from vector<1x1x1xf32>
    %100 = vector.broadcast %99 : f32 to vector<1x1xf32>
    %101 = vector.shape_cast %100 : vector<1x1xf32> to vector<1x1xf32>
    %102 = vector.broadcast %101 : vector<1x1xf32> to vector<1x128xf32>
    %c0_41 = arith.constant 0 : index
    %c0_42 = arith.constant 0 : index
    %c0_43 = arith.constant 0 : index
    %103 = vector.load %arg13[%c0_41, %c0_42, %c0_43] : memref<1x1x128xf32, #tpu.memory_space<vmem>>, vector<1x1x128xf32>
    %104 = vector.shape_cast %103 : vector<1x1x128xf32> to vector<1x128xf32>
    %105 = vector.shape_cast %102 : vector<1x128xf32> to vector<1x1x128xf32>
    tpu.vector_store %arg13[%c0_41, %c0_42, %c0_43], %105 {strides = array<i32>} : memref<1x1x128xf32, #tpu.memory_space<vmem>>, vector<1x1x128xf32>,
    %c0_44 = arith.constant 0 : index
    %c0_45 = arith.constant 0 : index
    %c0_46 = arith.constant 0 : index
    %106 = vector.load %arg11[%c0_44, %c0_45, %c0_46] : memref<1x1x10xi32, #tpu.memory_space<vmem>>, vector<1x1x10xi32>
    %107 = vector.shape_cast %106 : vector<1x1x10xi32> to vector<1x10xi32>
    %cst_47 = arith.constant dense<0xFF800000> : vector<10xf32>
    %108 = vector.multi_reduction <maximumf>, %64, %cst_47 [1] : vector<10x128xf32> to vector<10xf32>
    %109 = vector.shape_cast %108 : vector<10xf32> to vector<10x1xf32>
    %110 = vector.broadcast %109 : vector<10x1xf32> to vector<10x128xf32>
    %111 = arith.subf %64, %110 : vector<10x128xf32>
    %112 = math.exp %111 : vector<10x128xf32>
    %cst_48 = arith.constant dense<0.000000e+00> : vector<10xf32>
    %113 = vector.multi_reduction <add>, %112, %cst_48 [1] : vector<10x128xf32> to vector<10xf32>
    %114 = vector.shape_cast %113 : vector<10xf32> to vector<10x1xf32>
    %115 = math.log %114 : vector<10x1xf32>
    %116 = arith.addf %109, %115 : vector<10x1xf32>
    %117 = tpu.iota {dimensions = array<i32: 0>} : vector<10x10xi32>
    %118 = tpu.iota {dimensions = array<i32: 1>} : vector<10x10xi32>
    %119 = arith.cmpi eq, %117, %118 : vector<10x10xi32>
    %120 = vector.shape_cast %107 : vector<1x10xi32> to vector<1x10xi32>
    %121 = vector.broadcast %120 : vector<1x10xi32> to vector<10x10xi32>
    %c0_i32_49 = arith.constant 0 : i32
    %122 = vector.broadcast %c0_i32_49 : i32 to vector<10x10xi32>
    %123 = arith.select %119, %121, %122 : vector<10x10xi1>, vector<10x10xi32>
    %cst_50 = arith.constant dense<0> : vector<10xi32>
    %124 = vector.multi_reduction <add>, %123, %cst_50 [1] : vector<10x10xi32> to vector<10xi32>
    %125 = vector.shape_cast %124 : vector<10xi32> to vector<10x1xi32>
    %126 = tpu.iota {dimensions = array<i32: 1>} : vector<10x128xi32>
    %127 = vector.broadcast %125 : vector<10x1xi32> to vector<10x128xi32>
    %128 = arith.cmpi eq, %126, %127 : vector<10x128xi32>
    %cst_51 = arith.constant 0.000000e+00 : f32
    %129 = vector.broadcast %cst_51 : f32 to vector<10x128xf32>
    %130 = arith.select %128, %64, %129 : vector<10x128xi1>, vector<10x128xf32>
    %cst_52 = arith.constant dense<0.000000e+00> : vector<10xf32>
    %131 = vector.multi_reduction <add>, %130, %cst_52 [1] : vector<10x128xf32> to vector<10xf32>
    %132 = vector.shape_cast %131 : vector<10xf32> to vector<10x1xf32>
    %133 = arith.subf %116, %132 : vector<10x1xf32>
    %134 = vector.shape_cast %133 : vector<10x1xf32> to vector<1x10x1xf32>
    %cst_53 = arith.constant dense<0.000000e+00> : vector<1xf32>
    %135 = vector.multi_reduction <add>, %134, %cst_53 [1, 2] : vector<1x10x1xf32> to vector<1xf32>
    %136 = vector.shape_cast %135 : vector<1xf32> to vector<1x1x1xf32>
    %137 = vector.extract %136[0, 0, 0] : f32 from vector<1x1x1xf32>
    %138 = vector.broadcast %137 : f32 to vector<1x1xf32>
    %139 = vector.shape_cast %138 : vector<1x1xf32> to vector<1x1xf32>
    %140 = vector.broadcast %139 : vector<1x1xf32> to vector<1x128xf32>
    %c0_54 = arith.constant 0 : index
    %c0_55 = arith.constant 0 : index
    %c0_56 = arith.constant 0 : index
    %141 = vector.load %arg14[%c0_54, %c0_55, %c0_56] : memref<1x1x128xf32, #tpu.memory_space<vmem>>, vector<1x1x128xf32>
    %142 = vector.shape_cast %141 : vector<1x1x128xf32> to vector<1x128xf32>
    %143 = vector.shape_cast %140 : vector<1x128xf32> to vector<1x1x128xf32>
    tpu.vector_store %arg14[%c0_54, %c0_55, %c0_56], %143 {strides = array<i32>} : memref<1x1x128xf32, #tpu.memory_space<vmem>>, vector<1x1x128xf32>,
    return
  }
  func.func @transform_0(%arg0: i32) -> (i32, i32, i32) {
    %c0_i32 = arith.constant 0 : i32
    %c0_i32_0 = arith.constant 0 : i32
    %c0_i32_1 = arith.constant 0 : i32
    return %arg0, %c0_i32, %c0_i32_0 : i32, i32, i32
  }
  func.func @transform_1(%arg0: i32) -> (i32, i32) {
    %c0_i32 = arith.constant 0 : i32
    %c0_i32_0 = arith.constant 0 : i32
    %c0_i32_1 = arith.constant 0 : i32
    return %c0_i32, %c0_i32_0 : i32, i32
  }
  func.func @transform_2(%arg0: i32) -> (i32, i32) {
    %c0_i32 = arith.constant 0 : i32
    %c0_i32_0 = arith.constant 0 : i32
    %c0_i32_1 = arith.constant 0 : i32
    return %c0_i32, %c0_i32_0 : i32, i32
  }
  func.func @transform_3(%arg0: i32) -> (i32, i32) {
    %c0_i32 = arith.constant 0 : i32
    %c0_i32_0 = arith.constant 0 : i32
    %c0_i32_1 = arith.constant 0 : i32
    return %c0_i32, %c0_i32_0 : i32, i32
  }
  func.func @transform_4(%arg0: i32) -> (i32, i32) {
    %c0_i32 = arith.constant 0 : i32
    %c0_i32_0 = arith.constant 0 : i32
    %c0_i32_1 = arith.constant 0 : i32
    return %c0_i32, %c0_i32_0 : i32, i32
  }
  func.func @transform_5(%arg0: i32) -> (i32, i32) {
    %c0_i32 = arith.constant 0 : i32
    %c0_i32_0 = arith.constant 0 : i32
    %c0_i32_1 = arith.constant 0 : i32
    return %c0_i32, %c0_i32_0 : i32, i32
  }
  func.func @transform_6(%arg0: i32) -> (i32, i32) {
    %c0_i32 = arith.constant 0 : i32
    %c0_i32_0 = arith.constant 0 : i32
    %c0_i32_1 = arith.constant 0 : i32
    return %c0_i32, %c0_i32_0 : i32, i32
  }
  func.func @transform_7(%arg0: i32) -> (i32, i32) {
    %c0_i32 = arith.constant 0 : i32
    %c0_i32_0 = arith.constant 0 : i32
    %c0_i32_1 = arith.constant 0 : i32
    return %c0_i32, %c0_i32_0 : i32, i32
  }
  func.func @transform_8(%arg0: i32) -> (i32, i32) {
    %c0_i32 = arith.constant 0 : i32
    %c0_i32_0 = arith.constant 0 : i32
    %c0_i32_1 = arith.constant 0 : i32
    return %c0_i32, %c0_i32_0 : i32, i32
  }
  func.func @transform_9(%arg0: i32) -> (i32, i32, i32) {
    %c0_i32 = arith.constant 0 : i32
    %c0_i32_0 = arith.constant 0 : i32
    %c0_i32_1 = arith.constant 0 : i32
    return %arg0, %c0_i32, %c0_i32_0 : i32, i32, i32
  }
  func.func @transform_10(%arg0: i32) -> (i32, i32, i32) {
    %c0_i32 = arith.constant 0 : i32
    %c0_i32_0 = arith.constant 0 : i32
    %c0_i32_1 = arith.constant 0 : i32
    return %arg0, %c0_i32, %c0_i32_0 : i32, i32, i32
  }
  func.func @transform_11(%arg0: i32) -> (i32, i32, i32) {
    %c0_i32 = arith.constant 0 : i32
    %c0_i32_0 = arith.constant 0 : i32
    %c0_i32_1 = arith.constant 0 : i32
    return %arg0, %c0_i32, %c0_i32_0 : i32, i32, i32
  }
  func.func @transform_12(%arg0: i32) -> (i32, i32, i32) {
    %c0_i32 = arith.constant 0 : i32
    %c0_i32_0 = arith.constant 0 : i32
    %c0_i32_1 = arith.constant 0 : i32
    return %arg0, %c0_i32, %c0_i32_0 : i32, i32, i32
  }
  func.func @transform_13(%arg0: i32) -> (i32, i32, i32) {
    %c0_i32 = arith.constant 0 : i32
    %c0_i32_0 = arith.constant 0 : i32
    %c0_i32_1 = arith.constant 0 : i32
    return %arg0, %c0_i32, %c0_i32_0 : i32, i32, i32
  }
}

</mosaic_0001>

<llo_original>
// kernel: _forward_core.3
$region0: #{_forward_core.3}
  #allocation0 [shape = 'u32[]', space=smem, size = 0x4, offset = 0x4, fixed_abs, tag = 'smem constant byte address 0x4 - core index']
  #allocation1 [shape = 'u32[72,128]{1,0:T(1,128)}', space=vmem, size = 0x9000, scoped, tag = 'internal scratch']
  %s0 = inlined_call_operand.vmem [shape: f32[2,19,32], index: 0, kind: input, shape index: {}]
  %s1 = inlined_call_operand.vmem [shape: f32[1,32], index: 1, kind: input, shape index: {}]
  %s2 = inlined_call_operand.vmem [shape: f32[1,32], index: 2, kind: input, shape index: {}]
  %s3 = inlined_call_operand.vmem [shape: f32[1,32], index: 3, kind: input, shape index: {}]
  %s4 = inlined_call_operand.vmem [shape: f32[1,32], index: 4, kind: input, shape index: {}]
  %s5 = inlined_call_operand.vmem [shape: bf16[32,128], index: 5, kind: input, shape index: {}]
  %s6 = inlined_call_operand.vmem [shape: f32[1,128], index: 6, kind: input, shape index: {}]
  %s7 = inlined_call_operand.vmem [shape: bf16[32,128], index: 7, kind: input, shape index: {}]
  %s8 = inlined_call_operand.vmem [shape: f32[1,128], index: 8, kind: input, shape index: {}]
  %s9 = inlined_call_operand.vmem [shape: s32[2,1,8], index: 9, kind: input, shape index: {}]
  %s10 = inlined_call_operand.vmem [shape: s32[2,1,10], index: 10, kind: input, shape index: {}]
  %s11 = inlined_call_operand.vmem [shape: f32[2,10,128], index: 11, kind: output, shape index: {0}]
  %s12 = inlined_call_operand.vmem [shape: f32[2,1,128], index: 12, kind: output, shape index: {1}]
  %s13 = inlined_call_operand.vmem [shape: f32[2,1,128], index: 13, kind: output, shape index: {2}]
  %14 = xla_tuple %s11, %s12, %s13
  %s15 = sld [smem:[#allocation0]]
  $region93: #{_forward_core.3} parent=0
    _
  %s17 = ssub.s32 1, %s15
  %s18 = scalar_select 0, %s17, %s15
  loop: start=0, step=1, limit=4
  $region2: #{_forward_core.3} parent=0 // loop_pre_header
    _
  $region3: #{_forward_core.3} parent=0 // loop_header
    %s20 = sphi 0, %s24
    %p21 = scmp.ge.s32.totalorder %s20, 4
    %s30 = sphi 0, %s32
    %s33 = sphi 0, %s30
    %s34 = sphi 0, %s33
    %s50 = sphi 0, %s34
    %s54 = sphi 0, %s54
    %s56 = sphi 0, %s54
    %s57 = sphi 0, %s56
    %s71 = sphi 0, %s57
    %s75 = sphi 0, %s75
    %s77 = sphi 0, %s75
    %s78 = sphi 0, %s77
    %s92 = sphi 0, %s78
    %s96 = sphi 0, %s96
    %s98 = sphi 0, %s96
    %s99 = sphi 0, %s98
    %s113 = sphi 0, %s99
    %s117 = sphi 0, %s117
    %s119 = sphi 0, %s117
    %s120 = sphi 0, %s119
    %s134 = sphi 0, %s120
    %s138 = sphi 0, %s138
    %s140 = sphi 0, %s138
    %s141 = sphi 0, %s140
    %s155 = sphi 0, %s141
    %s159 = sphi 0, %s159
    %s161 = sphi 0, %s159
    %s162 = sphi 0, %s161
    %s176 = sphi 0, %s162
    %s180 = sphi 0, %s180
    %s182 = sphi 0, %s180
    %s183 = sphi 0, %s182
    %s197 = sphi 0, %s183
    %s201 = sphi 0, %s201
    %s203 = sphi 0, %s201
    %s204 = sphi 0, %s203
    %s218 = sphi 0, %s204
    %s224 = sphi 0, %s226
    %s227 = sphi 0, %s224
    %s228 = sphi 0, %s227
    %s244 = sphi 0, %s228
    %s250 = sphi 0, %s252
    %s253 = sphi 0, %s250
    %s254 = sphi 0, %s253
    %s270 = sphi 0, %s254
    %s276 = sphi 0, %s278
    %s279 = sphi 0, %s276
    %s280 = sphi 0, %s279
    %s296 = sphi 0, %s280
    %s302 = sphi 0, %s304
    %s305 = sphi 0, %s302
    %s306 = sphi 0, %s305
    %s322 = sphi 0, %s306
    %s328 = sphi 0, %s330
    %s331 = sphi 0, %s328
    %s332 = sphi 0, %s331
    %s348 = sphi 0, %s332
  $region4: #{_forward_core.3} parent=0 // loop_header_branch
    %23 = sbr.rel (%p21) target = $region8
  $region5: #{_forward_core.3} parent=0 // loop_body
    %s25 = ssub.s32 %s20, 1
    %s26 = ssub.s32 %s20, 2
    %s27 = sadd.s32 %s20, 1
    %s28 = ssub.s32 %s20, %s27
    %p29 = scmp.eq.s32.totalorder %s28, 0
    %s31 = sadd.s32 %s30, 1
    %s32 = scalar_select %p29, %s30, %s31
    %p35 = pneg %p29
    %p36 = scmp.eq.s32.totalorder %s20, 1
    %p37 = por %p35, %p36
    %p38 = scmp.ne.s32.totalorder %s30, %s33
    %p39 = scmp.eq.s32.totalorder %s20, 0
    %p40 = por %p38, %p39
    %p41 = scmp.ne.s32.totalorder %s30, %s33
    %p42 = scmp.eq.s32.totalorder %s25, 1
    %p43 = por %p41, %p42
    %p44 = scmp.ne.s32.totalorder %s33, %s34
    %p45 = scmp.eq.s32.totalorder %s25, 0
    %p46 = por %p44, %p45
    %p47 = scmp.ne.s32.totalorder %s33, %s34
    %p48 = scmp.eq.s32.totalorder %s26, 1
    %p49 = por %p47, %p48
    %p51 = scmp.ne.s32.totalorder %s34, %s50
    %p52 = scmp.eq.s32.totalorder %s26, 0
    %p53 = por %p51, %p52
    %s55 = sadd.s32 %s54, 1
    %p58 = scmp.eq.s32.totalorder %s20, 1
    %p59 = scmp.ne.s32.totalorder %s54, %s56
    %p60 = scmp.eq.s32.totalorder %s20, 0
    %p61 = por %p59, %p60
    %p62 = scmp.ne.s32.totalorder %s54, %s56
    %p63 = scmp.eq.s32.totalorder %s25, 1
    %p64 = por %p62, %p63
    %p65 = scmp.ne.s32.totalorder %s56, %s57
    %p66 = scmp.eq.s32.totalorder %s25, 0
    %p67 = por %p65, %p66
    %p68 = scmp.ne.s32.totalorder %s56, %s57
    %p69 = scmp.eq.s32.totalorder %s26, 1
    %p70 = por %p68, %p69
    %p72 = scmp.ne.s32.totalorder %s57, %s71
    %p73 = scmp.eq.s32.totalorder %s26, 0
    %p74 = por %p72, %p73
    %s76 = sadd.s32 %s75, 1
    %p79 = scmp.eq.s32.totalorder %s20, 1
    %p80 = scmp.ne.s32.totalorder %s75, %s77
    %p81 = scmp.eq.s32.totalorder %s20, 0
    %p82 = por %p80, %p81
    %p83 = scmp.ne.s32.totalorder %s75, %s77
    %p84 = scmp.eq.s32.totalorder %s25, 1
    %p85 = por %p83, %p84
    %p86 = scmp.ne.s32.totalorder %s77, %s78
    %p87 = scmp.eq.s32.totalorder %s25, 0
    %p88 = por %p86, %p87
    %p89 = scmp.ne.s32.totalorder %s77, %s78
    %p90 = scmp.eq.s32.totalorder %s26, 1
    %p91 = por %p89, %p90
    %p93 = scmp.ne.s32.totalorder %s78, %s92
    %p94 = scmp.eq.s32.totalorder %s26, 0
    %p95 = por %p93, %p94
    %s97 = sadd.s32 %s96, 1
    %p100 = scmp.eq.s32.totalorder %s20, 1
    %p101 = scmp.ne.s32.totalorder %s96, %s98
    %p102 = scmp.eq.s32.totalorder %s20, 0
    %p103 = por %p101, %p102
    %p104 = scmp.ne.s32.totalorder %s96, %s98
    %p105 = scmp.eq.s32.totalorder %s25, 1
    %p106 = por %p104, %p105
    %p107 = scmp.ne.s32.totalorder %s98, %s99
    %p108 = scmp.eq.s32.totalorder %s25, 0
    %p109 = por %p107, %p108
    %p110 = scmp.ne.s32.totalorder %s98, %s99
    %p111 = scmp.eq.s32.totalorder %s26, 1
    %p112 = por %p110, %p111
    %p114 = scmp.ne.s32.totalorder %s99, %s113
    %p115 = scmp.eq.s32.totalorder %s26, 0
    %p116 = por %p114, %p115
    %s118 = sadd.s32 %s117, 1
    %p121 = scmp.eq.s32.totalorder %s20, 1
    %p122 = scmp.ne.s32.totalorder %s117, %s119
    %p123 = scmp.eq.s32.totalorder %s20, 0
    %p124 = por %p122, %p123
    %p125 = scmp.ne.s32.totalorder %s117, %s119
    %p126 = scmp.eq.s32.totalorder %s25, 1
    %p127 = por %p125, %p126
    %p128 = scmp.ne.s32.totalorder %s119, %s120
    %p129 = scmp.eq.s32.totalorder %s25, 0
    %p130 = por %p128, %p129
    %p131 = scmp.ne.s32.totalorder %s119, %s120
    %p132 = scmp.eq.s32.totalorder %s26, 1
    %p133 = por %p131, %p132
    %p135 = scmp.ne.s32.totalorder %s120, %s134
    %p136 = scmp.eq.s32.totalorder %s26, 0
    %p137 = por %p135, %p136
    %s139 = sadd.s32 %s138, 1
    %p142 = scmp.eq.s32.totalorder %s20, 1
    %p143 = scmp.ne.s32.totalorder %s138, %s140
    %p144 = scmp.eq.s32.totalorder %s20, 0
    %p145 = por %p143, %p144
    %p146 = scmp.ne.s32.totalorder %s138, %s140
    %p147 = scmp.eq.s32.totalorder %s25, 1
    %p148 = por %p146, %p147
    %p149 = scmp.ne.s32.totalorder %s140, %s141
    %p150 = scmp.eq.s32.totalorder %s25, 0
    %p151 = por %p149, %p150
    %p152 = scmp.ne.s32.totalorder %s140, %s141
    %p153 = scmp.eq.s32.totalorder %s26, 1
    %p154 = por %p152, %p153
    %p156 = scmp.ne.s32.totalorder %s141, %s155
    %p157 = scmp.eq.s32.totalorder %s26, 0
    %p158 = por %p156, %p157
    %s160 = sadd.s32 %s159, 1
    %p163 = scmp.eq.s32.totalorder %s20, 1
    %p164 = scmp.ne.s32.totalorder %s159, %s161
    %p165 = scmp.eq.s32.totalorder %s20, 0
    %p166 = por %p164, %p165
    %p167 = scmp.ne.s32.totalorder %s159, %s161
    %p168 = scmp.eq.s32.totalorder %s25, 1
    %p169 = por %p167, %p168
    %p170 = scmp.ne.s32.totalorder %s161, %s162
    %p171 = scmp.eq.s32.totalorder %s25, 0
    %p172 = por %p170, %p171
    %p173 = scmp.ne.s32.totalorder %s161, %s162
    %p174 = scmp.eq.s32.totalorder %s26, 1
    %p175 = por %p173, %p174
    %p177 = scmp.ne.s32.totalorder %s162, %s176
    %p178 = scmp.eq.s32.totalorder %s26, 0
    %p179 = por %p177, %p178
    %s181 = sadd.s32 %s180, 1
    %p184 = scmp.eq.s32.totalorder %s20, 1
    %p185 = scmp.ne.s32.totalorder %s180, %s182
    %p186 = scmp.eq.s32.totalorder %s20, 0
    %p187 = por %p185, %p186
    %p188 = scmp.ne.s32.totalorder %s180, %s182
    %p189 = scmp.eq.s32.totalorder %s25, 1
    %p190 = por %p188, %p189
    %p191 = scmp.ne.s32.totalorder %s182, %s183
    %p192 = scmp.eq.s32.totalorder %s25, 0
    %p193 = por %p191, %p192
    %p194 = scmp.ne.s32.totalorder %s182, %s183
    %p195 = scmp.eq.s32.totalorder %s26, 1
    %p196 = por %p194, %p195
    %p198 = scmp.ne.s32.totalorder %s183, %s197
    %p199 = scmp.eq.s32.totalorder %s26, 0
    %p200 = por %p198, %p199
    %s202 = sadd.s32 %s201, 1
    %p205 = scmp.eq.s32.totalorder %s20, 1
    %p206 = scmp.ne.s32.totalorder %s201, %s203
    %p207 = scmp.eq.s32.totalorder %s20, 0
    %p208 = por %p206, %p207
    %p209 = scmp.ne.s32.totalorder %s201, %s203
    %p210 = scmp.eq.s32.totalorder %s25, 1
    %p211 = por %p209, %p210
    %p212 = scmp.ne.s32.totalorder %s203, %s204
    %p213 = scmp.eq.s32.totalorder %s25, 0
    %p214 = por %p212, %p213
    %p215 = scmp.ne.s32.totalorder %s203, %s204
    %p216 = scmp.eq.s32.totalorder %s26, 1
    %p217 = por %p215, %p216
    %p219 = scmp.ne.s32.totalorder %s204, %s218
    %p220 = scmp.eq.s32.totalorder %s26, 0
    %p221 = por %p219, %p220
    %s222 = ssub.s32 %s20, %s27
    %p223 = scmp.eq.s32.totalorder %s222, 0
    %s225 = sadd.s32 %s224, 1
    %s226 = scalar_select %p223, %s224, %s225
    %p229 = pneg %p223
    %p230 = scmp.eq.s32.totalorder %s20, 1
    %p231 = por %p229, %p230
    %p232 = scmp.ne.s32.totalorder %s224, %s227
    %p233 = scmp.eq.s32.totalorder %s20, 0
    %p234 = por %p232, %p233
    %p235 = scmp.ne.s32.totalorder %s224, %s227
    %p236 = scmp.eq.s32.totalorder %s25, 1
    %p237 = por %p235, %p236
    %p238 = scmp.ne.s32.totalorder %s227, %s228
    %p239 = scmp.eq.s32.totalorder %s25, 0
    %p240 = por %p238, %p239
    %p241 = scmp.ne.s32.totalorder %s227, %s228
    %p242 = scmp.eq.s32.totalorder %s26, 1
    %p243 = por %p241, %p242
    %p245 = scmp.ne.s32.totalorder %s228, %s244
    %p246 = scmp.eq.s32.totalorder %s26, 0
    %p247 = por %p245, %p246
    %s248 = ssub.s32 %s20, %s27
    %p249 = scmp.eq.s32.totalorder %s248, 0
    %s251 = sadd.s32 %s250, 1
    %s252 = scalar_select %p249, %s250, %s251
    %p255 = pneg %p249
    %p256 = scmp.eq.s32.totalorder %s20, 1
    %p257 = por %p255, %p256
    %p258 = scmp.ne.s32.totalorder %s250, %s253
    %p259 = scmp.eq.s32.totalorder %s20, 0
    %p260 = por %p258, %p259
    %p261 = scmp.ne.s32.totalorder %s250, %s253
    %p262 = scmp.eq.s32.totalorder %s25, 1
    %p263 = por %p261, %p262
    %p264 = scmp.ne.s32.totalorder %s253, %s254
    %p265 = scmp.eq.s32.totalorder %s25, 0
    %p266 = por %p264, %p265
    %p267 = scmp.ne.s32.totalorder %s253, %s254
    %p268 = scmp.eq.s32.totalorder %s26, 1
    %p269 = por %p267, %p268
    %p271 = scmp.ne.s32.totalorder %s254, %s270
    %p272 = scmp.eq.s32.totalorder %s26, 0
    %p273 = por %p271, %p272
    %s274 = ssub.s32 %s20, %s27
    %p275 = scmp.eq.s32.totalorder %s274, 0
    %s277 = sadd.s32 %s276, 1
    %s278 = scalar_select %p275, %s276, %s277
    %p281 = pneg %p275
    %p282 = scmp.eq.s32.totalorder %s20, 1
    %p283 = por %p281, %p282
    %p284 = scmp.ne.s32.totalorder %s276, %s279
    %p285 = scmp.eq.s32.totalorder %s20, 0
    %p286 = por %p284, %p285
    %p287 = scmp.ne.s32.totalorder %s276, %s279
    %p288 = scmp.eq.s32.totalorder %s25, 1
    %p289 = por %p287, %p288
    %p290 = scmp.ne.s32.totalorder %s279, %s280
    %p291 = scmp.eq.s32.totalorder %s25, 0
    %p292 = por %p290, %p291
    %p293 = scmp.ne.s32.totalorder %s279, %s280
    %p294 = scmp.eq.s32.totalorder %s26, 1
    %p295 = por %p293, %p294
    %p297 = scmp.ne.s32.totalorder %s280, %s296
    %p298 = scmp.eq.s32.totalorder %s26, 0
    %p299 = por %p297, %p298
    %s300 = ssub.s32 %s20, %s27
    %p301 = scmp.eq.s32.totalorder %s300, 0
    %s303 = sadd.s32 %s302, 1
    %s304 = scalar_select %p301, %s302, %s303
    %p307 = pneg %p301
    %p308 = scmp.eq.s32.totalorder %s20, 1
    %p309 = por %p307, %p308
    %p310 = scmp.ne.s32.totalorder %s302, %s305
    %p311 = scmp.eq.s32.totalorder %s20, 0
    %p312 = por %p310, %p311
    %p313 = scmp.ne.s32.totalorder %s302, %s305
    %p314 = scmp.eq.s32.totalorder %s25, 1
    %p315 = por %p313, %p314
    %p316 = scmp.ne.s32.totalorder %s305, %s306
    %p317 = scmp.eq.s32.totalorder %s25, 0
    %p318 = por %p316, %p317
    %p319 = scmp.ne.s32.totalorder %s305, %s306
    %p320 = scmp.eq.s32.totalorder %s26, 1
    %p321 = por %p319, %p320
    %p323 = scmp.ne.s32.totalorder %s306, %s322
    %p324 = scmp.eq.s32.totalorder %s26, 0
    %p325 = por %p323, %p324
    %s326 = ssub.s32 %s20, %s27
    %p327 = scmp.eq.s32.totalorder %s326, 0
    %s329 = sadd.s32 %s328, 1
    %s330 = scalar_select %p327, %s328, %s329
    %p333 = pneg %p327
    %p334 = scmp.eq.s32.totalorder %s20, 1
    %p335 = por %p333, %p334
    %p336 = scmp.ne.s32.totalorder %s328, %s331
    %p337 = scmp.eq.s32.totalorder %s20, 0
    %p338 = por %p336, %p337
    %p339 = scmp.ne.s32.totalorder %s328, %s331
    %p340 = scmp.eq.s32.totalorder %s25, 1
    %p341 = por %p339, %p340
    %p342 = scmp.ne.s32.totalorder %s331, %s332
    %p343 = scmp.eq.s32.totalorder %s25, 0
    %p344 = por %p342, %p343
    %p345 = scmp.ne.s32.totalorder %s331, %s332
    %p346 = scmp.eq.s32.totalorder %s26, 1
    %p347 = por %p345, %p346
    %p349 = scmp.ne.s32.totalorder %s332, %s348
    %p350 = scmp.eq.s32.totalorder %s26, 0
    %p351 = por %p349, %p350
    %p352 = scmp.le.s32.totalorder 1, %s20
    %p353 = scmp.lt.s32.totalorder %s20, 3
    %p354 = pnand %p352, %p353
    %p355 = pneg %p354
    // Predicated region
    $region9: #{_forward_core.3} parent=5 // pred_check
      _
    $region10: #{_forward_core.3} parent=5 // pred_check_branch
      %357 = sbr.rel (%p354) target = $region12
    $region11: #{_forward_core.3} parent=5 // pred_region
      %s358 = ssub.s32 %s20, 1
      // Predicated region
      $region13: #{_forward_core.3} parent=11 // pred_check
        %p359 = pneg %p67
      $region14: #{_forward_core.3} parent=11 // pred_check_branch
        %361 = sbr.rel (%p359) target = $region16
      $region15: #{_forward_core.3} parent=11 // pred_region
        _
      $region16: #{_forward_core.3} parent=11 // pred_fallthru
        _
      // Predicated region
      $region17: #{_forward_core.3} parent=11 // pred_check
        %p362 = pneg %p88
      $region18: #{_forward_core.3} parent=11 // pred_check_branch
        %364 = sbr.rel (%p362) target = $region20
      $region19: #{_forward_core.3} parent=11 // pred_region
        _
      $region20: #{_forward_core.3} parent=11 // pred_fallthru
        _
      // Predicated region
      $region21: #{_forward_core.3} parent=11 // pred_check
        %p365 = pneg %p109
      $region22: #{_forward_core.3} parent=11 // pred_check_branch
        %367 = sbr.rel (%p365) target = $region24
      $region23: #{_forward_core.3} parent=11 // pred_region
        _
      $region24: #{_forward_core.3} parent=11 // pred_fallthru
        _
      // Predicated region
      $region25: #{_forward_core.3} parent=11 // pred_check
        %p368 = pneg %p130
      $region26: #{_forward_core.3} parent=11 // pred_check_branch
        %370 = sbr.rel (%p368) target = $region28
      $region27: #{_forward_core.3} parent=11 // pred_region
        _
      $region28: #{_forward_core.3} parent=11 // pred_fallthru
        _
      // Predicated region
      $region29: #{_forward_core.3} parent=11 // pred_check
        %p371 = pneg %p151
      $region30: #{_forward_core.3} parent=11 // pred_check_branch
        %373 = sbr.rel (%p371) target = $region32
      $region31: #{_forward_core.3} parent=11 // pred_region
        _
      $region32: #{_forward_core.3} parent=11 // pred_fallthru
        _
      // Predicated region
      $region33: #{_forward_core.3} parent=11 // pred_check
        %p374 = pneg %p172
      $region34: #{_forward_core.3} parent=11 // pred_check_branch
        %376 = sbr.rel (%p374) target = $region36
      $region35: #{_forward_core.3} parent=11 // pred_region
        _
      $region36: #{_forward_core.3} parent=11 // pred_fallthru
        _
      // Predicated region
      $region37: #{_forward_core.3} parent=11 // pred_check
        %p377 = pneg %p193
      $region38: #{_forward_core.3} parent=11 // pred_check_branch
        %379 = sbr.rel (%p377) target = $region40
      $region39: #{_forward_core.3} parent=11 // pred_region
        _
      $region40: #{_forward_core.3} parent=11 // pred_fallthru
        _
      // Predicated region
      $region41: #{_forward_core.3} parent=11 // pred_check
        %p380 = pneg %p214
      $region42: #{_forward_core.3} parent=11 // pred_check_branch
        %382 = sbr.rel (%p380) target = $region44
      $region43: #{_forward_core.3} parent=11 // pred_region
        _
      $region44: #{_forward_core.3} parent=11 // pred_fallthru
        _
    $region12: #{_forward_core.3} parent=5 // pred_fallthru
      _
    %p383 = scmp.lt.s32.totalorder %s20, 2
    // Predicated region
    $region45: #{_forward_core.3} parent=5 // pred_check
      %p384 = pneg %p383
    $region46: #{_forward_core.3} parent=5 // pred_check_branch
      %386 = sbr.rel (%p384) target = $region48
    $region47: #{_forward_core.3} parent=5 // pred_region
      // Predicated region
      $region49: #{_forward_core.3} parent=47 // pred_check
        %p387 = pneg %p40
      $region50: #{_forward_core.3} parent=47 // pred_check_branch
        %389 = sbr.rel (%p387) target = $region52
      $region51: #{_forward_core.3} parent=47 // pred_region
        %p390 = scmp.lt.s32.totalorder %s20, 1
        %s391 = scalar_select %p390, %s20, 1
        %s392 = smul.addr %s391, 3
        %s393 = smul.addr %s392, 8
        %s394 = scalar_lea.vmem %s0, %s393
      $region52: #{_forward_core.3} parent=47 // pred_fallthru
        _
      // Predicated region
      $region53: #{_forward_core.3} parent=47 // pred_check
        %p395 = pneg %p234
      $region54: #{_forward_core.3} parent=47 // pred_check_branch
        %397 = sbr.rel (%p395) target = $region56
      $region55: #{_forward_core.3} parent=47 // pred_region
        %p398 = scmp.lt.s32.totalorder %s20, 1
        %s399 = scalar_select %p398, %s20, 1
        %s400 = scalar_lea.vmem %s9, %s399
      $region56: #{_forward_core.3} parent=47 // pred_fallthru
        _
      // Predicated region
      $region57: #{_forward_core.3} parent=47 // pred_check
        %p401 = pneg %p260
      $region58: #{_forward_core.3} parent=47 // pred_check_branch
        %403 = sbr.rel (%p401) target = $region60
      $region59: #{_forward_core.3} parent=47 // pred_region
        %p404 = scmp.lt.s32.totalorder %s20, 1
        %s405 = scalar_select %p404, %s20, 1
        %s406 = scalar_lea.vmem %s10, %s405
      $region60: #{_forward_core.3} parent=47 // pred_fallthru
        _
    $region48: #{_forward_core.3} parent=5 // pred_fallthru
      _
    %p407 = scmp.le.s32.totalorder 1, %s20
    %p408 = scmp.lt.s32.totalorder %s20, 3
    %p409 = pnand %p407, %p408
    %p410 = pneg %p409
    // Predicated region
    $region61: #{_forward_core.3} parent=5 // pred_check
      _
    $region62: #{_forward_core.3} parent=5 // pred_check_branch
      %412 = sbr.rel (%p409) target = $region64
    $region63: #{_forward_core.3} parent=5 // pred_region
      %s413 = ssub.s32 %s20, 1
      %p414 = scmp.lt.s32.totalorder %s25, 1
      %s415 = scalar_select %p414, %s25, 1
      %s416 = smul.addr %s415, 3
      %s417 = smul.addr %s416, 8
      %s418 = scalar_lea.vmem %s0, %s417
      %p419 = pneg %p46
      %p420 = pneg %p43
      %p421 = pneg %p67
      %p422 = pneg %p64
      %p423 = pneg %p88
      %p424 = pneg %p85
      %p425 = pneg %p109
      %p426 = pneg %p106
      %p427 = pneg %p130
      %p428 = pneg %p127
      %p429 = pneg %p151
      %p430 = pneg %p148
      %p431 = pneg %p172
      %p432 = pneg %p169
      %p433 = pneg %p193
      %p434 = pneg %p190
      %p435 = pneg %p214
      %p436 = pneg %p211
      %p437 = scmp.lt.s32.totalorder %s25, 1
      %s438 = scalar_select %p437, %s25, 1
      %s439 = scalar_lea.vmem %s9, %s438
      %p440 = pneg %p240
      %p441 = pneg %p237
      %p442 = scmp.lt.s32.totalorder %s25, 1
      %s443 = scalar_select %p442, %s25, 1
      %s444 = scalar_lea.vmem %s10, %s443
      %p445 = pneg %p266
      %p446 = pneg %p263
      %p447 = pneg %p292
      %p448 = pneg %p289
      %p449 = scmp.lt.s32.totalorder %s25, 1
      %s450 = scalar_select %p449, %s25, 1
      %s451 = smul.addr %s450, 2
      %s452 = smul.addr %s451, 8
      %s453 = scalar_lea.vmem %s11, %s452
      %p454 = pneg %p318
      %p455 = pneg %p315
      %p456 = scmp.lt.s32.totalorder %s25, 1
      %s457 = scalar_select %p456, %s25, 1
      %s458 = scalar_lea.vmem %s12, %s457
      %p459 = pneg %p344
      %p460 = pneg %p341
      %p461 = scmp.lt.s32.totalorder %s25, 1
      %s462 = scalar_select %p461, %s25, 1
      %s463 = scalar_lea.vmem %s13, %s462
      %p464 = scmp.lt.s32.totalorder %s25, 1
      %s465 = scalar_select %p464, %s25, 1
      %s466 = smul.addr %s465, 3
      %s467 = smul.addr %s466, 8
      %s468 = scalar_lea.vmem %s0, %s467
      %p469 = scmp.lt.s32.totalorder %s25, 1
      %s470 = scalar_select %p469, %s25, 1
      %s471 = scalar_lea.vmem %s9, %s470
      %p472 = scmp.lt.s32.totalorder %s25, 1
      %s473 = scalar_select %p472, %s25, 1
      %s474 = scalar_lea.vmem %s10, %s473
      %p475 = scmp.lt.s32.totalorder %s25, 1
      %s476 = scalar_select %p475, %s25, 1
      %s477 = smul.addr %s476, 2
      %s478 = smul.addr %s477, 8
      %s479 = scalar_lea.vmem %s11, %s478
      %p480 = scmp.lt.s32.totalorder %s25, 1
      %s481 = scalar_select %p480, %s25, 1
      %s482 = scalar_lea.vmem %s12, %s481
      %p483 = scmp.lt.s32.totalorder %s25, 1
      %s484 = scalar_select %p483, %s25, 1
      %s485 = scalar_lea.vmem %s13, %s484
      %v487 = vld [vmem:[%s468] sm:$0xff]
      %v488 = vld [vmem:[%s468 + $0x8] sm:$0xff]
      %v489 = vld [vmem:[%s468 + $0x10] sm:$0x7]
      %v490 = vld [vmem:[%s1] sm:$0x1]
      %v491 = vld [vmem:[%s2] sm:$0x1]
      %vm492 = vcmask 261120
      %v493 = vsel %vm492, %v487, 0.0
      %494 = vadd.xlane.f32.xlu0 %v493
      %v495 = vpop.xlane.xlu0 %494
      %v496 = vsel %vm492, %v488, 0.0
      %497 = vadd.xlane.f32.xlu0 %v496
      %v498 = vpop.xlane.xlu0 %497
      %vm499 = vcmask 256000
      %v500 = vsel %vm499, %v489, 0.0
      %501 = vadd.xlane.f32.xlu0 %v500
      %v502 = vpop.xlane.xlu0 %501
      %v503 = vrcp.pop 32.0
      %v504 = vmul.f32 32.0, %v503
      %v505 = vsub.f32 1.0, %v504
      %v506 = vmul.f32 %v503, %v505
      %v507 = vadd.f32 %v503, %v506
      %vm508 = vweird.f32 %v503
      %v509 = vsel %vm508, %v503, %v507
      %v510 = vmul.f32 %v495, %v509
      %v511 = vmul.f32 %v498, %v509
      %v512 = vmul.f32 %v502, %v509
      %v513 = vsub.f32 %v487, %v510
      %v514 = vsub.f32 %v488, %v511
      %v515 = vsub.f32 %v489, %v512
      %v516 = vmul.f32 %v513, %v513
      %v517 = vmul.f32 %v514, %v514
      %v518 = vmul.f32 %v515, %v515
      %v519 = vsel %vm492, %v516, 0.0
      %520 = vadd.xlane.f32.xlu0 %v519
      %v521 = vpop.xlane.xlu0 %520
      %v522 = vsel %vm492, %v517, 0.0
      %523 = vadd.xlane.f32.xlu0 %v522
      %v524 = vpop.xlane.xlu0 %523
      %v525 = vsel %vm499, %v518, 0.0
      %526 = vadd.xlane.f32.xlu0 %v525
      %v527 = vpop.xlane.xlu0 %526
      %v528 = vmul.f32 %v521, %v509
      %v529 = vmul.f32 %v524, %v509
      %v530 = vmul.f32 %v527, %v509
      %v531 = vadd.f32 %v528, 1e-05
      %v532 = vadd.f32 %v529, 1e-05
      %v533 = vadd.f32 %v530, 1e-05
      %v534 = vrsqrt.pop %v531
      %v535 = vmul.f32 %v534, %v531
      %v536 = vmul.f32 %v535, %v534
      %v537 = vmul.f32 0.5, %v536
      %v538 = vsub.f32 1.5, %v537
      %v539 = vmul.f32 %v534, %v538
      %vm540 = vweird.f32 %v531
      %vm541 = vweird.f32 %v534
      %vm542 = vmor %vm540, %vm541
      %v543 = vsel %vm542, %v534, %v539
      %v544 = vrsqrt.pop %v532
      %v545 = vmul.f32 %v544, %v532
      %v546 = vmul.f32 %v545, %v544
      %v547 = vmul.f32 0.5, %v546
      %v548 = vsub.f32 1.5, %v547
      %v549 = vmul.f32 %v544, %v548
      %vm550 = vweird.f32 %v532
      %vm551 = vweird.f32 %v544
      %vm552 = vmor %vm550, %vm551
      %v553 = vsel %vm552, %v544, %v549
      %v554 = vrsqrt.pop %v533
      %v555 = vmul.f32 %v554, %v533
      %v556 = vmul.f32 %v555, %v554
      %v557 = vmul.f32 0.5, %v556
      %v558 = vsub.f32 1.5, %v557
      %v559 = vmul.f32 %v554, %v558
      %vm560 = vweird.f32 %v533
      %vm561 = vweird.f32 %v554
      %vm562 = vmor %vm560, %vm561
      %v563 = vsel %vm562, %v554, %v559
      %v564 = vmul.f32 %v513, %v543
      %v565 = vmul.f32 %v514, %v553
      %v566 = vmul.f32 %v515, %v563
      %v568 = vperm.slane %v490, 0
      %v570 = vmul.f32 %v564, %v568
      %v571 = vmul.f32 %v565, %v568
      %v572 = vmul.f32 %v566, %v568
      %v574 = vperm.slane %v491, 0
      %v576 = vadd.f32 %v570, %v574
      %v577 = vadd.f32 %v571, %v574
      %v578 = vadd.f32 %v572, %v574
      %v579 = vld [vmem:[%s3] sm:$0x1]
      %v580 = vld [vmem:[%s4] sm:$0x1]
      %vm581 = vcmask 261121
      %v582 = vsel %vm581, %v576, 0.0
      %583 = vadd.xlane.f32.xlu0 %v582
      %v584 = vpop.xlane.xlu0 %583
      %v585 = vsel %vm492, %v577, 0.0
      %586 = vadd.xlane.f32.xlu0 %v585
      %v587 = vpop.xlane.xlu0 %586
      %v588 = vsel %vm499, %v578, 0.0
      %589 = vadd.xlane.f32.xlu0 %v588
      %v590 = vpop.xlane.xlu0 %589
      %v591 = vmul.f32 %v584, %v509
      %v592 = vmul.f32 %v587, %v509
      %v593 = vmul.f32 %v590, %v509
      %v594 = vsub.f32 %v576, %v591
      %v595 = vsub.f32 %v577, %v592
      %v596 = vsub.f32 %v578, %v593
      %v597 = vmul.f32 %v594, %v594
      %v598 = vmul.f32 %v595, %v595
      %v599 = vmul.f32 %v596, %v596
      %v600 = vsel %vm581, %v597, 0.0
      %601 = vadd.xlane.f32.xlu0 %v600
      %v602 = vpop.xlane.xlu0 %601
      %v603 = vsel %vm492, %v598, 0.0
      %604 = vadd.xlane.f32.xlu0 %v603
      %v605 = vpop.xlane.xlu0 %604
      %v606 = vsel %vm499, %v599, 0.0
      %607 = vadd.xlane.f32.xlu0 %v606
      %v608 = vpop.xlane.xlu0 %607
      %v609 = vmul.f32 %v602, %v509
      %v610 = vmul.f32 %v605, %v509
      %v611 = vmul.f32 %v608, %v509
      %v612 = vadd.f32 %v609, 1e-05
      %v613 = vadd.f32 %v610, 1e-05
      %v614 = vadd.f32 %v611, 1e-05
      %v615 = vrsqrt.pop %v612
      %v616 = vmul.f32 %v615, %v612
      %v617 = vmul.f32 %v616, %v615
      %v618 = vmul.f32 0.5, %v617
      %v619 = vsub.f32 1.5, %v618
      %v620 = vmul.f32 %v615, %v619
      %vm621 = vweird.f32 %v612
      %vm622 = vweird.f32 %v615
      %vm623 = vmor %vm621, %vm622
      %v624 = vsel %vm623, %v615, %v620
      %v625 = vrsqrt.pop %v613
      %v626 = vmul.f32 %v625, %v613
      %v627 = vmul.f32 %v626, %v625
      %v628 = vmul.f32 0.5, %v627
      %v629 = vsub.f32 1.5, %v628
      %v630 = vmul.f32 %v625, %v629
      %vm631 = vweird.f32 %v613
      %vm632 = vweird.f32 %v625
      %vm633 = vmor %vm631, %vm632
      %v634 = vsel %vm633, %v625, %v630
      %v635 = vrsqrt.pop %v614
      %v636 = vmul.f32 %v635, %v614
      %v637 = vmul.f32 %v636, %v635
      %v638 = vmul.f32 0.5, %v637
      %v639 = vsub.f32 1.5, %v638
      %v640 = vmul.f32 %v635, %v639
      %vm641 = vweird.f32 %v614
      %vm642 = vweird.f32 %v635
      %vm643 = vmor %vm641, %vm642
      %v644 = vsel %vm643, %v635, %v640
      %v645 = vmul.f32 %v594, %v624
      %v646 = vmul.f32 %v595, %v634
      %v647 = vmul.f32 %v596, %v644
      %v649 = vperm.slane %v579, 0
      %v651 = vmul.f32 %v645, %v649
      %v652 = vmul.f32 %v646, %v649
      %v653 = vmul.f32 %v647, %v649
      %v655 = vperm.slane %v580, 0
      %v657 = vadd.f32 %v651, %v655
      %v658 = vadd.f32 %v652, %v655
      %v659 = vadd.f32 %v653, %v655
      %v660 = vpack.c.bf16 %v658, %v657
      %v661 = vld [vmem:[%s5] sm:$0xf]
      %v662 = vld [vmem:[%s5 + $0x4] sm:$0xf]
      %v663 = vld [vmem:[%s5 + $0x8] sm:$0xf]
      %v664 = vld [vmem:[%s5 + $0xc] sm:$0xf]
      %v665 = vld [vmem:[%s6] sm:$0x1]
      %v667 = vperm.slane %v665, 0
      %v670 = vshrl.u32 %v660, 16
      %v672 = vshll.u32 %v660, 16
      %v674 = vrot.slane %v672, 1
      %v675 = vor.u32 %v670, %v674
      %v680 = vunpack.c.l.b16 %v661
      %v681 = vunpack.c.l.b16 %v662
      %v682 = vunpack.c.l.b16 %v663
      %v683 = vunpack.c.l.b16 %v664
      %v684 = vpack.c.b16 %v681, %v680
      %v685 = vpack.c.b16 %v683, %v682
      %v689 = vsel %vm492, %v675, 0
      %691 = vmatpush.bf16.msra.mxu0 0
      %692 = vmatpush.bf16.msra.mxu0 0
      %693 = vmatpush.bf16.msra.mxu0 0
      %694 = vmatpush.bf16.msra.mxu0 0
      %695 = vmatpush.bf16.msra.mxu0 0
      %696 = vmatpush.bf16.msra.mxu0 0
      %697 = vmatpush.bf16.msra.mxu0 %v685
      %698 = vmatpush.bf16.msra.mxu0 %v684
      %699 = vmatmul.bf16.gmra.mxu0 %v689
      %v700 = vpop.f32.mrf.mxu0
      %v701 = vadd.f32 %v667, %v700
      %v702 = vpop.f32.mrf.mxu0
      %703 = vdwg.mxu0
      %v704 = vpack.c.bf16 %v659, %v658
      %v705 = vld [vmem:[%s7] sm:$0xf]
      %v706 = vld [vmem:[%s7 + $0x4] sm:$0xf]
      %v707 = vld [vmem:[%s7 + $0x8] sm:$0xf]
      %v708 = vld [vmem:[%s7 + $0xc] sm:$0xf]
      %v709 = vld [vmem:[%s8] sm:$0x1]
      %v711 = vperm.slane %v709, 0
      %v714 = vshrl.u32 %v704, 16
      %v716 = vshll.u32 %v704, 16
      %v718 = vrot.slane %v716, 1
      %v719 = vor.u32 %v714, %v718
      %v724 = vunpack.c.l.b16 %v705
      %v725 = vunpack.c.l.b16 %v706
      %v726 = vunpack.c.l.b16 %v707
      %v727 = vunpack.c.l.b16 %v708
      %v728 = vpack.c.b16 %v725, %v724
      %v729 = vpack.c.b16 %v727, %v726
      %v733 = vsel %vm492, %v719, 0
      %735 = vmatpush.bf16.msra.mxu0 0
      %736 = vmatpush.bf16.msra.mxu0 0
      %737 = vmatpush.bf16.msra.mxu0 0
      %738 = vmatpush.bf16.msra.mxu0 0
      %739 = vmatpush.bf16.msra.mxu0 0
      %740 = vmatpush.bf16.msra.mxu0 0
      %741 = vmatpush.bf16.msra.mxu0 %v729
      %742 = vmatpush.bf16.msra.mxu0 %v728
      %743 = vmatmul.bf16.gmra.mxu0 %v733
      %v744 = vpop.f32.mrf.mxu0
      %v745 = vadd.f32 %v711, %v744
      %v746 = vpop.f32.mrf.mxu0
      %v747 = vadd.f32 %v711, %v746
      %748 = vdwg.mxu0
      %749 = vst [vmem:[%s479] sm:$0xff] %v745
      %750 = vst [vmem:[%s479 + $0x8] sm:$0x3] %v747
      %v751 = vld [vmem:[%s471] sm:$0x1]
      %752 = vmax.xlane.f32.xlu0 %v701
      %v753 = vpop.xlane.xlu0 %752
      %v754 = vsub.f32 %v701, %v753
      %v755 = vmul.f32 %v754, 1.442695
      %v756 = vpow.pop %v755
      %757 = vadd.xlane.f32.xlu0 %v756
      %v758 = vpop.xlane.xlu0 %757
      %v759 = vlog2.pop %v758
      %v760 = vmul.f32 %v759, 0.6931472
      %v761 = vadd.f32 %v753, %v760
      %v762 = vlaneseq
      %v763 = vshrl.u32 %v762, 7
      %v764 = vlaneseq
      %v765 = vand.u32 %v764, 127
      %vm766 = vcmp.eq.s32.totalorder %v763, %v765
      %v767 = vperm.slane %v751, 0
      %v768 = vsel %vm766, %v767, 0
      %vm769 = vcmask 64512
      %v770 = vsel %vm769, %v768, 0
      %v771 = vand.u32 %v770, 65535
      %v772 = vshrl.u32 %v770, 16
      %v773 = vcvt.s32.f32 %v771
      %v774 = vcvt.s32.f32 %v772
      %775 = vadd.xlane.f32.xlu0 %v773
      %v776 = vpop.xlane.xlu0 %775
      %777 = vadd.xlane.f32.xlu0 %v774
      %v778 = vpop.xlane.xlu0 %777
      %v779 = vcvt.f32.s32 %v776
      %v780 = vcvt.f32.s32 %v778
      %v781 = vshll.u32 %v780, 16
      %v782 = vadd.s32 %v781, %v779
      %vm783 = vcmp.eq.s32.totalorder %v765, %v782
      %v784 = vsel %vm783, %v701, 0.0
      %785 = vadd.xlane.f32.xlu0 %v784
      %v786 = vpop.xlane.xlu0 %785
      %v787 = vsub.f32 %v761, %v786
      %vm788 = vcmask 7168
      %v789 = vsel %vm788, %v787, 0.0
      %790 = vadd.xlane.f32.xlu0 %v789
      %v791 = vpop.xlane.xlu0 %790
      %v792 = vrot.slane %v791, 4
      %v793 = vadd.f32 %v791, %v792
      %v794 = vrot.slane %v793, 2
      %v795 = vadd.f32 %v793, %v794
      %v796 = vrot.slane %v795, 1
      %v797 = vadd.f32 %v795, %v796
      %s798 = vtos %v797
      %v799 = vstv %s798
      %800 = vst [vmem:[%s482] sm:$0x1] %v799
      %v801 = vld [vmem:[%s474] sm:$0x1]
      %802 = vmax.xlane.f32.xlu0 %v745
      %v803 = vpop.xlane.xlu0 %802
      %vm804 = vcmask 1041408
      %v805 = vsel %vm804, %v747, -inf
      %806 = vmax.xlane.f32.xlu0 %v805
      %v807 = vpop.xlane.xlu0 %806
      %v808 = vsub.f32 %v745, %v803
      %v809 = vsub.f32 %v747, %v807
      %v810 = vmul.f32 %v808, 1.442695
      %v811 = vpow.pop %v810
      %v812 = vmul.f32 %v809, 1.442695
      %v813 = vpow.pop %v812
      %814 = vadd.xlane.f32.xlu0 %v811
      %v815 = vpop.xlane.xlu0 %814
      %v816 = vsel %vm804, %v813, 0.0
      %817 = vadd.xlane.f32.xlu0 %v816
      %v818 = vpop.xlane.xlu0 %817
      %v819 = vlog2.pop %v815
      %v820 = vmul.f32 %v819, 0.6931472
      %v821 = vlog2.pop %v818
      %v822 = vmul.f32 %v821, 0.6931472
      %v823 = vadd.f32 %v803, %v820
      %v824 = vadd.f32 %v807, %v822
      %v825 = vadd.s32 %v763, 8
      %vm826 = vcmp.eq.s32.totalorder %v825, %v765
      %v827 = vperm.slane %v801, 0
      %v828 = vsel %vm766, %v827, 0
      %v829 = vsel %vm826, %v827, 0
      %vm830 = vcmask 80896
      %v831 = vsel %vm830, %v828, 0
      %v832 = vand.u32 %v831, 65535
      %v833 = vshrl.u32 %v831, 16
      %v834 = vcvt.s32.f32 %v832
      %v835 = vcvt.s32.f32 %v833
      %836 = vadd.xlane.f32.xlu0 %v834
      %v837 = vpop.xlane.xlu0 %836
      %838 = vadd.xlane.f32.xlu0 %v835
      %v839 = vpop.xlane.xlu0 %838
      %v840 = vcvt.f32.s32 %v837
      %v841 = vcvt.f32.s32 %v839
      %v842 = vshll.u32 %v841, 16
      %v843 = vadd.s32 %v842, %v840
      %vm844 = vcmask 74752
      %v845 = vsel %vm844, %v829, 0
      %v846 = vand.u32 %v845, 65535
      %v847 = vshrl.u32 %v845, 16
      %v848 = vcvt.s32.f32 %v846
      %v849 = vcvt.s32.f32 %v847
      %850 = vadd.xlane.f32.xlu0 %v848
      %v851 = vpop.xlane.xlu0 %850
      %852 = vadd.xlane.f32.xlu0 %v849
      %v853 = vpop.xlane.xlu0 %852
      %v854 = vcvt.f32.s32 %v851
      %v855 = vcvt.f32.s32 %v853
      %v856 = vshll.u32 %v855, 16
      %v857 = vadd.s32 %v856, %v854
      %vm858 = vcmp.eq.s32.totalorder %v765, %v843
      %vm859 = vcmp.eq.s32.totalorder %v765, %v857
      %v860 = vsel %vm858, %v745, 0.0
      %v861 = vsel %vm859, %v747, 0.0
      %862 = vadd.xlane.f32.xlu0 %v860
      %v863 = vpop.xlane.xlu0 %862
      %v864 = vsel %vm804, %v861, 0.0
      %865 = vadd.xlane.f32.xlu0 %v864
      %v866 = vpop.xlane.xlu0 %865
      %v867 = vsub.f32 %v823, %v863
      %v868 = vsub.f32 %v824, %v866
      %v869 = vsel %vm788, %v867, 0.0
      %vm870 = vcmask 1024
      %v871 = vsel %vm870, %v868, 0.0
      %v872 = vadd.f32 %v869, %v871
      %873 = vadd.xlane.f32.xlu0 %v872
      %v874 = vpop.xlane.xlu0 %873
      %v875 = vrot.slane %v874, 4
      %v876 = vadd.f32 %v874, %v875
      %v877 = vrot.slane %v876, 2
      %v878 = vadd.f32 %v876, %v877
      %v879 = vrot.slane %v878, 1
      %v880 = vadd.f32 %v878, %v879
      %s881 = vtos %v880
      %v882 = vstv %s881
      %883 = vst [vmem:[%s485] sm:$0x1] %v882
      %p884 = scmp.lt.s32.totalorder %s25, 1
      %s885 = scalar_select %p884, %s25, 1
      %s886 = smul.addr %s885, 2
      %s887 = smul.addr %s886, 8
      %s888 = scalar_lea.vmem %s11, %s887
      %p889 = scmp.lt.s32.totalorder %s25, 1
      %s890 = scalar_select %p889, %s25, 1
      %s891 = scalar_lea.vmem %s12, %s890
      %p892 = scmp.lt.s32.totalorder %s25, 1
      %s893 = scalar_select %p892, %s25, 1
      %s894 = scalar_lea.vmem %s13, %s893
      // Predicated region
      $region65: #{_forward_core.3} parent=63 // pred_check
        %p895 = pneg %p289
      $region66: #{_forward_core.3} parent=63 // pred_check_branch
        %897 = sbr.rel (%p895) target = $region68
      $region67: #{_forward_core.3} parent=63 // pred_region
        _
      $region68: #{_forward_core.3} parent=63 // pred_fallthru
        _
      // Predicated region
      $region69: #{_forward_core.3} parent=63 // pred_check
        %p898 = pneg %p315
      $region70: #{_forward_core.3} parent=63 // pred_check_branch
        %900 = sbr.rel (%p898) target = $region72
      $region71: #{_forward_core.3} parent=63 // pred_region
        _
      $region72: #{_forward_core.3} parent=63 // pred_fallthru
        _
      // Predicated region
      $region73: #{_forward_core.3} parent=63 // pred_check
        %p901 = pneg %p341
      $region74: #{_forward_core.3} parent=63 // pred_check_branch
        %903 = sbr.rel (%p901) target = $region76
      $region75: #{_forward_core.3} parent=63 // pred_region
        _
      $region76: #{_forward_core.3} parent=63 // pred_fallthru
        _
    $region64: #{_forward_core.3} parent=5 // pred_fallthru
      _
    %p904 = scmp.le.s32.totalorder 2, %s20
    // Predicated region
    $region77: #{_forward_core.3} parent=5 // pred_check
      %p905 = pneg %p904
    $region78: #{_forward_core.3} parent=5 // pred_check_branch
      %907 = sbr.rel (%p905) target = $region80
    $region79: #{_forward_core.3} parent=5 // pred_region
      %s908 = ssub.s32 %s20, 2
      // Predicated region
      $region81: #{_forward_core.3} parent=79 // pred_check
        %p909 = pneg %p295
      $region82: #{_forward_core.3} parent=79 // pred_check_branch
        %911 = sbr.rel (%p909) target = $region84
      $region83: #{_forward_core.3} parent=79 // pred_region
        %p912 = scmp.lt.s32.totalorder %s26, 1
        %s913 = scalar_select %p912, %s26, 1
        %s914 = smul.addr %s913, 2
        %s915 = smul.addr %s914, 8
        %s916 = scalar_lea.vmem %s11, %s915
      $region84: #{_forward_core.3} parent=79 // pred_fallthru
        _
      // Predicated region
      $region85: #{_forward_core.3} parent=79 // pred_check
        %p917 = pneg %p321
      $region86: #{_forward_core.3} parent=79 // pred_check_branch
        %919 = sbr.rel (%p917) target = $region88
      $region87: #{_forward_core.3} parent=79 // pred_region
        %p920 = scmp.lt.s32.totalorder %s26, 1
        %s921 = scalar_select %p920, %s26, 1
        %s922 = scalar_lea.vmem %s12, %s921
      $region88: #{_forward_core.3} parent=79 // pred_fallthru
        _
      // Predicated region
      $region89: #{_forward_core.3} parent=79 // pred_check
        %p923 = pneg %p347
      $region90: #{_forward_core.3} parent=79 // pred_check_branch
        %925 = sbr.rel (%p923) target = $region92
      $region91: #{_forward_core.3} parent=79 // pred_region
        %p926 = scmp.lt.s32.totalorder %s26, 1
        %s927 = scalar_select %p926, %s26, 1
        %s928 = scalar_lea.vmem %s13, %s927
      $region92: #{_forward_core.3} parent=79 // pred_fallthru
        _
    $region80: #{_forward_core.3} parent=5 // pred_fallthru
      _
  $region6: #{_forward_core.3} parent=0 // loop_footer
    %s24 = sadd.s32 1, %s20
  $region7: #{_forward_core.3} parent=0 // loop_footer_branch
    %19 = sbr.rel target = $region3
  $region8: #{_forward_core.3} parent=0 // loop_exit
    _

// kernel: _forward_core.2
$region0: #{_forward_core.2}
  #allocation0 [shape = 'u32[]', space=smem, size = 0x4, offset = 0x4, fixed_abs, tag = 'smem constant byte address 0x4 - core index']
  #allocation1 [shape = 'u32[72,128]{1,0:T(1,128)}', space=vmem, size = 0x9000, scoped, tag = 'internal scratch']
  %s0 = inlined_call_operand.vmem [shape: f32[2,19,32], index: 0, kind: input, shape index: {}]
  %s1 = inlined_call_operand.vmem [shape: f32[2,1,32], index: 1, kind: input, shape index: {}]
  %s2 = inlined_call_operand.vmem [shape: f32[2,1,32], index: 2, kind: input, shape index: {}]
  %s3 = inlined_call_operand.vmem [shape: bf16[2,32,96], index: 3, kind: input, shape index: {}]
  %s4 = inlined_call_operand.vmem [shape: f32[2,1,96], index: 4, kind: input, shape index: {}]
  %s5 = inlined_call_operand.vmem [shape: bf16[2,32,32], index: 5, kind: input, shape index: {}]
  %s6 = inlined_call_operand.vmem [shape: f32[2,1,32], index: 6, kind: input, shape index: {}]
  %s7 = inlined_call_operand.vmem [shape: f32[2,1,32], index: 7, kind: input, shape index: {}]
  %s8 = inlined_call_operand.vmem [shape: f32[2,1,32], index: 8, kind: input, shape index: {}]
  %s9 = inlined_call_operand.vmem [shape: bf16[2,32,128], index: 9, kind: input, shape index: {}]
  %s10 = inlined_call_operand.vmem [shape: f32[2,1,128], index: 10, kind: input, shape index: {}]
  %s11 = inlined_call_operand.vmem [shape: bf16[2,128,32], index: 11, kind: input, shape index: {}]
  %s12 = inlined_call_operand.vmem [shape: f32[2,1,32], index: 12, kind: input, shape index: {}]
  %s13 = inlined_call_operand.vmem [shape: f32[2,19,32], index: 13, kind: output, shape index: {}]
  %s14 = sld [smem:[#allocation0]]
  $region89: #{_forward_core.2} parent=0
    _
  %s16 = ssub.s32 1, %s14
  %s17 = scalar_select 0, %s16, %s14
  loop: start=0, step=1, limit=6
  $region2: #{_forward_core.2} parent=0 // loop_pre_header
    _
  $region3: #{_forward_core.2} parent=0 // loop_header
    %s19 = sphi 0, %s23
    %p20 = scmp.ge.s32.totalorder %s19, 6
    %s26 = sphi 0, %s38
    %s27 = sphi 0, %s34
    %s28 = sphi 0, %s26
    %s29 = sphi 0, %s27
    %s30 = sphi 0, %s28
    %s31 = sphi 0, %s29
    %s41 = sphi 0, %s43
    %s44 = sphi 0, %s41
    %s45 = sphi 0, %s44
    %s61 = sphi 0, %s45
    %s67 = sphi 0, %s69
    %s70 = sphi 0, %s67
    %s71 = sphi 0, %s70
    %s87 = sphi 0, %s71
    %s93 = sphi 0, %s95
    %s96 = sphi 0, %s93
    %s97 = sphi 0, %s96
    %s113 = sphi 0, %s97
    %s119 = sphi 0, %s121
    %s122 = sphi 0, %s119
    %s123 = sphi 0, %s122
    %s139 = sphi 0, %s123
    %s145 = sphi 0, %s147
    %s148 = sphi 0, %s145
    %s149 = sphi 0, %s148
    %s165 = sphi 0, %s149
    %s171 = sphi 0, %s173
    %s174 = sphi 0, %s171
    %s175 = sphi 0, %s174
    %s191 = sphi 0, %s175
    %s197 = sphi 0, %s199
    %s200 = sphi 0, %s197
    %s201 = sphi 0, %s200
    %s217 = sphi 0, %s201
    %s223 = sphi 0, %s225
    %s226 = sphi 0, %s223
    %s227 = sphi 0, %s226
    %s243 = sphi 0, %s227
    %s249 = sphi 0, %s251
    %s252 = sphi 0, %s249
    %s253 = sphi 0, %s252
    %s269 = sphi 0, %s253
    %s275 = sphi 0, %s277
    %s278 = sphi 0, %s275
    %s279 = sphi 0, %s278
    %s295 = sphi 0, %s279
    %s301 = sphi 0, %s303
    %s304 = sphi 0, %s301
    %s305 = sphi 0, %s304
    %s321 = sphi 0, %s305
    %s327 = sphi 0, %s329
    %s330 = sphi 0, %s327
    %s331 = sphi 0, %s330
    %s347 = sphi 0, %s331
    %s353 = sphi 0, %s355
    %s356 = sphi 0, %s353
    %s357 = sphi 0, %s356
    %s373 = sphi 0, %s357
    %s379 = sphi 0, %s381
    %s382 = sphi 0, %s379
    %s383 = sphi 0, %s382
    %s399 = sphi 0, %s383
  $region4: #{_forward_core.2} parent=0 // loop_header_branch
    %22 = sbr.rel (%p20) target = $region8
  $region5: #{_forward_core.2} parent=0 // loop_body
    %s24 = ssub.s32 %s19, 1
    %s25 = ssub.s32 %s19, 2
    %s32 = sadd.s32 1, %s27
    %p33 = scmp.ge.s32.totalorder %s32, 2
    %s34 = scalar_select %p33, 0, %s32
    %s35 = sadd.s32 1, %s26
    %s36 = scalar_select %p33, %s35, %s26
    %p37 = scmp.ge.s32.totalorder %s36, 2
    %s38 = scalar_select %p37, 0, %s36
    %s39 = ssub.s32 %s26, %s38
    %p40 = scmp.eq.s32.totalorder %s39, 0
    %s42 = sadd.s32 %s41, 1
    %s43 = scalar_select %p40, %s41, %s42
    %p46 = pneg %p40
    %p47 = scmp.eq.s32.totalorder %s19, 3
    %p48 = por %p46, %p47
    %p49 = scmp.ne.s32.totalorder %s41, %s44
    %p50 = scmp.eq.s32.totalorder %s19, 0
    %p51 = por %p49, %p50
    %p52 = scmp.ne.s32.totalorder %s41, %s44
    %p53 = scmp.eq.s32.totalorder %s24, 3
    %p54 = por %p52, %p53
    %p55 = scmp.ne.s32.totalorder %s44, %s45
    %p56 = scmp.eq.s32.totalorder %s24, 0
    %p57 = por %p55, %p56
    %p58 = scmp.ne.s32.totalorder %s44, %s45
    %p59 = scmp.eq.s32.totalorder %s25, 3
    %p60 = por %p58, %p59
    %p62 = scmp.ne.s32.totalorder %s45, %s61
    %p63 = scmp.eq.s32.totalorder %s25, 0
    %p64 = por %p62, %p63
    %s65 = ssub.s32 %s27, %s34
    %p66 = scmp.eq.s32.totalorder %s65, 0
    %s68 = sadd.s32 %s67, 1
    %s69 = scalar_select %p66, %s67, %s68
    %p72 = pneg %p66
    %p73 = scmp.eq.s32.totalorder %s19, 3
    %p74 = por %p72, %p73
    %p75 = scmp.ne.s32.totalorder %s67, %s70
    %p76 = scmp.eq.s32.totalorder %s19, 0
    %p77 = por %p75, %p76
    %p78 = scmp.ne.s32.totalorder %s67, %s70
    %p79 = scmp.eq.s32.totalorder %s24, 3
    %p80 = por %p78, %p79
    %p81 = scmp.ne.s32.totalorder %s70, %s71
    %p82 = scmp.eq.s32.totalorder %s24, 0
    %p83 = por %p81, %p82
    %p84 = scmp.ne.s32.totalorder %s70, %s71
    %p85 = scmp.eq.s32.totalorder %s25, 3
    %p86 = por %p84, %p85
    %p88 = scmp.ne.s32.totalorder %s71, %s87
    %p89 = scmp.eq.s32.totalorder %s25, 0
    %p90 = por %p88, %p89
    %s91 = ssub.s32 %s27, %s34
    %p92 = scmp.eq.s32.totalorder %s91, 0
    %s94 = sadd.s32 %s93, 1
    %s95 = scalar_select %p92, %s93, %s94
    %p98 = pneg %p92
    %p99 = scmp.eq.s32.totalorder %s19, 3
    %p100 = por %p98, %p99
    %p101 = scmp.ne.s32.totalorder %s93, %s96
    %p102 = scmp.eq.s32.totalorder %s19, 0
    %p103 = por %p101, %p102
    %p104 = scmp.ne.s32.totalorder %s93, %s96
    %p105 = scmp.eq.s32.totalorder %s24, 3
    %p106 = por %p104, %p105
    %p107 = scmp.ne.s32.totalorder %s96, %s97
    %p108 = scmp.eq.s32.totalorder %s24, 0
    %p109 = por %p107, %p108
    %p110 = scmp.ne.s32.totalorder %s96, %s97
    %p111 = scmp.eq.s32.totalorder %s25, 3
    %p112 = por %p110, %p111
    %p114 = scmp.ne.s32.totalorder %s97, %s113
    %p115 = scmp.eq.s32.totalorder %s25, 0
    %p116 = por %p114, %p115
    %s117 = ssub.s32 %s27, %s34
    %p118 = scmp.eq.s32.totalorder %s117, 0
    %s120 = sadd.s32 %s119, 1
    %s121 = scalar_select %p118, %s119, %s120
    %p124 = pneg %p118
    %p125 = scmp.eq.s32.totalorder %s19, 3
    %p126 = por %p124, %p125
    %p127 = scmp.ne.s32.totalorder %s119, %s122
    %p128 = scmp.eq.s32.totalorder %s19, 0
    %p129 = por %p127, %p128
    %p130 = scmp.ne.s32.totalorder %s119, %s122
    %p131 = scmp.eq.s32.totalorder %s24, 3
    %p132 = por %p130, %p131
    %p133 = scmp.ne.s32.totalorder %s122, %s123
    %p134 = scmp.eq.s32.totalorder %s24, 0
    %p135 = por %p133, %p134
    %p136 = scmp.ne.s32.totalorder %s122, %s123
    %p137 = scmp.eq.s32.totalorder %s25, 3
    %p138 = por %p136, %p137
    %p140 = scmp.ne.s32.totalorder %s123, %s139
    %p141 = scmp.eq.s32.totalorder %s25, 0
    %p142 = por %p140, %p141
    %s143 = ssub.s32 %s27, %s34
    %p144 = scmp.eq.s32.totalorder %s143, 0
    %s146 = sadd.s32 %s145, 1
    %s147 = scalar_select %p144, %s145, %s146
    %p150 = pneg %p144
    %p151 = scmp.eq.s32.totalorder %s19, 3
    %p152 = por %p150, %p151
    %p153 = scmp.ne.s32.totalorder %s145, %s148
    %p154 = scmp.eq.s32.totalorder %s19, 0
    %p155 = por %p153, %p154
    %p156 = scmp.ne.s32.totalorder %s145, %s148
    %p157 = scmp.eq.s32.totalorder %s24, 3
    %p158 = por %p156, %p157
    %p159 = scmp.ne.s32.totalorder %s148, %s149
    %p160 = scmp.eq.s32.totalorder %s24, 0
    %p161 = por %p159, %p160
    %p162 = scmp.ne.s32.totalorder %s148, %s149
    %p163 = scmp.eq.s32.totalorder %s25, 3
    %p164 = por %p162, %p163
    %p166 = scmp.ne.s32.totalorder %s149, %s165
    %p167 = scmp.eq.s32.totalorder %s25, 0
    %p168 = por %p166, %p167
    %s169 = ssub.s32 %s27, %s34
    %p170 = scmp.eq.s32.totalorder %s169, 0
    %s172 = sadd.s32 %s171, 1
    %s173 = scalar_select %p170, %s171, %s172
    %p176 = pneg %p170
    %p177 = scmp.eq.s32.totalorder %s19, 3
    %p178 = por %p176, %p177
    %p179 = scmp.ne.s32.totalorder %s171, %s174
    %p180 = scmp.eq.s32.totalorder %s19, 0
    %p181 = por %p179, %p180
    %p182 = scmp.ne.s32.totalorder %s171, %s174
    %p183 = scmp.eq.s32.totalorder %s24, 3
    %p184 = por %p182, %p183
    %p185 = scmp.ne.s32.totalorder %s174, %s175
    %p186 = scmp.eq.s32.totalorder %s24, 0
    %p187 = por %p185, %p186
    %p188 = scmp.ne.s32.totalorder %s174, %s175
    %p189 = scmp.eq.s32.totalorder %s25, 3
    %p190 = por %p188, %p189
    %p192 = scmp.ne.s32.totalorder %s175, %s191
    %p193 = scmp.eq.s32.totalorder %s25, 0
    %p194 = por %p192, %p193
    %s195 = ssub.s32 %s27, %s34
    %p196 = scmp.eq.s32.totalorder %s195, 0
    %s198 = sadd.s32 %s197, 1
    %s199 = scalar_select %p196, %s197, %s198
    %p202 = pneg %p196
    %p203 = scmp.eq.s32.totalorder %s19, 3
    %p204 = por %p202, %p203
    %p205 = scmp.ne.s32.totalorder %s197, %s200
    %p206 = scmp.eq.s32.totalorder %s19, 0
    %p207 = por %p205, %p206
    %p208 = scmp.ne.s32.totalorder %s197, %s200
    %p209 = scmp.eq.s32.totalorder %s24, 3
    %p210 = por %p208, %p209
    %p211 = scmp.ne.s32.totalorder %s200, %s201
    %p212 = scmp.eq.s32.totalorder %s24, 0
    %p213 = por %p211, %p212
    %p214 = scmp.ne.s32.totalorder %s200, %s201
    %p215 = scmp.eq.s32.totalorder %s25, 3
    %p216 = por %p214, %p215
    %p218 = scmp.ne.s32.totalorder %s201, %s217
    %p219 = scmp.eq.s32.totalorder %s25, 0
    %p220 = por %p218, %p219
    %s221 = ssub.s32 %s27, %s34
    %p222 = scmp.eq.s32.totalorder %s221, 0
    %s224 = sadd.s32 %s223, 1
    %s225 = scalar_select %p222, %s223, %s224
    %p228 = pneg %p222
    %p229 = scmp.eq.s32.totalorder %s19, 3
    %p230 = por %p228, %p229
    %p231 = scmp.ne.s32.totalorder %s223, %s226
    %p232 = scmp.eq.s32.totalorder %s19, 0
    %p233 = por %p231, %p232
    %p234 = scmp.ne.s32.totalorder %s223, %s226
    %p235 = scmp.eq.s32.totalorder %s24, 3
    %p236 = por %p234, %p235
    %p237 = scmp.ne.s32.totalorder %s226, %s227
    %p238 = scmp.eq.s32.totalorder %s24, 0
    %p239 = por %p237, %p238
    %p240 = scmp.ne.s32.totalorder %s226, %s227
    %p241 = scmp.eq.s32.totalorder %s25, 3
    %p242 = por %p240, %p241
    %p244 = scmp.ne.s32.totalorder %s227, %s243
    %p245 = scmp.eq.s32.totalorder %s25, 0
    %p246 = por %p244, %p245
    %s247 = ssub.s32 %s27, %s34
    %p248 = scmp.eq.s32.totalorder %s247, 0
    %s250 = sadd.s32 %s249, 1
    %s251 = scalar_select %p248, %s249, %s250
    %p254 = pneg %p248
    %p255 = scmp.eq.s32.totalorder %s19, 3
    %p256 = por %p254, %p255
    %p257 = scmp.ne.s32.totalorder %s249, %s252
    %p258 = scmp.eq.s32.totalorder %s19, 0
    %p259 = por %p257, %p258
    %p260 = scmp.ne.s32.totalorder %s249, %s252
    %p261 = scmp.eq.s32.totalorder %s24, 3
    %p262 = por %p260, %p261
    %p263 = scmp.ne.s32.totalorder %s252, %s253
    %p264 = scmp.eq.s32.totalorder %s24, 0
    %p265 = por %p263, %p264
    %p266 = scmp.ne.s32.totalorder %s252, %s253
    %p267 = scmp.eq.s32.totalorder %s25, 3
    %p268 = por %p266, %p267
    %p270 = scmp.ne.s32.totalorder %s253, %s269
    %p271 = scmp.eq.s32.totalorder %s25, 0
    %p272 = por %p270, %p271
    %s273 = ssub.s32 %s27, %s34
    %p274 = scmp.eq.s32.totalorder %s273, 0
    %s276 = sadd.s32 %s275, 1
    %s277 = scalar_select %p274, %s275, %s276
    %p280 = pneg %p274
    %p281 = scmp.eq.s32.totalorder %s19, 3
    %p282 = por %p280, %p281
    %p283 = scmp.ne.s32.totalorder %s275, %s278
    %p284 = scmp.eq.s32.totalorder %s19, 0
    %p285 = por %p283, %p284
    %p286 = scmp.ne.s32.totalorder %s275, %s278
    %p287 = scmp.eq.s32.totalorder %s24, 3
    %p288 = por %p286, %p287
    %p289 = scmp.ne.s32.totalorder %s278, %s279
    %p290 = scmp.eq.s32.totalorder %s24, 0
    %p291 = por %p289, %p290
    %p292 = scmp.ne.s32.totalorder %s278, %s279
    %p293 = scmp.eq.s32.totalorder %s25, 3
    %p294 = por %p292, %p293
    %p296 = scmp.ne.s32.totalorder %s279, %s295
    %p297 = scmp.eq.s32.totalorder %s25, 0
    %p298 = por %p296, %p297
    %s299 = ssub.s32 %s27, %s34
    %p300 = scmp.eq.s32.totalorder %s299, 0
    %s302 = sadd.s32 %s301, 1
    %s303 = scalar_select %p300, %s301, %s302
    %p306 = pneg %p300
    %p307 = scmp.eq.s32.totalorder %s19, 3
    %p308 = por %p306, %p307
    %p309 = scmp.ne.s32.totalorder %s301, %s304
    %p310 = scmp.eq.s32.totalorder %s19, 0
    %p311 = por %p309, %p310
    %p312 = scmp.ne.s32.totalorder %s301, %s304
    %p313 = scmp.eq.s32.totalorder %s24, 3
    %p314 = por %p312, %p313
    %p315 = scmp.ne.s32.totalorder %s304, %s305
    %p316 = scmp.eq.s32.totalorder %s24, 0
    %p317 = por %p315, %p316
    %p318 = scmp.ne.s32.totalorder %s304, %s305
    %p319 = scmp.eq.s32.totalorder %s25, 3
    %p320 = por %p318, %p319
    %p322 = scmp.ne.s32.totalorder %s305, %s321
    %p323 = scmp.eq.s32.totalorder %s25, 0
    %p324 = por %p322, %p323
    %s325 = ssub.s32 %s27, %s34
    %p326 = scmp.eq.s32.totalorder %s325, 0
    %s328 = sadd.s32 %s327, 1
    %s329 = scalar_select %p326, %s327, %s328
    %p332 = pneg %p326
    %p333 = scmp.eq.s32.totalorder %s19, 3
    %p334 = por %p332, %p333
    %p335 = scmp.ne.s32.totalorder %s327, %s330
    %p336 = scmp.eq.s32.totalorder %s19, 0
    %p337 = por %p335, %p336
    %p338 = scmp.ne.s32.totalorder %s327, %s330
    %p339 = scmp.eq.s32.totalorder %s24, 3
    %p340 = por %p338, %p339
    %p341 = scmp.ne.s32.totalorder %s330, %s331
    %p342 = scmp.eq.s32.totalorder %s24, 0
    %p343 = por %p341, %p342
    %p344 = scmp.ne.s32.totalorder %s330, %s331
    %p345 = scmp.eq.s32.totalorder %s25, 3
    %p346 = por %p344, %p345
    %p348 = scmp.ne.s32.totalorder %s331, %s347
    %p349 = scmp.eq.s32.totalorder %s25, 0
    %p350 = por %p348, %p349
    %s351 = ssub.s32 %s27, %s34
    %p352 = scmp.eq.s32.totalorder %s351, 0
    %s354 = sadd.s32 %s353, 1
    %s355 = scalar_select %p352, %s353, %s354
    %p358 = pneg %p352
    %p359 = scmp.eq.s32.totalorder %s19, 3
    %p360 = por %p358, %p359
    %p361 = scmp.ne.s32.totalorder %s353, %s356
    %p362 = scmp.eq.s32.totalorder %s19, 0
    %p363 = por %p361, %p362
    %p364 = scmp.ne.s32.totalorder %s353, %s356
    %p365 = scmp.eq.s32.totalorder %s24, 3
    %p366 = por %p364, %p365
    %p367 = scmp.ne.s32.totalorder %s356, %s357
    %p368 = scmp.eq.s32.totalorder %s24, 0
    %p369 = por %p367, %p368
    %p370 = scmp.ne.s32.totalorder %s356, %s357
    %p371 = scmp.eq.s32.totalorder %s25, 3
    %p372 = por %p370, %p371
    %p374 = scmp.ne.s32.totalorder %s357, %s373
    %p375 = scmp.eq.s32.totalorder %s25, 0
    %p376 = por %p374, %p375
    %s377 = ssub.s32 %s26, %s38
    %p378 = scmp.eq.s32.totalorder %s377, 0
    %s380 = sadd.s32 %s379, 1
    %s381 = scalar_select %p378, %s379, %s380
    %p384 = pneg %p378
    %p385 = scmp.eq.s32.totalorder %s19, 3
    %p386 = por %p384, %p385
    %p387 = scmp.ne.s32.totalorder %s379, %s382
    %p388 = scmp.eq.s32.totalorder %s19, 0
    %p389 = por %p387, %p388
    %p390 = scmp.ne.s32.totalorder %s379, %s382
    %p391 = scmp.eq.s32.totalorder %s24, 3
    %p392 = por %p390, %p391
    %p393 = scmp.ne.s32.totalorder %s382, %s383
    %p394 = scmp.eq.s32.totalorder %s24, 0
    %p395 = por %p393, %p394
    %p396 = scmp.ne.s32.totalorder %s382, %s383
    %p397 = scmp.eq.s32.totalorder %s25, 3
    %p398 = por %p396, %p397
    %p400 = scmp.ne.s32.totalorder %s383, %s399
    %p401 = scmp.eq.s32.totalorder %s25, 0
    %p402 = por %p400, %p401
    %p403 = scmp.le.s32.totalorder 1, %s19
    %p404 = scmp.lt.s32.totalorder %s19, 5
    %p405 = pnand %p403, %p404
    %p406 = pneg %p405
    // Predicated region
    $region9: #{_forward_core.2} parent=5 // pred_check
      _
    $region10: #{_forward_core.2} parent=5 // pred_check_branch
      %408 = sbr.rel (%p405) target = $region12
    $region11: #{_forward_core.2} parent=5 // pred_region
      %s409 = ssub.s32 %s19, 1
    $region12: #{_forward_core.2} parent=5 // pred_fallthru
      _
    %p410 = scmp.lt.s32.totalorder %s19, 4
    // Predicated region
    $region13: #{_forward_core.2} parent=5 // pred_check
      %p411 = pneg %p410
    $region14: #{_forward_core.2} parent=5 // pred_check_branch
      %413 = sbr.rel (%p411) target = $region16
    $region15: #{_forward_core.2} parent=5 // pred_region
      // Predicated region
      $region17: #{_forward_core.2} parent=15 // pred_check
        %p414 = pneg %p51
      $region18: #{_forward_core.2} parent=15 // pred_check_branch
        %416 = sbr.rel (%p414) target = $region20
      $region19: #{_forward_core.2} parent=15 // pred_region
        %p417 = scmp.lt.s32.totalorder %s26, 1
        %s418 = scalar_select %p417, %s26, 1
        %s419 = smul.addr %s418, 3
        %s420 = smul.addr %s419, 8
        %s421 = scalar_lea.vmem %s0, %s420
      $region20: #{_forward_core.2} parent=15 // pred_fallthru
        _
      // Predicated region
      $region21: #{_forward_core.2} parent=15 // pred_check
        %p422 = pneg %p77
      $region22: #{_forward_core.2} parent=15 // pred_check_branch
        %424 = sbr.rel (%p422) target = $region24
      $region23: #{_forward_core.2} parent=15 // pred_region
        %p425 = scmp.lt.s32.totalorder %s27, 1
        %s426 = scalar_select %p425, %s27, 1
        %s427 = scalar_lea.vmem %s1, %s426
      $region24: #{_forward_core.2} parent=15 // pred_fallthru
        _
      // Predicated region
      $region25: #{_forward_core.2} parent=15 // pred_check
        %p428 = pneg %p103
      $region26: #{_forward_core.2} parent=15 // pred_check_branch
        %430 = sbr.rel (%p428) target = $region28
      $region27: #{_forward_core.2} parent=15 // pred_region
        %p431 = scmp.lt.s32.totalorder %s27, 1
        %s432 = scalar_select %p431, %s27, 1
        %s433 = scalar_lea.vmem %s2, %s432
      $region28: #{_forward_core.2} parent=15 // pred_fallthru
        _
      // Predicated region
      $region29: #{_forward_core.2} parent=15 // pred_check
        %p434 = pneg %p129
      $region30: #{_forward_core.2} parent=15 // pred_check_branch
        %436 = sbr.rel (%p434) target = $region32
      $region31: #{_forward_core.2} parent=15 // pred_region
        %p437 = scmp.lt.s32.totalorder %s27, 1
        %s438 = scalar_select %p437, %s27, 1
        %s439 = smul.addr %s438, 4
        %s440 = smul.addr %s439, 4
        %s441 = scalar_lea.vmem %s3, %s440
      $region32: #{_forward_core.2} parent=15 // pred_fallthru
        _
      // Predicated region
      $region33: #{_forward_core.2} parent=15 // pred_check
        %p442 = pneg %p155
      $region34: #{_forward_core.2} parent=15 // pred_check_branch
        %444 = sbr.rel (%p442) target = $region36
      $region35: #{_forward_core.2} parent=15 // pred_region
        %p445 = scmp.lt.s32.totalorder %s27, 1
        %s446 = scalar_select %p445, %s27, 1
        %s447 = scalar_lea.vmem %s4, %s446
      $region36: #{_forward_core.2} parent=15 // pred_fallthru
        _
      // Predicated region
      $region37: #{_forward_core.2} parent=15 // pred_check
        %p448 = pneg %p181
      $region38: #{_forward_core.2} parent=15 // pred_check_branch
        %450 = sbr.rel (%p448) target = $region40
      $region39: #{_forward_core.2} parent=15 // pred_region
        %p451 = scmp.lt.s32.totalorder %s27, 1
        %s452 = scalar_select %p451, %s27, 1
        %s453 = smul.addr %s452, 4
        %s454 = smul.addr %s453, 4
        %s455 = scalar_lea.vmem %s5, %s454
      $region40: #{_forward_core.2} parent=15 // pred_fallthru
        _
      // Predicated region
      $region41: #{_forward_core.2} parent=15 // pred_check
        %p456 = pneg %p207
      $region42: #{_forward_core.2} parent=15 // pred_check_branch
        %458 = sbr.rel (%p456) target = $region44
      $region43: #{_forward_core.2} parent=15 // pred_region
        %p459 = scmp.lt.s32.totalorder %s27, 1
        %s460 = scalar_select %p459, %s27, 1
        %s461 = scalar_lea.vmem %s6, %s460
      $region44: #{_forward_core.2} parent=15 // pred_fallthru
        _
      // Predicated region
      $region45: #{_forward_core.2} parent=15 // pred_check
        %p462 = pneg %p233
      $region46: #{_forward_core.2} parent=15 // pred_check_branch
        %464 = sbr.rel (%p462) target = $region48
      $region47: #{_forward_core.2} parent=15 // pred_region
        %p465 = scmp.lt.s32.totalorder %s27, 1
        %s466 = scalar_select %p465, %s27, 1
        %s467 = scalar_lea.vmem %s7, %s466
      $region48: #{_forward_core.2} parent=15 // pred_fallthru
        _
      // Predicated region
      $region49: #{_forward_core.2} parent=15 // pred_check
        %p468 = pneg %p259
      $region50: #{_forward_core.2} parent=15 // pred_check_branch
        %470 = sbr.rel (%p468) target = $region52
      $region51: #{_forward_core.2} parent=15 // pred_region
        %p471 = scmp.lt.s32.totalorder %s27, 1
        %s472 = scalar_select %p471, %s27, 1
        %s473 = scalar_lea.vmem %s8, %s472
      $region52: #{_forward_core.2} parent=15 // pred_fallthru
        _
      // Predicated region
      $region53: #{_forward_core.2} parent=15 // pred_check
        %p474 = pneg %p285
      $region54: #{_forward_core.2} parent=15 // pred_check_branch
        %476 = sbr.rel (%p474) target = $region56
      $region55: #{_forward_core.2} parent=15 // pred_region
        %p477 = scmp.lt.s32.totalorder %s27, 1
        %s478 = scalar_select %p477, %s27, 1
        %s479 = smul.addr %s478, 4
        %s480 = smul.addr %s479, 4
        %s481 = scalar_lea.vmem %s9, %s480
      $region56: #{_forward_core.2} parent=15 // pred_fallthru
        _
      // Predicated region
      $region57: #{_forward_core.2} parent=15 // pred_check
        %p482 = pneg %p311
      $region58: #{_forward_core.2} parent=15 // pred_check_branch
        %484 = sbr.rel (%p482) target = $region60
      $region59: #{_forward_core.2} parent=15 // pred_region
        %p485 = scmp.lt.s32.totalorder %s27, 1
        %s486 = scalar_select %p485, %s27, 1
        %s487 = scalar_lea.vmem %s10, %s486
      $region60: #{_forward_core.2} parent=15 // pred_fallthru
        _
      // Predicated region
      $region61: #{_forward_core.2} parent=15 // pred_check
        %p488 = pneg %p337
      $region62: #{_forward_core.2} parent=15 // pred_check_branch
        %490 = sbr.rel (%p488) target = $region64
      $region63: #{_forward_core.2} parent=15 // pred_region
        %p491 = scmp.lt.s32.totalorder %s27, 1
        %s492 = scalar_select %p491, %s27, 1
        %s493 = smul.addr %s492, 16
        %s494 = smul.addr %s493, 4
        %s495 = scalar_lea.vmem %s11, %s494
      $region64: #{_forward_core.2} parent=15 // pred_fallthru
        _
      // Predicated region
      $region65: #{_forward_core.2} parent=15 // pred_check
        %p496 = pneg %p363
      $region66: #{_forward_core.2} parent=15 // pred_check_branch
        %498 = sbr.rel (%p496) target = $region68
      $region67: #{_forward_core.2} parent=15 // pred_region
        %p499 = scmp.lt.s32.totalorder %s27, 1
        %s500 = scalar_select %p499, %s27, 1
        %s501 = scalar_lea.vmem %s12, %s500
      $region68: #{_forward_core.2} parent=15 // pred_fallthru
        _
    $region16: #{_forward_core.2} parent=5 // pred_fallthru
      _
    %p502 = scmp.le.s32.totalorder 1, %s19
    %p503 = scmp.lt.s32.totalorder %s19, 5
    %p504 = pnand %p502, %p503
    %p505 = pneg %p504
    // Predicated region
    $region69: #{_forward_core.2} parent=5 // pred_check
      _
    $region70: #{_forward_core.2} parent=5 // pred_check_branch
      %507 = sbr.rel (%p504) target = $region72
    $region71: #{_forward_core.2} parent=5 // pred_region
      %s508 = ssub.s32 %s19, 1
      %p509 = scmp.lt.s32.totalorder %s28, 1
      %s510 = scalar_select %p509, %s28, 1
      %s511 = smul.addr %s510, 3
      %s512 = smul.addr %s511, 8
      %s513 = scalar_lea.vmem %s0, %s512
      %p514 = pneg %p57
      %p515 = pneg %p54
      %p516 = scmp.lt.s32.totalorder %s29, 1
      %s517 = scalar_select %p516, %s29, 1
      %s518 = scalar_lea.vmem %s1, %s517
      %p519 = pneg %p83
      %p520 = pneg %p80
      %p521 = scmp.lt.s32.totalorder %s29, 1
      %s522 = scalar_select %p521, %s29, 1
      %s523 = scalar_lea.vmem %s2, %s522
      %p524 = pneg %p109
      %p525 = pneg %p106
      %p526 = scmp.lt.s32.totalorder %s29, 1
      %s527 = scalar_select %p526, %s29, 1
      %s528 = smul.addr %s527, 4
      %s529 = smul.addr %s528, 4
      %s530 = scalar_lea.vmem %s3, %s529
      %p531 = pneg %p135
      %p532 = pneg %p132
      %p533 = scmp.lt.s32.totalorder %s29, 1
      %s534 = scalar_select %p533, %s29, 1
      %s535 = scalar_lea.vmem %s4, %s534
      %p536 = pneg %p161
      %p537 = pneg %p158
      %p538 = scmp.lt.s32.totalorder %s29, 1
      %s539 = scalar_select %p538, %s29, 1
      %s540 = smul.addr %s539, 4
      %s541 = smul.addr %s540, 4
      %s542 = scalar_lea.vmem %s5, %s541
      %p543 = pneg %p187
      %p544 = pneg %p184
      %p545 = scmp.lt.s32.totalorder %s29, 1
      %s546 = scalar_select %p545, %s29, 1
      %s547 = scalar_lea.vmem %s6, %s546
      %p548 = pneg %p213
      %p549 = pneg %p210
      %p550 = scmp.lt.s32.totalorder %s29, 1
      %s551 = scalar_select %p550, %s29, 1
      %s552 = scalar_lea.vmem %s7, %s551
      %p553 = pneg %p239
      %p554 = pneg %p236
      %p555 = scmp.lt.s32.totalorder %s29, 1
      %s556 = scalar_select %p555, %s29, 1
      %s557 = scalar_lea.vmem %s8, %s556
      %p558 = pneg %p265
      %p559 = pneg %p262
      %p560 = scmp.lt.s32.totalorder %s29, 1
      %s561 = scalar_select %p560, %s29, 1
      %s562 = smul.addr %s561, 4
      %s563 = smul.addr %s562, 4
      %s564 = scalar_lea.vmem %s9, %s563
      %p565 = pneg %p291
      %p566 = pneg %p288
      %p567 = scmp.lt.s32.totalorder %s29, 1
      %s568 = scalar_select %p567, %s29, 1
      %s569 = scalar_lea.vmem %s10, %s568
      %p570 = pneg %p317
      %p571 = pneg %p314
      %p572 = scmp.lt.s32.totalorder %s29, 1
      %s573 = scalar_select %p572, %s29, 1
      %s574 = smul.addr %s573, 16
      %s575 = smul.addr %s574, 4
      %s576 = scalar_lea.vmem %s11, %s575
      %p577 = pneg %p343
      %p578 = pneg %p340
      %p579 = scmp.lt.s32.totalorder %s29, 1
      %s580 = scalar_select %p579, %s29, 1
      %s581 = scalar_lea.vmem %s12, %s580
      %p582 = pneg %p369
      %p583 = pneg %p366
      %p584 = pneg %p395
      %p585 = pneg %p392
      %p586 = scmp.lt.s32.totalorder %s28, 1
      %s587 = scalar_select %p586, %s28, 1
      %s588 = smul.addr %s587, 3
      %s589 = smul.addr %s588, 8
      %s590 = scalar_lea.vmem %s13, %s589
      %p591 = scmp.lt.s32.totalorder %s28, 1
      %s592 = scalar_select %p591, %s28, 1
      %s593 = smul.addr %s592, 3
      %s594 = smul.addr %s593, 8
      %s595 = scalar_lea.vmem %s0, %s594
      %p596 = scmp.lt.s32.totalorder %s29, 1
      %s597 = scalar_select %p596, %s29, 1
      %s598 = scalar_lea.vmem %s1, %s597
      %p599 = scmp.lt.s32.totalorder %s29, 1
      %s600 = scalar_select %p599, %s29, 1
      %s601 = scalar_lea.vmem %s2, %s600
      %p602 = scmp.lt.s32.totalorder %s29, 1
      %s603 = scalar_select %p602, %s29, 1
      %s604 = smul.addr %s603, 4
      %s605 = smul.addr %s604, 4
      %s606 = scalar_lea.vmem %s3, %s605
      %p607 = scmp.lt.s32.totalorder %s29, 1
      %s608 = scalar_select %p607, %s29, 1
      %s609 = scalar_lea.vmem %s4, %s608
      %p610 = scmp.lt.s32.totalorder %s29, 1
      %s611 = scalar_select %p610, %s29, 1
      %s612 = smul.addr %s611, 4
      %s613 = smul.addr %s612, 4
      %s614 = scalar_lea.vmem %s5, %s613
      %p615 = scmp.lt.s32.totalorder %s29, 1
      %s616 = scalar_select %p615, %s29, 1
      %s617 = scalar_lea.vmem %s6, %s616
      %p618 = scmp.lt.s32.totalorder %s29, 1
      %s619 = scalar_select %p618, %s29, 1
      %s620 = scalar_lea.vmem %s7, %s619
      %p621 = scmp.lt.s32.totalorder %s29, 1
      %s622 = scalar_select %p621, %s29, 1
      %s623 = scalar_lea.vmem %s8, %s622
      %p624 = scmp.lt.s32.totalorder %s29, 1
      %s625 = scalar_select %p624, %s29, 1
      %s626 = smul.addr %s625, 4
      %s627 = smul.addr %s626, 4
      %s628 = scalar_lea.vmem %s9, %s627
      %p629 = scmp.lt.s32.totalorder %s29, 1
      %s630 = scalar_select %p629, %s29, 1
      %s631 = scalar_lea.vmem %s10, %s630
      %p632 = scmp.lt.s32.totalorder %s29, 1
      %s633 = scalar_select %p632, %s29, 1
      %s634 = smul.addr %s633, 16
      %s635 = smul.addr %s634, 4
      %s636 = scalar_lea.vmem %s11, %s635
      %p637 = scmp.lt.s32.totalorder %s29, 1
      %s638 = scalar_select %p637, %s29, 1
      %s639 = scalar_lea.vmem %s12, %s638
      %p640 = scmp.lt.s32.totalorder %s28, 1
      %s641 = scalar_select %p640, %s28, 1
      %s642 = smul.addr %s641, 3
      %s643 = smul.addr %s642, 8
      %s644 = scalar_lea.vmem %s13, %s643
      %p646 = scmp.eq.s32.totalorder %s29, 0
      // Predicated region
      $region73: #{_forward_core.2} parent=71 // pred_check
        %p647 = pneg %p646
      $region74: #{_forward_core.2} parent=71 // pred_check_branch
        %649 = sbr.rel (%p647) target = $region76
      $region75: #{_forward_core.2} parent=71 // pred_region
        %v650 = vld [vmem:[%s595] sm:$0xff]
        %v651 = vld [vmem:[%s595 + $0x8] sm:$0xff]
        %v652 = vld [vmem:[%s595 + $0x10] sm:$0x7]
        %vm653 = vcmask 261120
        %654 = vst.msk [vmem:[%s644] sm:$0xff] %vm653, %v650
        %655 = vst.msk [vmem:[%s644 + $0x8] sm:$0xff] %vm653, %v651
        %vm656 = vcmask 256000
        %657 = vst.msk [vmem:[%s644 + $0x10] sm:$0x7] %vm656, %v652
      $region76: #{_forward_core.2} parent=71 // pred_fallthru
        _
      %v658 = vld [vmem:[%s644] sm:$0xff]
      %v659 = vld [vmem:[%s644 + $0x8] sm:$0xff]
      %v660 = vld [vmem:[%s644 + $0x10] sm:$0x7]
      %v661 = vld [vmem:[%s598] sm:$0x1]
      %v662 = vld [vmem:[%s601] sm:$0x1]
      %vm663 = vcmask 261120
      %v664 = vsel %vm663, %v658, 0.0
      %665 = vadd.xlane.f32.xlu0 %v664
      %v666 = vpop.xlane.xlu0 %665
      %v667 = vsel %vm663, %v659, 0.0
      %668 = vadd.xlane.f32.xlu0 %v667
      %v669 = vpop.xlane.xlu0 %668
      %vm670 = vcmask 256000
      %v671 = vsel %vm670, %v660, 0.0
      %672 = vadd.xlane.f32.xlu0 %v671
      %v673 = vpop.xlane.xlu0 %672
      %v674 = vrcp.pop 32.0
      %v675 = vmul.f32 32.0, %v674
      %v676 = vsub.f32 1.0, %v675
      %v677 = vmul.f32 %v674, %v676
      %v678 = vadd.f32 %v674, %v677
      %vm679 = vweird.f32 %v674
      %v680 = vsel %vm679, %v674, %v678
      %v681 = vmul.f32 %v666, %v680
      %v682 = vmul.f32 %v669, %v680
      %v683 = vmul.f32 %v673, %v680
      %v684 = vsub.f32 %v658, %v681
      %v685 = vsub.f32 %v659, %v682
      %v686 = vsub.f32 %v660, %v683
      %v687 = vmul.f32 %v684, %v684
      %v688 = vmul.f32 %v685, %v685
      %v689 = vmul.f32 %v686, %v686
      %v690 = vsel %vm663, %v687, 0.0
      %691 = vadd.xlane.f32.xlu0 %v690
      %v692 = vpop.xlane.xlu0 %691
      %v693 = vsel %vm663, %v688, 0.0
      %694 = vadd.xlane.f32.xlu0 %v693
      %v695 = vpop.xlane.xlu0 %694
      %v696 = vsel %vm670, %v689, 0.0
      %697 = vadd.xlane.f32.xlu0 %v696
      %v698 = vpop.xlane.xlu0 %697
      %v699 = vmul.f32 %v692, %v680
      %v700 = vmul.f32 %v695, %v680
      %v701 = vmul.f32 %v698, %v680
      %v702 = vadd.f32 %v699, 1e-05
      %v703 = vadd.f32 %v700, 1e-05
      %v704 = vadd.f32 %v701, 1e-05
      %v705 = vrsqrt.pop %v702
      %v706 = vmul.f32 %v705, %v702
      %v707 = vmul.f32 %v706, %v705
      %v708 = vmul.f32 0.5, %v707
      %v709 = vsub.f32 1.5, %v708
      %v710 = vmul.f32 %v705, %v709
      %vm711 = vweird.f32 %v702
      %vm712 = vweird.f32 %v705
      %vm713 = vmor %vm711, %vm712
      %v714 = vsel %vm713, %v705, %v710
      %v715 = vrsqrt.pop %v703
      %v716 = vmul.f32 %v715, %v703
      %v717 = vmul.f32 %v716, %v715
      %v718 = vmul.f32 0.5, %v717
      %v719 = vsub.f32 1.5, %v718
      %v720 = vmul.f32 %v715, %v719
      %vm721 = vweird.f32 %v703
      %vm722 = vweird.f32 %v715
      %vm723 = vmor %vm721, %vm722
      %v724 = vsel %vm723, %v715, %v720
      %v725 = vrsqrt.pop %v704
      %v726 = vmul.f32 %v725, %v704
      %v727 = vmul.f32 %v726, %v725
      %v728 = vmul.f32 0.5, %v727
      %v729 = vsub.f32 1.5, %v728
      %v730 = vmul.f32 %v725, %v729
      %vm731 = vweird.f32 %v704
      %vm732 = vweird.f32 %v725
      %vm733 = vmor %vm731, %vm732
      %v734 = vsel %vm733, %v725, %v730
      %v735 = vmul.f32 %v684, %v714
      %v736 = vmul.f32 %v685, %v724
      %v737 = vmul.f32 %v686, %v734
      %v739 = vperm.slane %v661, 0
      %v741 = vmul.f32 %v735, %v739
      %v742 = vmul.f32 %v736, %v739
      %v743 = vmul.f32 %v737, %v739
      %v745 = vperm.slane %v662, 0
      %v747 = vadd.f32 %v741, %v745
      %v748 = vadd.f32 %v742, %v745
      %v749 = vadd.f32 %v743, %v745
      %v750 = vpack.c.bf16 %v748, %v747
      %v751 = vpack.c.bf16 %v749, %v749
      %v752 = vld [vmem:[%s606] sm:$0xf]
      %v753 = vld [vmem:[%s606 + $0x4] sm:$0xf]
      %v754 = vld [vmem:[%s606 + $0x8] sm:$0xf]
      %v755 = vld [vmem:[%s606 + $0xc] sm:$0xf]
      %v756 = vld [vmem:[%s609] sm:$0x1]
      %v758 = vperm.slane %v756, 0
      %v764 = vunpack.c.l.b16 %v752
      %v765 = vunpack.c.l.b16 %v753
      %v766 = vunpack.c.l.b16 %v754
      %v767 = vunpack.c.l.b16 %v755
      %v768 = vpack.c.b16 %v765, %v764
      %v769 = vpack.c.b16 %v767, %v766
      %v773 = vsel %vm663, %v750, 0
      %v776 = vsel %vm663, %v751, 0
      %778 = vmatpush.bf16.msra.mxu0 0
      %779 = vmatpush.bf16.msra.mxu0 0
      %780 = vmatpush.bf16.msra.mxu0 0
      %781 = vmatpush.bf16.msra.mxu0 0
      %782 = vmatpush.bf16.msra.mxu0 0
      %783 = vmatpush.bf16.msra.mxu0 0
      %784 = vmatpush.bf16.msra.mxu0 %v769
      %785 = vmatpush.bf16.msra.mxu0 %v768
      %786 = vmatmul.bf16.gmra.mxu0 %v773
      %v787 = vpop.f32.mrf.mxu0
      %v788 = vadd.f32 %v758, %v787
      %v789 = vpop.f32.mrf.mxu0
      %v790 = vadd.f32 %v758, %v789
      %791 = vmatmul.bf16.gmra.mxu0 %v776
      %v792 = vpop.f32.mrf.mxu0
      %v793 = vadd.f32 %v758, %v792
      %v794 = vpop.f32.mrf.mxu0
      %795 = vdwg.mxu0
      %796 = vxpose.xlu0.b32.start [1/16] %v788, 128
      %797 = vxpose.xlu0.b32.cont [2/16] %v790, 128
      %798 = vxpose.xlu0.b32.cont [3/16] %v793, 128
      %799 = vxpose.xlu0.b32.cont [4/16] 0.0, 128
      %800 = vxpose.xlu0.b32.cont [5/16] 0.0, 128
      %801 = vxpose.xlu0.b32.cont [6/16] 0.0, 128
      %802 = vxpose.xlu0.b32.cont [7/16] 0.0, 128
      %803 = vxpose.xlu0.b32.cont [8/16] 0.0, 128
      %804 = vxpose.xlu0.b32.cont [9/16] 0.0, 128
      %805 = vxpose.xlu0.b32.cont [10/16] 0.0, 128
      %806 = vxpose.xlu0.b32.cont [11/16] 0.0, 128
      %807 = vxpose.xlu0.b32.cont [12/16] 0.0, 128
      %808 = vxpose.xlu0.b32.cont [13/16] 0.0, 128
      %809 = vxpose.xlu0.b32.cont [14/16] 0.0, 128
      %810 = vxpose.xlu0.b32.cont [15/16] 0.0, 128
      %811 = vxpose.xlu0.b32.end [16/16] 0.0, 128
      %v812 = vpop.trf.xlu0
      %v813 = vpop.trf.xlu0
      %v814 = vpop.trf.xlu0
      %v815 = vpop.trf.xlu0
      %v816 = vpop.trf.xlu0
      %v817 = vpop.trf.xlu0
      %v818 = vpop.trf.xlu0
      %v819 = vpop.trf.xlu0
      %v820 = vpop.trf.xlu0
      %v821 = vpop.trf.xlu0
      %v822 = vpop.trf.xlu0
      %v823 = vpop.trf.xlu0
      %v824 = vpop.trf.xlu0
      %v825 = vpop.trf.xlu0
      %v826 = vpop.trf.xlu0
      %v827 = vpop.trf.xlu0
      %828 = vxpose.xlu0.b32.start [1/16] %v812, 128
      %829 = vxpose.xlu0.b32.cont [2/16] %v813, 128
      %830 = vxpose.xlu0.b32.cont [3/16] 0.0, 128
      %831 = vxpose.xlu0.b32.cont [4/16] 0.0, 128
      %832 = vxpose.xlu0.b32.cont [5/16] 0.0, 128
      %833 = vxpose.xlu0.b32.cont [6/16] 0.0, 128
      %834 = vxpose.xlu0.b32.cont [7/16] 0.0, 128
      %835 = vxpose.xlu0.b32.cont [8/16] 0.0, 128
      %836 = vxpose.xlu0.b32.cont [9/16] 0.0, 128
      %837 = vxpose.xlu0.b32.cont [10/16] 0.0, 128
      %838 = vxpose.xlu0.b32.cont [11/16] 0.0, 128
      %839 = vxpose.xlu0.b32.cont [12/16] 0.0, 128
      %840 = vxpose.xlu0.b32.cont [13/16] 0.0, 128
      %841 = vxpose.xlu0.b32.cont [14/16] 0.0, 128
      %842 = vxpose.xlu0.b32.cont [15/16] 0.0, 128
      %843 = vxpose.xlu0.b32.end [16/16] 0.0, 128
      %v844 = vpop.trf.xlu0
      %v845 = vpop.trf.xlu0
      %v846 = vpop.trf.xlu0
      %v847 = vpop.trf.xlu0
      %v848 = vpop.trf.xlu0
      %v849 = vpop.trf.xlu0
      %v850 = vpop.trf.xlu0
      %v851 = vpop.trf.xlu0
      %v852 = vpop.trf.xlu0
      %v853 = vpop.trf.xlu0
      %v854 = vpop.trf.xlu0
      %v855 = vpop.trf.xlu0
      %v856 = vpop.trf.xlu0
      %v857 = vpop.trf.xlu0
      %v858 = vpop.trf.xlu0
      %v859 = vpop.trf.xlu0
      %860 = vxpose.xlu0.b32.start [1/16] %v814, 128
      %861 = vxpose.xlu0.b32.cont [2/16] %v815, 128
      %862 = vxpose.xlu0.b32.cont [3/16] 0.0, 128
      %863 = vxpose.xlu0.b32.cont [4/16] 0.0, 128
      %864 = vxpose.xlu0.b32.cont [5/16] 0.0, 128
      %865 = vxpose.xlu0.b32.cont [6/16] 0.0, 128
      %866 = vxpose.xlu0.b32.cont [7/16] 0.0, 128
      %867 = vxpose.xlu0.b32.cont [8/16] 0.0, 128
      %868 = vxpose.xlu0.b32.cont [9/16] 0.0, 128
      %869 = vxpose.xlu0.b32.cont [10/16] 0.0, 128
      %870 = vxpose.xlu0.b32.cont [11/16] 0.0, 128
      %871 = vxpose.xlu0.b32.cont [12/16] 0.0, 128
      %872 = vxpose.xlu0.b32.cont [13/16] 0.0, 128
      %873 = vxpose.xlu0.b32.cont [14/16] 0.0, 128
      %874 = vxpose.xlu0.b32.cont [15/16] 0.0, 128
      %875 = vxpose.xlu0.b32.end [16/16] 0.0, 128
      %v876 = vpop.trf.xlu0
      %v877 = vpop.trf.xlu0
      %v878 = vpop.trf.xlu0
      %v879 = vpop.trf.xlu0
      %v880 = vpop.trf.xlu0
      %v881 = vpop.trf.xlu0
      %v882 = vpop.trf.xlu0
      %v883 = vpop.trf.xlu0
      %v884 = vpop.trf.xlu0
      %v885 = vpop.trf.xlu0
      %v886 = vpop.trf.xlu0
      %v887 = vpop.trf.xlu0
      %v888 = vpop.trf.xlu0
      %v889 = vpop.trf.xlu0
      %v890 = vpop.trf.xlu0
      %v891 = vpop.trf.xlu0
      %v892 = vlaneseq
      %v893 = vshrl.u32 %v892, 7
      %v894 = vadd.s32 %v893, 8
      %v895 = vadd.s32 %v893, 16
      %v896 = vlaneseq
      %v897 = vand.u32 %v896, 127
      %vm898 = vcmp.le.s32.totalorder %v897, %v893
      %vm899 = vcmp.le.s32.totalorder %v897, %v894
      %vm900 = vcmp.le.s32.totalorder %v897, %v895
      %v901 = vpack.c.bf16 %v844, %v844
      %v902 = vpack.c.bf16 %v845, %v845
      %v903 = vpack.c.bf16 %v846, %v846
      %v904 = vpack.c.bf16 %v876, %v876
      %v905 = vpack.c.bf16 %v877, %v877
      %v906 = vpack.c.bf16 %v878, %v878
      %v907 = vpack.c.bf16 %v816, %v816
      %v908 = vpack.c.bf16 %v817, %v817
      %v909 = vpack.c.bf16 %v818, %v818
      %v910 = vpack.c.bf16 %v819, %v819
      %v914 = vunpack.c.l.b16 %v901
      %v915 = vunpack.c.l.b16 %v902
      %v916 = vunpack.c.l.b16 %v903
      %v917 = vpack.c.b16 %v915, %v914
      %v918 = vpack.c.b16 %v916, %v916
      %v921 = vunpack.c.l.b16 %v907
      %v922 = vunpack.c.l.b16 %v908
      %v923 = vpack.c.b16 %v922, %v921
      %vm925 = vcmask 130048
      %v927 = vsel %vm925, %v917, 0
      %v930 = vsel %vm925, %v918, 0
      %932 = vmatpush.bf16.msra.mxu0 0
      %933 = vmatpush.bf16.msra.mxu0 0
      %934 = vmatpush.bf16.msra.mxu0 0
      %935 = vmatpush.bf16.msra.mxu0 0
      %936 = vmatpush.bf16.msra.mxu0 0
      %937 = vmatpush.bf16.msra.mxu0 0
      %938 = vmatpush.bf16.msra.mxu0 0
      %939 = vmatpush.bf16.msra.mxu0 %v923
      %940 = vmatmul.bf16.gmra.mxu0 %v927
      %v941 = vpop.f32.mrf.mxu0
      %v942 = vadd.f32 0.0, %v941
      %v943 = vpop.f32.mrf.mxu0
      %v944 = vadd.f32 0.0, %v943
      %945 = vmatmul.bf16.gmra.mxu0 %v930
      %v946 = vpop.f32.mrf.mxu0
      %v947 = vadd.f32 0.0, %v946
      %v948 = vpop.f32.mrf.mxu0
      %949 = vdwg.mxu0
      %v953 = vunpack.c.l.b16 %v904
      %v954 = vunpack.c.l.b16 %v905
      %v955 = vunpack.c.l.b16 %v906
      %v956 = vpack.c.b16 %v954, %v953
      %v957 = vpack.c.b16 %v955, %v955
      %v960 = vunpack.c.l.b16 %v909
      %v961 = vunpack.c.l.b16 %v910
      %v962 = vpack.c.b16 %v961, %v960
      %v965 = vsel %vm925, %v956, 0
      %v968 = vsel %vm925, %v957, 0
      %970 = vmatpush.bf16.msra.mxu0 0
      %971 = vmatpush.bf16.msra.mxu0 0
      %972 = vmatpush.bf16.msra.mxu0 0
      %973 = vmatpush.bf16.msra.mxu0 0
      %974 = vmatpush.bf16.msra.mxu0 0
      %975 = vmatpush.bf16.msra.mxu0 0
      %976 = vmatpush.bf16.msra.mxu0 0
      %977 = vmatpush.bf16.msra.mxu0 %v962
      %978 = vmatmul.bf16.gmra.mxu0 %v965
      %v979 = vpop.f32.mrf.mxu0
      %v980 = vadd.f32 0.0, %v979
      %v981 = vpop.f32.mrf.mxu0
      %v982 = vadd.f32 0.0, %v981
      %983 = vmatmul.bf16.gmra.mxu0 %v968
      %v984 = vpop.f32.mrf.mxu0
      %v985 = vadd.f32 0.0, %v984
      %v986 = vpop.f32.mrf.mxu0
      %987 = vdwg.mxu0
      %v988 = vmul.f32 %v942, 0.25
      %v989 = vmul.f32 %v944, 0.25
      %v990 = vmul.f32 %v947, 0.25
      %v991 = vmul.f32 %v980, 0.25
      %v992 = vmul.f32 %v982, 0.25
      %v993 = vmul.f32 %v985, 0.25
      %v994 = vsel %vm898, 1, 0
      %v995 = vsel %vm899, 1, 0
      %v996 = vsel %vm900, 1, 0
      %vm997 = vcmp.eq.s32.totalorder %v994, 1
      %vm998 = vcmp.eq.s32.totalorder %v995, 1
      %vm999 = vcmp.eq.s32.totalorder %v996, 1
      %v1000 = vsel %vm997, %v988, -1e+30
      %v1001 = vsel %vm998, %v989, -1e+30
      %v1002 = vsel %vm999, %v990, -1e+30
      %v1003 = vsel %vm997, %v991, -1e+30
      %v1004 = vsel %vm998, %v992, -1e+30
      %v1005 = vsel %vm999, %v993, -1e+30
      %vm1006 = vcmask 154624
      %v1007 = vsel %vm1006, %v1000, -inf
      %1008 = vmax.xlane.f32.xlu0 %v1007
      %v1009 = vpop.xlane.xlu0 %1008
      %v1010 = vsel %vm1006, %v1001, -inf
      %1011 = vmax.xlane.f32.xlu0 %v1010
      %v1012 = vpop.xlane.xlu0 %1011
      %vm1013 = vcmask 149504
      %v1014 = vsel %vm1013, %v1002, -inf
      %1015 = vmax.xlane.f32.xlu0 %v1014
      %v1016 = vpop.xlane.xlu0 %1015
      %v1017 = vsel %vm1006, %v1003, -inf
      %1018 = vmax.xlane.f32.xlu0 %v1017
      %v1019 = vpop.xlane.xlu0 %1018
      %v1020 = vsel %vm1006, %v1004, -inf
      %1021 = vmax.xlane.f32.xlu0 %v1020
      %v1022 = vpop.xlane.xlu0 %1021
      %v1023 = vsel %vm1013, %v1005, -inf
      %1024 = vmax.xlane.f32.xlu0 %v1023
      %v1025 = vpop.xlane.xlu0 %1024
      %v1026 = vsub.f32 %v1000, %v1009
      %v1027 = vsub.f32 %v1001, %v1012
      %v1028 = vsub.f32 %v1002, %v1016
      %v1029 = vsub.f32 %v1003, %v1019
      %v1030 = vsub.f32 %v1004, %v1022
      %v1031 = vsub.f32 %v1005, %v1025
      %v1032 = vmul.f32 %v1026, 1.442695
      %v1033 = vpow.pop %v1032
      %v1034 = vmul.f32 %v1027, 1.442695
      %v1035 = vpow.pop %v1034
      %v1036 = vmul.f32 %v1028, 1.442695
      %v1037 = vpow.pop %v1036
      %v1038 = vmul.f32 %v1029, 1.442695
      %v1039 = vpow.pop %v1038
      %v1040 = vmul.f32 %v1030, 1.442695
      %v1041 = vpow.pop %v1040
      %v1042 = vmul.f32 %v1031, 1.442695
      %v1043 = vpow.pop %v1042
      %v1044 = vsel %vm1006, %v1033, 0.0
      %1045 = vadd.xlane.f32.xlu0 %v1044
      %v1046 = vpop.xlane.xlu0 %1045
      %v1047 = vsel %vm1006, %v1035, 0.0
      %1048 = vadd.xlane.f32.xlu0 %v1047
      %v1049 = vpop.xlane.xlu0 %1048
      %v1050 = vsel %vm1013, %v1037, 0.0
      %1051 = vadd.xlane.f32.xlu0 %v1050
      %v1052 = vpop.xlane.xlu0 %1051
      %v1053 = vsel %vm1006, %v1039, 0.0
      %1054 = vadd.xlane.f32.xlu0 %v1053
      %v1055 = vpop.xlane.xlu0 %1054
      %v1056 = vsel %vm1006, %v1041, 0.0
      %1057 = vadd.xlane.f32.xlu0 %v1056
      %v1058 = vpop.xlane.xlu0 %1057
      %v1059 = vsel %vm1013, %v1043, 0.0
      %1060 = vadd.xlane.f32.xlu0 %v1059
      %v1061 = vpop.xlane.xlu0 %1060
      %v1062 = vrcp.pop %v1046
      %v1063 = vrcp.pop %v1049
      %v1064 = vrcp.pop %v1052
      %v1065 = vrcp.pop %v1055
      %v1066 = vrcp.pop %v1058
      %v1067 = vrcp.pop %v1061
      %v1068 = vmul.f32 %v1033, %v1062
      %v1069 = vmul.f32 %v1035, %v1063
      %v1070 = vmul.f32 %v1037, %v1064
      %v1071 = vmul.f32 %v1039, %v1065
      %v1072 = vmul.f32 %v1041, %v1066
      %v1073 = vmul.f32 %v1043, %v1067
      %v1074 = vpack.c.bf16 %v820, %v820
      %v1075 = vpack.c.bf16 %v821, %v821
      %v1076 = vpack.c.bf16 %v822, %v822
      %v1077 = vpack.c.bf16 %v823, %v823
      %v1078 = vpack.c.bf16 %v1068, %v1068
      %v1079 = vpack.c.bf16 %v1069, %v1069
      %v1080 = vpack.c.bf16 %v1070, %v1070
      %v1081 = vpack.c.bf16 %v1071, %v1071
      %v1082 = vpack.c.bf16 %v1072, %v1072
      %v1083 = vpack.c.bf16 %v1073, %v1073
      %v1086 = vunpack.c.l.b16 %v1074
      %v1087 = vunpack.c.l.b16 %v1075
      %v1088 = vpack.c.b16 %v1087, %v1086
      %v1092 = vunpack.c.l.b16 %v1078
      %v1093 = vunpack.c.l.b16 %v1079
      %v1094 = vunpack.c.l.b16 %v1080
      %v1095 = vpack.c.b16 %v1093, %v1092
      %v1096 = vpack.c.b16 %v1094, %v1094
      %v1098 = vsel %vm1006, %v1088, 0
      %v1101 = vsel %vm1006, %v1095, 0
      %v1104 = vsel %vm1006, %v1096, 0
      %1106 = vmatpush.bf16.xpose.msra.mxu0 0
      %1107 = vmatpush.bf16.xpose.msra.mxu0 0
      %1108 = vmatpush.bf16.xpose.msra.mxu0 0
      %1109 = vmatpush.bf16.xpose.msra.mxu0 0
      %1110 = vmatpush.bf16.xpose.msra.mxu0 0
      %1111 = vmatpush.bf16.xpose.msra.mxu0 0
      %1112 = vmatpush.bf16.xpose.msra.mxu0 %v1104
      %1113 = vmatpush.bf16.xpose.msra.mxu0 %v1101
      %1114 = vmatmul.bf16.gmra.mxu0 %v1098
      %v1115 = vpop.f32.mrf.mxu0
      %v1116 = vadd.f32 0.0, %v1115
      %v1117 = vpop.f32.mrf.mxu0
      %v1118 = vadd.f32 0.0, %v1117
      %1119 = vdwg.mxu0
      %v1122 = vunpack.c.l.b16 %v1076
      %v1123 = vunpack.c.l.b16 %v1077
      %v1124 = vpack.c.b16 %v1123, %v1122
      %v1128 = vunpack.c.l.b16 %v1081
      %v1129 = vunpack.c.l.b16 %v1082
      %v1130 = vunpack.c.l.b16 %v1083
      %v1131 = vpack.c.b16 %v1129, %v1128
      %v1132 = vpack.c.b16 %v1130, %v1130
      %v1134 = vsel %vm1006, %v1124, 0
      %v1137 = vsel %vm1006, %v1131, 0
      %v1140 = vsel %vm1006, %v1132, 0
      %1142 = vmatpush.bf16.xpose.msra.mxu0 0
      %1143 = vmatpush.bf16.xpose.msra.mxu0 0
      %1144 = vmatpush.bf16.xpose.msra.mxu0 0
      %1145 = vmatpush.bf16.xpose.msra.mxu0 0
      %1146 = vmatpush.bf16.xpose.msra.mxu0 0
      %1147 = vmatpush.bf16.xpose.msra.mxu0 0
      %1148 = vmatpush.bf16.xpose.msra.mxu0 %v1140
      %1149 = vmatpush.bf16.xpose.msra.mxu0 %v1137
      %1150 = vmatmul.bf16.gmra.mxu0 %v1134
      %v1151 = vpop.f32.mrf.mxu0
      %v1152 = vadd.f32 0.0, %v1151
      %v1153 = vpop.f32.mrf.mxu0
      %v1154 = vadd.f32 0.0, %v1153
      %1155 = vdwg.mxu0
      %1156 = vxpose.xlu0.b32.start [1/16] %v1116, 128
      %1157 = vxpose.xlu0.b32.cont [2/16] %v1118, 128
      %1158 = vxpose.xlu0.b32.cont [3/16] %v1152, 128
      %1159 = vxpose.xlu0.b32.cont [4/16] %v1154, 128
      %1160 = vxpose.xlu0.b32.cont [5/16] 0.0, 128
      %1161 = vxpose.xlu0.b32.cont [6/16] 0.0, 128
      %1162 = vxpose.xlu0.b32.cont [7/16] 0.0, 128
      %1163 = vxpose.xlu0.b32.cont [8/16] 0.0, 128
      %1164 = vxpose.xlu0.b32.cont [9/16] 0.0, 128
      %1165 = vxpose.xlu0.b32.cont [10/16] 0.0, 128
      %1166 = vxpose.xlu0.b32.cont [11/16] 0.0, 128
      %1167 = vxpose.xlu0.b32.cont [12/16] 0.0, 128
      %1168 = vxpose.xlu0.b32.cont [13/16] 0.0, 128
      %1169 = vxpose.xlu0.b32.cont [14/16] 0.0, 128
      %1170 = vxpose.xlu0.b32.cont [15/16] 0.0, 128
      %1171 = vxpose.xlu0.b32.end [16/16] 0.0, 128
      %v1172 = vpop.trf.xlu0
      %v1173 = vpop.trf.xlu0
      %v1174 = vpop.trf.xlu0
      %v1175 = vpop.trf.xlu0
      %v1176 = vpop.trf.xlu0
      %v1177 = vpop.trf.xlu0
      %v1178 = vpop.trf.xlu0
      %v1179 = vpop.trf.xlu0
      %v1180 = vpop.trf.xlu0
      %v1181 = vpop.trf.xlu0
      %v1182 = vpop.trf.xlu0
      %v1183 = vpop.trf.xlu0
      %v1184 = vpop.trf.xlu0
      %v1185 = vpop.trf.xlu0
      %v1186 = vpop.trf.xlu0
      %v1187 = vpop.trf.xlu0
      %v1188 = vpack.c.bf16 %v1173, %v1172
      %v1189 = vpack.c.bf16 %v1174, %v1174
      %v1190 = vld [vmem:[%s614] sm:$0xf]
      %v1191 = vld [vmem:[%s614 + $0x4] sm:$0xf]
      %v1192 = vld [vmem:[%s614 + $0x8] sm:$0xf]
      %v1193 = vld [vmem:[%s614 + $0xc] sm:$0xf]
      %v1194 = vld [vmem:[%s617] sm:$0x1]
      %v1196 = vperm.slane %v1194, 0
      %v1202 = vunpack.c.l.b16 %v1190
      %v1203 = vunpack.c.l.b16 %v1191
      %v1204 = vunpack.c.l.b16 %v1192
      %v1205 = vunpack.c.l.b16 %v1193
      %v1206 = vpack.c.b16 %v1203, %v1202
      %v1207 = vpack.c.b16 %v1205, %v1204
      %v1211 = vsel %vm663, %v1188, 0
      %v1214 = vsel %vm663, %v1189, 0
      %1216 = vmatpush.bf16.msra.mxu0 0
      %1217 = vmatpush.bf16.msra.mxu0 0
      %1218 = vmatpush.bf16.msra.mxu0 0
      %1219 = vmatpush.bf16.msra.mxu0 0
      %1220 = vmatpush.bf16.msra.mxu0 0
      %1221 = vmatpush.bf16.msra.mxu0 0
      %1222 = vmatpush.bf16.msra.mxu0 %v1207
      %1223 = vmatpush.bf16.msra.mxu0 %v1206
      %1224 = vmatmul.bf16.gmra.mxu0 %v1211
      %v1225 = vpop.f32.mrf.mxu0
      %v1226 = vadd.f32 %v1196, %v1225
      %v1227 = vpop.f32.mrf.mxu0
      %v1228 = vadd.f32 %v1196, %v1227
      %1229 = vmatmul.bf16.gmra.mxu0 %v1214
      %v1230 = vpop.f32.mrf.mxu0
      %v1231 = vadd.f32 %v1196, %v1230
      %v1232 = vpop.f32.mrf.mxu0
      %1233 = vdwg.mxu0
      %v1234 = vadd.f32 %v658, %v1226
      %v1235 = vadd.f32 %v659, %v1228
      %v1236 = vadd.f32 %v660, %v1231
      %v1237 = vld [vmem:[%s620] sm:$0x1]
      %v1238 = vld [vmem:[%s623] sm:$0x1]
      %v1239 = vsel %vm663, %v1234, 0.0
      %1240 = vadd.xlane.f32.xlu0 %v1239
      %v1241 = vpop.xlane.xlu0 %1240
      %v1242 = vsel %vm663, %v1235, 0.0
      %1243 = vadd.xlane.f32.xlu0 %v1242
      %v1244 = vpop.xlane.xlu0 %1243
      %v1245 = vsel %vm670, %v1236, 0.0
      %1246 = vadd.xlane.f32.xlu0 %v1245
      %v1247 = vpop.xlane.xlu0 %1246
      %v1248 = vmul.f32 %v1241, %v680
      %v1249 = vmul.f32 %v1244, %v680
      %v1250 = vmul.f32 %v1247, %v680
      %v1251 = vsub.f32 %v1234, %v1248
      %v1252 = vsub.f32 %v1235, %v1249
      %v1253 = vsub.f32 %v1236, %v1250
      %v1254 = vmul.f32 %v1251, %v1251
      %v1255 = vmul.f32 %v1252, %v1252
      %v1256 = vmul.f32 %v1253, %v1253
      %v1257 = vsel %vm663, %v1254, 0.0
      %1258 = vadd.xlane.f32.xlu0 %v1257
      %v1259 = vpop.xlane.xlu0 %1258
      %v1260 = vsel %vm663, %v1255, 0.0
      %1261 = vadd.xlane.f32.xlu0 %v1260
      %v1262 = vpop.xlane.xlu0 %1261
      %v1263 = vsel %vm670, %v1256, 0.0
      %1264 = vadd.xlane.f32.xlu0 %v1263
      %v1265 = vpop.xlane.xlu0 %1264
      %v1266 = vmul.f32 %v1259, %v680
      %v1267 = vmul.f32 %v1262, %v680
      %v1268 = vmul.f32 %v1265, %v680
      %v1269 = vadd.f32 %v1266, 1e-05
      %v1270 = vadd.f32 %v1267, 1e-05
      %v1271 = vadd.f32 %v1268, 1e-05
      %v1272 = vrsqrt.pop %v1269
      %v1273 = vmul.f32 %v1272, %v1269
      %v1274 = vmul.f32 %v1273, %v1272
      %v1275 = vmul.f32 0.5, %v1274
      %v1276 = vsub.f32 1.5, %v1275
      %v1277 = vmul.f32 %v1272, %v1276
      %vm1278 = vweird.f32 %v1269
      %vm1279 = vweird.f32 %v1272
      %vm1280 = vmor %vm1278, %vm1279
      %v1281 = vsel %vm1280, %v1272, %v1277
      %v1282 = vrsqrt.pop %v1270
      %v1283 = vmul.f32 %v1282, %v1270
      %v1284 = vmul.f32 %v1283, %v1282
      %v1285 = vmul.f32 0.5, %v1284
      %v1286 = vsub.f32 1.5, %v1285
      %v1287 = vmul.f32 %v1282, %v1286
      %vm1288 = vweird.f32 %v1270
      %vm1289 = vweird.f32 %v1282
      %vm1290 = vmor %vm1288, %vm1289
      %v1291 = vsel %vm1290, %v1282, %v1287
      %v1292 = vrsqrt.pop %v1271
      %v1293 = vmul.f32 %v1292, %v1271
      %v1294 = vmul.f32 %v1293, %v1292
      %v1295 = vmul.f32 0.5, %v1294
      %v1296 = vsub.f32 1.5, %v1295
      %v1297 = vmul.f32 %v1292, %v1296
      %vm1298 = vweird.f32 %v1271
      %vm1299 = vweird.f32 %v1292
      %vm1300 = vmor %vm1298, %vm1299
      %v1301 = vsel %vm1300, %v1292, %v1297
      %v1302 = vmul.f32 %v1251, %v1281
      %v1303 = vmul.f32 %v1252, %v1291
      %v1304 = vmul.f32 %v1253, %v1301
      %v1306 = vperm.slane %v1237, 0
      %v1308 = vmul.f32 %v1302, %v1306
      %v1309 = vmul.f32 %v1303, %v1306
      %v1310 = vmul.f32 %v1304, %v1306
      %v1312 = vperm.slane %v1238, 0
      %v1314 = vadd.f32 %v1308, %v1312
      %v1315 = vadd.f32 %v1309, %v1312
      %v1316 = vadd.f32 %v1310, %v1312
      %v1317 = vpack.c.bf16 %v1315, %v1314
      %v1318 = vpack.c.bf16 %v1316, %v1316
      %v1319 = vld [vmem:[%s628] sm:$0xf]
      %v1320 = vld [vmem:[%s628 + $0x4] sm:$0xf]
      %v1321 = vld [vmem:[%s628 + $0x8] sm:$0xf]
      %v1322 = vld [vmem:[%s628 + $0xc] sm:$0xf]
      %v1323 = vld [vmem:[%s631] sm:$0x1]
      %v1325 = vperm.slane %v1323, 0
      %v1331 = vunpack.c.l.b16 %v1319
      %v1332 = vunpack.c.l.b16 %v1320
      %v1333 = vunpack.c.l.b16 %v1321
      %v1334 = vunpack.c.l.b16 %v1322
      %v1335 = vpack.c.b16 %v1332, %v1331
      %v1336 = vpack.c.b16 %v1334, %v1333
      %v1340 = vsel %vm663, %v1317, 0
      %v1343 = vsel %vm663, %v1318, 0
      %1345 = vmatpush.bf16.msra.mxu0 0
      %1346 = vmatpush.bf16.msra.mxu0 0
      %1347 = vmatpush.bf16.msra.mxu0 0
      %1348 = vmatpush.bf16.msra.mxu0 0
      %1349 = vmatpush.bf16.msra.mxu0 0
      %1350 = vmatpush.bf16.msra.mxu0 0
      %1351 = vmatpush.bf16.msra.mxu0 %v1336
      %1352 = vmatpush.bf16.msra.mxu0 %v1335
      %1353 = vmatmul.bf16.gmra.mxu0 %v1340
      %v1354 = vpop.f32.mrf.mxu0
      %v1355 = vadd.f32 %v1325, %v1354
      %v1356 = vpop.f32.mrf.mxu0
      %v1357 = vadd.f32 %v1325, %v1356
      %1358 = vmatmul.bf16.gmra.mxu0 %v1343
      %v1359 = vpop.f32.mrf.mxu0
      %v1360 = vadd.f32 %v1325, %v1359
      %v1361 = vpop.f32.mrf.mxu0
      %1362 = vdwg.mxu0
      %v1363 = vmul.f32 %v1355, %v1355
      %v1364 = vmul.f32 %v1357, %v1357
      %v1365 = vmul.f32 %v1360, %v1360
      %v1366 = vmul.f32 %v1355, %v1363
      %v1367 = vmul.f32 %v1357, %v1364
      %v1368 = vmul.f32 %v1360, %v1365
      %v1369 = vmul.f32 %v1366, 0.044715
      %v1370 = vmul.f32 %v1367, 0.044715
      %v1371 = vmul.f32 %v1368, 0.044715
      %v1372 = vadd.f32 %v1355, %v1369
      %v1373 = vadd.f32 %v1357, %v1370
      %v1374 = vadd.f32 %v1360, %v1371
      %v1375 = vmul.f32 %v1372, 0.7978846
      %v1376 = vmul.f32 %v1373, 0.7978846
      %v1377 = vmul.f32 %v1374, 0.7978846
      %v1378 = vtanh.pop %v1375
      %v1379 = vtanh.pop %v1376
      %v1380 = vtanh.pop %v1377
      %v1381 = vadd.f32 %v1378, 1.0
      %v1382 = vadd.f32 %v1379, 1.0
      %v1383 = vadd.f32 %v1380, 1.0
      %v1384 = vmul.f32 %v1381, 0.5
      %v1385 = vmul.f32 %v1382, 0.5
      %v1386 = vmul.f32 %v1383, 0.5
      %v1387 = vmul.f32 %v1355, %v1384
      %v1388 = vmul.f32 %v1357, %v1385
      %v1389 = vmul.f32 %v1360, %v1386
      %v1390 = vpack.c.bf16 %v1388, %v1387
      %v1391 = vpack.c.bf16 %v1389, %v1389
      %v1392 = vld [vmem:[%s636] sm:$0xf]
      %v1393 = vld [vmem:[%s636 + $0x4] sm:$0xf]
      %v1394 = vld [vmem:[%s636 + $0x8] sm:$0xf]
      %v1395 = vld [vmem:[%s636 + $0xc] sm:$0xf]
      %v1396 = vld [vmem:[%s636 + $0x10] sm:$0xf]
      %v1397 = vld [vmem:[%s636 + $0x14] sm:$0xf]
      %v1398 = vld [vmem:[%s636 + $0x18] sm:$0xf]
      %v1399 = vld [vmem:[%s636 + $0x1c] sm:$0xf]
      %v1400 = vld [vmem:[%s636 + $0x20] sm:$0xf]
      %v1401 = vld [vmem:[%s636 + $0x24] sm:$0xf]
      %v1402 = vld [vmem:[%s636 + $0x28] sm:$0xf]
      %v1403 = vld [vmem:[%s636 + $0x2c] sm:$0xf]
      %v1404 = vld [vmem:[%s636 + $0x30] sm:$0xf]
      %v1405 = vld [vmem:[%s636 + $0x34] sm:$0xf]
      %v1406 = vld [vmem:[%s636 + $0x38] sm:$0xf]
      %v1407 = vld [vmem:[%s636 + $0x3c] sm:$0xf]
      %v1408 = vld [vmem:[%s639] sm:$0x1]
      %v1410 = vperm.slane %v1408, 0
      %v1428 = vunpack.c.l.b16 %v1392
      %v1429 = vunpack.c.l.b16 %v1393
      %v1430 = vunpack.c.l.b16 %v1394
      %v1431 = vunpack.c.l.b16 %v1395
      %v1432 = vunpack.c.l.b16 %v1396
      %v1433 = vunpack.c.l.b16 %v1397
      %v1434 = vunpack.c.l.b16 %v1398
      %v1435 = vunpack.c.l.b16 %v1399
      %v1436 = vunpack.c.l.b16 %v1400
      %v1437 = vunpack.c.l.b16 %v1401
      %v1438 = vunpack.c.l.b16 %v1402
      %v1439 = vunpack.c.l.b16 %v1403
      %v1440 = vunpack.c.l.b16 %v1404
      %v1441 = vunpack.c.l.b16 %v1405
      %v1442 = vunpack.c.l.b16 %v1406
      %v1443 = vunpack.c.l.b16 %v1407
      %v1444 = vpack.c.b16 %v1429, %v1428
      %v1445 = vpack.c.b16 %v1431, %v1430
      %v1446 = vpack.c.b16 %v1433, %v1432
      %v1447 = vpack.c.b16 %v1435, %v1434
      %v1448 = vpack.c.b16 %v1437, %v1436
      %v1449 = vpack.c.b16 %v1439, %v1438
      %v1450 = vpack.c.b16 %v1441, %v1440
      %v1451 = vpack.c.b16 %v1443, %v1442
      %1460 = vmatpush.bf16.msra.mxu0 %v1451
      %1461 = vmatpush.bf16.msra.mxu0 %v1450
      %1462 = vmatpush.bf16.msra.mxu0 %v1449
      %1463 = vmatpush.bf16.msra.mxu0 %v1448
      %1464 = vmatpush.bf16.msra.mxu0 %v1447
      %1465 = vmatpush.bf16.msra.mxu0 %v1446
      %1466 = vmatpush.bf16.msra.mxu0 %v1445
      %1467 = vmatpush.bf16.msra.mxu0 %v1444
      %1468 = vmatmul.bf16.gmra.mxu0 %v1390
      %v1469 = vpop.f32.mrf.mxu0
      %v1470 = vadd.f32 %v1410, %v1469
      %v1471 = vpop.f32.mrf.mxu0
      %v1472 = vadd.f32 %v1410, %v1471
      %1473 = vmatmul.bf16.gmra.mxu0 %v1391
      %v1474 = vpop.f32.mrf.mxu0
      %v1475 = vadd.f32 %v1410, %v1474
      %v1476 = vpop.f32.mrf.mxu0
      %1477 = vdwg.mxu0
      %v1478 = vadd.f32 %v1234, %v1470
      %v1479 = vadd.f32 %v1235, %v1472
      %v1480 = vadd.f32 %v1236, %v1475
      %1481 = vst.msk [vmem:[%s644] sm:$0xff] %vm663, %v1478
      %1482 = vst.msk [vmem:[%s644 + $0x8] sm:$0xff] %vm663, %v1479
      %1483 = vst.msk [vmem:[%s644 + $0x10] sm:$0x7] %vm670, %v1480
      %p1484 = scmp.lt.s32.totalorder %s28, 1
      %s1485 = scalar_select %p1484, %s28, 1
      %s1486 = smul.addr %s1485, 3
      %s1487 = smul.addr %s1486, 8
      %s1488 = scalar_lea.vmem %s13, %s1487
      // Predicated region
      $region77: #{_forward_core.2} parent=71 // pred_check
        %p1489 = pneg %p392
      $region78: #{_forward_core.2} parent=71 // pred_check_branch
        %1491 = sbr.rel (%p1489) target = $region80
      $region79: #{_forward_core.2} parent=71 // pred_region
        _
      $region80: #{_forward_core.2} parent=71 // pred_fallthru
        _
    $region72: #{_forward_core.2} parent=5 // pred_fallthru
      _
    %p1492 = scmp.le.s32.totalorder 2, %s19
    // Predicated region
    $region81: #{_forward_core.2} parent=5 // pred_check
      %p1493 = pneg %p1492
    $region82: #{_forward_core.2} parent=5 // pred_check_branch
      %1495 = sbr.rel (%p1493) target = $region84
    $region83: #{_forward_core.2} parent=5 // pred_region
      %s1496 = ssub.s32 %s19, 2
      // Predicated region
      $region85: #{_forward_core.2} parent=83 // pred_check
        %p1497 = pneg %p398
      $region86: #{_forward_core.2} parent=83 // pred_check_branch
        %1499 = sbr.rel (%p1497) target = $region88
      $region87: #{_forward_core.2} parent=83 // pred_region
        %p1500 = scmp.lt.s32.totalorder %s30, 1
        %s1501 = scalar_select %p1500, %s30, 1
        %s1502 = smul.addr %s1501, 3
        %s1503 = smul.addr %s1502, 8
        %s1504 = scalar_lea.vmem %s13, %s1503
      $region88: #{_forward_core.2} parent=83 // pred_fallthru
        _
    $region84: #{_forward_core.2} parent=5 // pred_fallthru
      _
  $region6: #{_forward_core.2} parent=0 // loop_footer
    %s23 = sadd.s32 1, %s19
  $region7: #{_forward_core.2} parent=0 // loop_footer_branch
    %18 = sbr.rel target = $region3
  $region8: #{_forward_core.2} parent=0 // loop_exit
    _

</llo_original>
